<compile_context>
chip_gen: v6e
topology: v6e:2x2x1
jax: 0.10.0
libtpu: 0.0.40
codegen_flags: <defaults>
</compile_context>

<pallas_src>
import functools

import numpy as np
import jax
import jax.numpy as jnp
from jax.experimental import pallas as pl
from jax.experimental.pallas import tpu as pltpu


# ----------------------------- configuration --------------------------------
CFG = dict(
    n_agents=4, n_actions=6, state_dim=32, unit_dim=8,
    rnn_hidden_dim=32, attn_dim=32, embed_dim=32, n_head=4,
    num_kernel=4,
    attend_reg_coef=0.001, is_minus_one=True,
)
CFG["action_dim"] = CFG["n_agents"] * CFG["n_actions"]


def _round_up(x, m):
    return ((x + m - 1) // m) * m


def _cdiv(a, b):
    return (a + b - 1) // b


def _state_layout(A, NH, E, K, is_v):
    """Column layout of the fused state-conditioned hyper-net matmul output."""
    NHE = NH * E
    p0 = A * NHE                       # [0, p0):    sels replicated per agent block
    whv = 2 * p0                       # [p0, 2p0):  per-agent key bases
    if is_v:                           # [whv, +2E): [w_head l1 | V l1]
        return dict(p0=p0, whv=whv, sig=0, key=0, width=whv + 2 * E)
    sig = _round_up(whv + 2 * E, 128)  # [sig, +2KA): [si_agents | si_action] logits
    key = sig + 2 * K * A              # [key, +K):  si_key
    return dict(p0=p0, whv=whv, sig=sig, key=key, width=key + K)


# ----------------------------- fused Pallas kernel ---------------------------
def _make_kernel(*, A, NH, E, K, D, S, is_v, shift, inv_sqrt_e, layout):
    NHE = NH * E
    P0 = layout["p0"]
    WHV = layout["whv"]
    SIG = layout["sig"]
    KEY = layout["key"]
    HALF = A * A * D

    def kernel(hid_ref, x_ref, wqk_ref, wbig_ref, bbig_ref, wnq_ref,
               w2h_ref, b2h_ref, w2v_ref, b2v_ref,
               rred_ref, rhead_ref, exp_ref, sel_ref, gs_ref, out_ref):
        f32 = jnp.float32
        dot = functools.partial(jnp.dot, preferred_element_type=f32)

        x = x_ref[...]                                   # (TB, XW) = [st|qs|(mq|act)]
        qs = x[:, S:S + A]                               # (TB, A)

        # ---- Mixer_attention: agent self-attention over hidden states -------
        # one MXU matmul produces q/k already replicated per (target, source) pair.
        qk = dot(hid_ref[...], wqk_ref[...])             # (TB, 2*A*A*D)
        prod = qk[:, :HALF] * qk[:, HALF:]               # lane p*D+d = q_a[d]*k_c[d]
        l16 = dot(prod, rred_ref[...])                   # (TB, A*A), p = a*A+c, /sqrt(D)
        m = jnp.max(l16, axis=-1, keepdims=True)         # sample-global max (exact per row)
        e16 = jnp.exp(l16 - m)
        inv = 1.0 / dot(e16, gs_ref[...])                # (TB, A) per-row denominators
        attn16 = e16 * dot(inv, exp_ref[...])            # (TB, A*A) softmax rows
        asum = jnp.sum(attn16, axis=-1, keepdims=True)   # sum|attn| per sample
        new_q = dot(attn16 * dot(qs, exp_ref[...]), sel_ref[...])   # (TB, A) new_Q_i

        # ---- fused state-conditioned hyper-nets: one matmul ------------------
        so = dot(x, wbig_ref[...]) + bbig_ref[...]       # (TB, P)

        # ---- Qatten head attention (NH heads over A agents) ------------------
        keys = so[:, P0:2 * P0] + dot(new_q, wnq_ref[...])           # (TB, A*NH*E)
        hl16 = dot(so[:, :P0] * keys, rhead_ref[...])    # (TB, NH*A), p = h*A+c
        hsc = hl16 * inv_sqrt_e
        mh = jnp.max(hsc, axis=-1, keepdims=True)
        eh = jnp.exp(hsc - mh)
        invh = 1.0 / dot(eh, gs_ref[...])                # (TB, NH)
        watt = eh * dot(invh, exp_ref[...])              # (TB, NH*A)
        hlsq = dot(hl16 * hl16, gs_ref[...])             # (TB, NH): sum_a logits^2
        ent = -dot(watt * jnp.log(watt + 1e-8), gs_ref[...])         # (TB, NH)

        whv = jnp.maximum(so[:, WHV:WHV + 2 * E], 0.0)   # relu([wh1 | v1]), 128-aligned
        w_head = jnp.abs(dot(whv, w2h_ref[...]) + b2h_ref[...])      # (TB, NH)
        v = dot(whv, w2v_ref[...]) + b2v_ref[...]        # (TB, 1)
        w_fin = dot(watt * dot(w_head, exp_ref[...]), sel_ref[...]) + 1e-10   # (TB, A)

        # ---- final mixing -----------------------------------------------------
        if is_v:
            y = jnp.sum(w_fin * qs + v * (1.0 / A), axis=-1, keepdims=True)
        else:
            mq = x[:, S + A:S + 2 * A]                   # (TB, A)
            sig = jax.nn.sigmoid(so[:, SIG:SIG + 2 * K * A])          # (TB, 2*K*A)
            keyr = dot(jnp.abs(so[:, KEY:KEY + K]) + 1e-10, exp_ref[...])
            adv_w = dot(keyr * sig[:, :K * A] * sig[:, K * A:], sel_ref[...])  # (TB, A)
            # q_mix - m_mix == w_fin*(qs - mq): the V/n_agents terms cancel exactly.
            y = jnp.sum(w_fin * (qs - mq) * (adv_w - shift), axis=-1, keepdims=True)

        out_ref[:, 0:1] = y
        out_ref[:, 1:2] = asum
        out_ref[:, 2:2 + NH] = hlsq
        out_ref[:, 2 + NH:2 + 2 * NH] = ent

    return kernel


# ----------------------------- weight assembly -------------------------------
def _build_weights(params, cfg, is_v, layout):
    f32 = jnp.float32
    A = cfg["n_agents"]; NH = cfg["n_head"]; E = cfg["embed_dim"]
    K = cfg["num_kernel"]; D = cfg["attn_dim"]; H = cfg["rnn_hidden_dim"]
    U = cfg["unit_dim"]; S = cfg["state_dim"]; AD = cfg["action_dim"]
    NHE = NH * E
    P0, WHV, SIG, KEY, P = (layout["p0"], layout["whv"], layout["sig"],
                            layout["key"], layout["width"])
    XW = S + A if is_v else S + 2 * A + AD

    # Fused Q/K projection + pairwise replication for the agent self-attention.
    wq = params["mix_wq"].astype(f32)
    wk = params["mix_wk"].astype(f32)
    half = A * A * D
    wqk = jnp.zeros((A * H, 2 * half), f32)
    for p in range(A * A):
        a, c = p // A, p % A
        wqk = wqk.at[a * H:(a + 1) * H, p * D:(p + 1) * D].set(wq)
        wqk = wqk.at[c * H:(c + 1) * H, half + p * D:half + (p + 1) * D].set(wk)

    # Fused state-conditioned hyper-net weight (rows: [st | qs | mq | act]).
    wbig = jnp.zeros((XW, P), f32)
    bbig = jnp.zeros((P,), f32)
    w_sel = params["w_sel_all"].astype(f32)
    wku = params["w_key_all"][:U].astype(f32)
    for c in range(A):
        wbig = wbig.at[:S, c * NHE:(c + 1) * NHE].set(w_sel)             # sels (x A)
        wbig = wbig.at[c * U:(c + 1) * U,
                       P0 + c * NHE:P0 + (c + 1) * NHE].set(wku)         # key bases
    wbig = wbig.at[:S, WHV:WHV + E].set(params["whead_w1"].astype(f32))
    wbig = wbig.at[:S, WHV + E:WHV + 2 * E].set(params["v_w1"].astype(f32))
    bbig = bbig.at[WHV:WHV + E].set(params["whead_b1"].astype(f32))
    bbig = bbig.at[WHV + E:WHV + 2 * E].set(params["v_b1"].astype(f32))
    if not is_v:
        KA = K * A
        wbig = wbig.at[:S, SIG:SIG + KA].set(params["si_ag_w"].astype(f32))
        wbig = wbig.at[:S, SIG + KA:SIG + 2 * KA].set(params["si_ac_w"][:S].astype(f32))
        wbig = wbig.at[S + 2 * A:, SIG + KA:SIG + 2 * KA].set(params["si_ac_w"][S:].astype(f32))
        wbig = wbig.at[:S, KEY:KEY + K].set(params["si_key_w"].astype(f32))
        bbig = bbig.at[SIG:SIG + KA].set(params["si_ag_b"].astype(f32))
        bbig = bbig.at[SIG + KA:SIG + 2 * KA].set(params["si_ac_b"].astype(f32))
        bbig = bbig.at[KEY:KEY + K].set(params["si_key_b"].astype(f32))

    # new_Q -> per-agent key contribution (w_key row for new_Q, per agent block).
    wkq = params["w_key_all"][U].astype(f32)                             # (NHE,)
    wnq = jnp.zeros((A, A * NHE), f32)
    for c in range(A):
        wnq = wnq.at[c, c * NHE:(c + 1) * NHE].set(wkq)

    # Layer-2 of w_head / V hyper-nets, applied to the joint relu slab [wh1|v1].
    w2h = jnp.zeros((2 * E, NH), f32).at[:E].set(params["whead_w2"].astype(f32))
    b2h = params["whead_b2"].reshape(1, NH).astype(f32)
    w2v = jnp.zeros((2 * E, 1), f32).at[E:].set(params["v_w2"].astype(f32))
    b2v = params["v_b2"].reshape(1, 1).astype(f32)

    # Constant reduction / expansion matrices (hoisted out of the kernel).
    rred = np.zeros((half, A * A), np.float32)
    for p in range(A * A):
        rred[p * D:(p + 1) * D, p] = 1.0 / np.sqrt(D)
    rhead = np.zeros((A * NHE, NH * A), np.float32)
    for c in range(A):
        for h in range(NH):
            rhead[c * NHE + h * E:c * NHE + (h + 1) * E, h * A + c] = 1.0
    expg = np.zeros((A, A * A), np.float32)      # row g -> lanes g*A .. g*A+A-1
    selg = np.zeros((A * A, A), np.float32)      # lane p -> column p % A
    gsg = np.zeros((A * A, A), np.float32)       # lane p -> column p // A
    for g in range(A):
        for s_ in range(A):
            expg[g, g * A + s_] = 1.0
            selg[g * A + s_, s_] = 1.0
            gsg[g * A + s_, g] = 1.0

    return (wqk, wbig, bbig[None, :], wnq, w2h, b2h, w2v, b2v,
            jnp.asarray(rred), jnp.asarray(rhead),
            jnp.asarray(expg), jnp.asarray(selg), jnp.asarray(gsg))


# ----------------------------- forward (Pallas) -------------------------------
def forward(params, agent_qs, hidden_output, states, actions=None, max_q_i=None, *,
            cfg, is_v, block_rows=512):
    f32 = jnp.float32
    A = cfg["n_agents"]; H = cfg["rnn_hidden_dim"]; D = cfg["attn_dim"]
    E = cfg["embed_dim"]; NH = cfg["n_head"]; K = cfg["num_kernel"]
    S = cfg["state_dim"]; AD = cfg["action_dim"]
    assert A == NH == K, "shared expansion matrices require n_agents == n_head == num_kernel"

    bs, T, _ = agent_qs.shape
    B = bs * T

    # Batch tile: rows multiple of 8, >=2 grid blocks when possible (both v7x TCs),
    # capped by block_rows so temporaries stay well inside v7x's 64 MiB VMEM.
    TB = max(8, min(_round_up(block_rows, 8), _round_up(max(_cdiv(B, 2), 1), 8)))
    nb = _cdiv(B, TB)
    Bp = nb * TB
    pad = Bp - B

    layout = _state_layout(A, NH, E, K, is_v)

    hid = hidden_output.reshape(B, A * H).astype(f32)           # lane-dense (B, 128)
    st = states.reshape(B, S).astype(f32)
    qs2 = agent_qs.reshape(B, A).astype(f32)
    if is_v:
        x = jnp.concatenate([st, qs2], axis=-1)                 # (B, S+A)
    else:
        if actions is None or max_q_i is None:
            raise ValueError("is_v=False requires actions and max_q_i")
        x = jnp.concatenate([st, qs2, max_q_i.reshape(B, A).astype(f32),
                             actions.reshape(B, AD).astype(f32)], axis=-1)
    if pad:
        hid = jnp.pad(hid, ((0, pad), (0, 0)))
        x = jnp.pad(x, ((0, pad), (0, 0)))

    weights = _build_weights(params, cfg, is_v, layout)

    def brow(w):
        return pl.BlockSpec((TB, w), lambda i: (i, 0))

    def wfull(arr):
        shp = tuple(int(s) for s in arr.shape)
        zeros = (0,) * len(shp)
        return pl.BlockSpec(shp, lambda i: zeros)

    kernel = _make_kernel(A=A, NH=NH, E=E, K=K, D=D, S=S, is_v=is_v,
                          shift=1.0 if cfg["is_minus_one"] else 0.0,
                          inv_sqrt_e=float(1.0 / np.sqrt(E)),
                          layout=layout)

    OW = 2 + 2 * NH                                              # [y|asum|hlsq|ent]
    out = pl.pallas_call(
        kernel,
        out_shape=jax.ShapeDtypeStruct((Bp, OW), f32),
        grid=(nb,),
        in_specs=[brow(A * H), brow(int(x.shape[1]))] + [wfull(w) for w in weights],
        out_specs=brow(OW),
        compiler_params=pltpu.CompilerParams(
            dimension_semantics=("parallel",),
            vmem_limit_bytes=48 * 1024 * 1024),
    )(hid, x, *weights)

    out = out[:B]
    v_tot = out[:, 0:1].reshape(bs, T, 1)
    # NOTE: mean|softmax| is identically 1/A; kept only to mirror the reference l1_loss.
    l1_loss = jnp.sum(out[:, 1]) / (B * A * A)
    attend_mag_regs = cfg["attend_reg_coef"] * jnp.sum(out[:, 2:2 + NH]) / (B * A)
    ent_mean = jnp.sum(out[:, 2 + NH:2 + 2 * NH], axis=0) / B
    head_entropies = [ent_mean[h] for h in range(NH)]
    return v_tot, attend_mag_regs, head_entropies, l1_loss


# ----------------------------- parameters ------------------------------------
def init_params(key, cfg):
    A, E, NH, K = cfg["n_agents"], cfg["embed_dim"], cfg["n_head"], cfg["num_kernel"]
    H, D = cfg["rnn_hidden_dim"], cfg["attn_dim"]
    sd, ad, ud = cfg["state_dim"], cfg["action_dim"], cfg["unit_dim"]

    keys = iter(jax.random.split(key, 32))

    def lin(fan_in, fan_out):
        k = 1.0 / np.sqrt(fan_in)
        return jax.random.uniform(next(keys), (fan_in, fan_out), jnp.float32, -k, k)

    def bias(fan_in, fan_out):
        k = 1.0 / np.sqrt(fan_in)
        return jax.random.uniform(next(keys), (fan_out,), jnp.float32, -k, k)

    return dict(
        mix_wq=lin(H, D), mix_wk=lin(H, D),
        w_sel_all=lin(sd, NH * E),              # per-head selector (bias=False)
        w_key_all=lin(ud + 1, NH * E),          # per-head key, nonlinear=True -> +1
        whead_w1=lin(sd, E), whead_b1=bias(sd, E),
        whead_w2=lin(E, NH), whead_b2=bias(E, NH),
        v_w1=lin(sd, E), v_b1=bias(sd, E),
        v_w2=lin(E, 1), v_b2=bias(E, 1),
        si_key_w=lin(sd, K), si_key_b=bias(sd, K),
        si_ag_w=lin(sd, K * A), si_ag_b=bias(sd, K * A),
        si_ac_w=lin(sd + ad, K * A), si_ac_b=bias(sd + ad, K * A),
    )


# ----------------------------- pure-JAX reference -----------------------------
def ref_forward(params, cfg, agent_qs, hidden_output, states, actions, max_q_i, is_v):
    A = cfg["n_agents"]
    bs, T, _ = agent_qs.shape
    B = bs * T
    H, E, NH, K = cfg["rnn_hidden_dim"], cfg["embed_dim"], cfg["n_head"], cfg["num_kernel"]

    hidden = hidden_output.reshape(B, A, H)
    qs3 = agent_qs.reshape(B, 1, A)
    states_flat = states.reshape(B, -1)
    actions_flat = actions.reshape(B, -1)

    q = hidden @ params["mix_wq"]
    k = hidden @ params["mix_wk"]
    logits = jnp.einsum("bad,bcd->bac", q, k) / np.sqrt(cfg["attn_dim"])
    attn = jax.nn.softmax(logits, axis=-1)
    new_Q_i = jnp.einsum("bia,bac->bic", qs3, attn)
    l1_loss = jnp.mean(jnp.abs(attn))

    unit = states_flat[:, :cfg["unit_dim"] * A].reshape(B, A, cfg["unit_dim"])
    us_aug = jnp.concatenate([unit, jnp.transpose(new_Q_i, (0, 2, 1))], axis=-1)
    keys = (us_aug.reshape(B * A, -1) @ params["w_key_all"]).reshape(B, A, NH, E).transpose(0, 2, 1, 3)
    sels = (states_flat @ params["w_sel_all"]).reshape(B, NH, E)
    hlogits = jnp.einsum("bhe,bhae->bha", sels, keys)
    hw = jax.nn.softmax(hlogits / np.sqrt(E), axis=-1)
    wh1 = jax.nn.relu(states_flat @ params["whead_w1"] + params["whead_b1"])
    wh = jnp.abs(wh1 @ params["whead_w2"] + params["whead_b2"])
    w_final = jnp.sum(hw * wh[:, :, None], axis=1)
    v1 = jax.nn.relu(states_flat @ params["v_w1"] + params["v_b1"])
    v = v1 @ params["v_w2"] + params["v_b2"]

    attend_mag = cfg["attend_reg_coef"] * jnp.sum(jnp.mean(hlogits ** 2, axis=(0, 2)))
    ents = [jnp.mean(-jnp.sum(hw[:, h] * jnp.log(hw[:, h] + 1e-8), axis=-1))
            for h in range(NH)]

    w = w_final + 1e-10
    vv = jnp.repeat(v, A, axis=1) / A
    qs = agent_qs.reshape(B, A)
    q_mix = w * qs + vv
    if is_v:
        y = jnp.sum(q_mix, axis=-1)
    else:
        mq = max_q_i.reshape(B, A)
        m_mix = w * mq + vv
        adv_q = q_mix - m_mix
        si_key = jnp.abs(states_flat @ params["si_key_w"] + params["si_key_b"]).reshape(B, K, 1) + 1e-10
        si_ag = jax.nn.sigmoid((states_flat @ params["si_ag_w"] + params["si_ag_b"]).reshape(B, K, A))
        data = jnp.concatenate([states_flat, actions_flat], axis=-1)
        si_ac = jax.nn.sigmoid((data @ params["si_ac_w"] + params["si_ac_b"]).reshape(B, K, A))
        adv_w = jnp.sum(si_key * si_ag * si_ac, axis=1)
        shift = 1.0 if cfg["is_minus_one"] else 0.0
        y = jnp.sum(adv_q * (adv_w - shift), axis=-1)
    return y.reshape(bs, T, 1), attend_mag, ents, l1_loss


# ----------------------------- main -------------------------------------------
if __name__ == "__main__":
    cfg = CFG
    A, H = cfg["n_agents"], cfg["rnn_hidden_dim"]

    root = jax.random.PRNGKey(0)
    k_in, k_par = jax.random.split(root)
    params = init_params(k_par, cfg)

    test_cases = [
        dict(bs=2, T=8, block_rows=512),    # small: TB=8, 2 blocks
        dict(bs=3, T=37, block_rows=64),    # multi-block grid + ragged tail padding
    ]

    for case in test_cases:
        bs, T, br = case["bs"], case["T"], case["block_rows"]
        ki = jax.random.split(jax.random.fold_in(k_in, bs * 1000 + T), 5)
        agent_qs = jax.random.normal(ki[0], (bs, T, A), jnp.float32)
        hidden_output = jax.random.normal(ki[1], (bs, T, A, H), jnp.float32)
        states = jax.random.normal(ki[2], (bs, T, cfg["state_dim"]), jnp.float32)
        actions = jax.random.uniform(ki[3], (bs, T, A, cfg["n_actions"]), jnp.float32)
        max_q_i = jax.random.normal(ki[4], (bs, T, A), jnp.float32)

        for is_v in (False, True):
            fwd = jax.jit(functools.partial(forward, cfg=cfg, is_v=is_v,
                                            block_rows=br))
            v_tot, mag, ents, l1 = fwd(params, agent_qs, hidden_output, states,
                                       actions, max_q_i)
            jax.block_until_ready(v_tot)

            r_v_tot, r_mag, r_ents, r_l1 = ref_forward(
                params, cfg, agent_qs, hidden_output, states, actions, max_q_i, is_v)

            np.testing.assert_allclose(np.asarray(v_tot), np.asarray(r_v_tot),
                                       rtol=1e-3, atol=5e-4)
            np.testing.assert_allclose(float(mag), float(r_mag), rtol=1e-3, atol=1e-5)
            np.testing.assert_allclose(float(l1), float(r_l1), rtol=1e-3, atol=1e-6)
            for e, re_ in zip(ents, r_ents):
                np.testing.assert_allclose(float(e), float(re_), rtol=1e-3, atol=1e-4)

    print("KERNEL_OK")
</pallas_src>

<mosaic_0001>
module attributes {stable_mosaic.version = 11 : i64} {
  func.func @kernel(%arg0: i32, %arg1: memref<8x128xf32, #tpu.memory_space<vmem>>, %arg2: memref<8x64xf32, #tpu.memory_space<vmem>>, %arg3: memref<128x1024xf32, #tpu.memory_space<vmem>>, %arg4: memref<64x1188xf32, #tpu.memory_space<vmem>>, %arg5: memref<1x1188xf32, #tpu.memory_space<vmem>>, %arg6: memref<4x512xf32, #tpu.memory_space<vmem>>, %arg7: memref<64x4xf32, #tpu.memory_space<vmem>>, %arg8: memref<1x4xf32, #tpu.memory_space<vmem>>, %arg9: memref<64x1xf32, #tpu.memory_space<vmem>>, %arg10: memref<1x1xf32, #tpu.memory_space<vmem>>, %arg11: memref<512x16xf32, #tpu.memory_space<vmem>>, %arg12: memref<512x16xf32, #tpu.memory_space<vmem>>, %arg13: memref<4x16xf32, #tpu.memory_space<vmem>>, %arg14: memref<16x4xf32, #tpu.memory_space<vmem>>, %arg15: memref<16x4xf32, #tpu.memory_space<vmem>>, %arg16: memref<8x10xf32, #tpu.memory_space<vmem>>) attributes {dimension_semantics = [#tpu.dimension_semantics<parallel>], iteration_bounds = array<i64: 2>, scalar_prefetch = 0 : i64, scratch_operands = 0 : i64, tpu.core_type = #tpu.core_type<tc>, window_params = [{transform_indices = @transform_0, window_bounds = array<i64: 8, 128>}, {transform_indices = @transform_1, window_bounds = array<i64: 8, 64>}, {pipeline_mode = #tpu.pipeline_mode<synchronous>, transform_indices = @transform_2, window_bounds = array<i64: 128, 1024>}, {pipeline_mode = #tpu.pipeline_mode<synchronous>, transform_indices = @transform_3, window_bounds = array<i64: 64, 1188>}, {pipeline_mode = #tpu.pipeline_mode<synchronous>, transform_indices = @transform_4, window_bounds = array<i64: 1, 1188>}, {pipeline_mode = #tpu.pipeline_mode<synchronous>, transform_indices = @transform_5, window_bounds = array<i64: 4, 512>}, {pipeline_mode = #tpu.pipeline_mode<synchronous>, transform_indices = @transform_6, window_bounds = array<i64: 64, 4>}, {pipeline_mode = #tpu.pipeline_mode<synchronous>, transform_indices = @transform_7, window_bounds = array<i64: 1, 4>}, {pipeline_mode = #tpu.pipeline_mode<synchronous>, transform_indices = @transform_8, window_bounds = array<i64: 64, 1>}, {pipeline_mode = #tpu.pipeline_mode<synchronous>, transform_indices = @transform_9, window_bounds = array<i64: 1, 1>}, {pipeline_mode = #tpu.pipeline_mode<synchronous>, transform_indices = @transform_10, window_bounds = array<i64: 512, 16>}, {pipeline_mode = #tpu.pipeline_mode<synchronous>, transform_indices = @transform_11, window_bounds = array<i64: 512, 16>}, {pipeline_mode = #tpu.pipeline_mode<synchronous>, transform_indices = @transform_12, window_bounds = array<i64: 4, 16>}, {pipeline_mode = #tpu.pipeline_mode<synchronous>, transform_indices = @transform_13, window_bounds = array<i64: 16, 4>}, {pipeline_mode = #tpu.pipeline_mode<synchronous>, transform_indices = @transform_14, window_bounds = array<i64: 16, 4>}, {transform_indices = @transform_15, window_bounds = array<i64: 8, 10>}]} {
    %c0 = arith.constant 0 : index
    %c0_0 = arith.constant 0 : index
    %0 = vector.load %arg2[%c0, %c0_0] : memref<8x64xf32, #tpu.memory_space<vmem>>, vector<8x64xf32>
    %1 = vector.extract_strided_slice %0 {offsets = [0, 32], sizes = [8, 4], strides = [1, 1]} : vector<8x64xf32> to vector<8x4xf32>
    %c0_1 = arith.constant 0 : index
    %c0_2 = arith.constant 0 : index
    %2 = vector.load %arg1[%c0_1, %c0_2] : memref<8x128xf32, #tpu.memory_space<vmem>>, vector<8x128xf32>
    %c0_3 = arith.constant 0 : index
    %c0_4 = arith.constant 0 : index
    %3 = vector.load %arg3[%c0_3, %c0_4] : memref<128x1024xf32, #tpu.memory_space<vmem>>, vector<128x1024xf32>
    %cst = arith.constant dense<0.000000e+00> : vector<8x1024xf32>
    %4 = tpu.matmul %2, %3, %cst {dimension_numbers = #tpu.dot_dimension_numbers<[1], [0], [0], [1], [0, 0, 1, 1], [], []>} : vector<8x128xf32>, vector<128x1024xf32>, vector<8x1024xf32> -> vector<8x1024xf32>
    %5 = vector.extract_strided_slice %4 {offsets = [0, 0], sizes = [8, 512], strides = [1, 1]} : vector<8x1024xf32> to vector<8x512xf32>
    %6 = vector.extract_strided_slice %4 {offsets = [0, 512], sizes = [8, 512], strides = [1, 1]} : vector<8x1024xf32> to vector<8x512xf32>
    %7 = arith.mulf %5, %6 : vector<8x512xf32>
    %c0_5 = arith.constant 0 : index
    %c0_6 = arith.constant 0 : index
    %8 = vector.load %arg11[%c0_5, %c0_6] : memref<512x16xf32, #tpu.memory_space<vmem>>, vector<512x16xf32>
    %cst_7 = arith.constant dense<0.000000e+00> : vector<8x16xf32>
    %9 = tpu.matmul %7, %8, %cst_7 {dimension_numbers = #tpu.dot_dimension_numbers<[1], [0], [0], [1], [0, 0, 1, 1], [], []>} : vector<8x512xf32>, vector<512x16xf32>, vector<8x16xf32> -> vector<8x16xf32>
    %cst_8 = arith.constant dense<0xFF800000> : vector<8xf32>
    %10 = vector.multi_reduction <maximumf>, %9, %cst_8 [1] : vector<8x16xf32> to vector<8xf32>
    %11 = vector.shape_cast %10 : vector<8xf32> to vector<8x1xf32>
    %12 = vector.broadcast %11 : vector<8x1xf32> to vector<8x16xf32>
    %13 = arith.subf %9, %12 : vector<8x16xf32>
    %14 = math.exp %13 : vector<8x16xf32>
    %c0_9 = arith.constant 0 : index
    %c0_10 = arith.constant 0 : index
    %15 = vector.load %arg15[%c0_9, %c0_10] : memref<16x4xf32, #tpu.memory_space<vmem>>, vector<16x4xf32>
    %cst_11 = arith.constant dense<0.000000e+00> : vector<8x4xf32>
    %16 = tpu.matmul %14, %15, %cst_11 {dimension_numbers = #tpu.dot_dimension_numbers<[1], [0], [0], [1], [0, 0, 1, 1], [], []>} : vector<8x16xf32>, vector<16x4xf32>, vector<8x4xf32> -> vector<8x4xf32>
    %cst_12 = arith.constant 1.000000e+00 : f32
    %17 = vector.broadcast %cst_12 : f32 to vector<8x4xf32>
    %18 = arith.divf %17, %16 : vector<8x4xf32>
    %c0_13 = arith.constant 0 : index
    %c0_14 = arith.constant 0 : index
    %19 = vector.load %arg13[%c0_13, %c0_14] : memref<4x16xf32, #tpu.memory_space<vmem>>, vector<4x16xf32>
    %cst_15 = arith.constant dense<0.000000e+00> : vector<8x16xf32>
    %20 = tpu.matmul %18, %19, %cst_15 {dimension_numbers = #tpu.dot_dimension_numbers<[1], [0], [0], [1], [0, 0, 1, 1], [], []>} : vector<8x4xf32>, vector<4x16xf32>, vector<8x16xf32> -> vector<8x16xf32>
    %21 = arith.mulf %14, %20 : vector<8x16xf32>
    %cst_16 = arith.constant dense<0.000000e+00> : vector<8xf32>
    %22 = vector.multi_reduction <add>, %21, %cst_16 [1] : vector<8x16xf32> to vector<8xf32>
    %23 = vector.shape_cast %22 : vector<8xf32> to vector<8x1xf32>
    %c0_17 = arith.constant 0 : index
    %c0_18 = arith.constant 0 : index
    %24 = vector.load %arg13[%c0_17, %c0_18] : memref<4x16xf32, #tpu.memory_space<vmem>>, vector<4x16xf32>
    %cst_19 = arith.constant dense<0.000000e+00> : vector<8x16xf32>
    %25 = tpu.matmul %1, %24, %cst_19 {dimension_numbers = #tpu.dot_dimension_numbers<[1], [0], [0], [1], [0, 0, 1, 1], [], []>} : vector<8x4xf32>, vector<4x16xf32>, vector<8x16xf32> -> vector<8x16xf32>
    %26 = arith.mulf %21, %25 : vector<8x16xf32>
    %c0_20 = arith.constant 0 : index
    %c0_21 = arith.constant 0 : index
    %27 = vector.load %arg14[%c0_20, %c0_21] : memref<16x4xf32, #tpu.memory_space<vmem>>, vector<16x4xf32>
    %cst_22 = arith.constant dense<0.000000e+00> : vector<8x4xf32>
    %28 = tpu.matmul %26, %27, %cst_22 {dimension_numbers = #tpu.dot_dimension_numbers<[1], [0], [0], [1], [0, 0, 1, 1], [], []>} : vector<8x16xf32>, vector<16x4xf32>, vector<8x4xf32> -> vector<8x4xf32>
    %c0_23 = arith.constant 0 : index
    %c0_24 = arith.constant 0 : index
    %29 = vector.load %arg4[%c0_23, %c0_24] : memref<64x1188xf32, #tpu.memory_space<vmem>>, vector<64x1188xf32>
    %cst_25 = arith.constant dense<0.000000e+00> : vector<8x1188xf32>
    %30 = tpu.matmul %0, %29, %cst_25 {dimension_numbers = #tpu.dot_dimension_numbers<[1], [0], [0], [1], [0, 0, 1, 1], [], []>} : vector<8x64xf32>, vector<64x1188xf32>, vector<8x1188xf32> -> vector<8x1188xf32>
    %c0_26 = arith.constant 0 : index
    %c0_27 = arith.constant 0 : index
    %31 = vector.load %arg5[%c0_26, %c0_27] : memref<1x1188xf32, #tpu.memory_space<vmem>>, vector<1x1188xf32>
    %32 = vector.broadcast %31 : vector<1x1188xf32> to vector<8x1188xf32>
    %33 = arith.addf %30, %32 : vector<8x1188xf32>
    %34 = vector.extract_strided_slice %33 {offsets = [0, 512], sizes = [8, 512], strides = [1, 1]} : vector<8x1188xf32> to vector<8x512xf32>
    %c0_28 = arith.constant 0 : index
    %c0_29 = arith.constant 0 : index
    %35 = vector.load %arg6[%c0_28, %c0_29] : memref<4x512xf32, #tpu.memory_space<vmem>>, vector<4x512xf32>
    %cst_30 = arith.constant dense<0.000000e+00> : vector<8x512xf32>
    %36 = tpu.matmul %28, %35, %cst_30 {dimension_numbers = #tpu.dot_dimension_numbers<[1], [0], [0], [1], [0, 0, 1, 1], [], []>} : vector<8x4xf32>, vector<4x512xf32>, vector<8x512xf32> -> vector<8x512xf32>
    %37 = arith.addf %34, %36 : vector<8x512xf32>
    %38 = vector.extract_strided_slice %33 {offsets = [0, 0], sizes = [8, 512], strides = [1, 1]} : vector<8x1188xf32> to vector<8x512xf32>
    %39 = arith.mulf %38, %37 : vector<8x512xf32>
    %c0_31 = arith.constant 0 : index
    %c0_32 = arith.constant 0 : index
    %40 = vector.load %arg12[%c0_31, %c0_32] : memref<512x16xf32, #tpu.memory_space<vmem>>, vector<512x16xf32>
    %cst_33 = arith.constant dense<0.000000e+00> : vector<8x16xf32>
    %41 = tpu.matmul %39, %40, %cst_33 {dimension_numbers = #tpu.dot_dimension_numbers<[1], [0], [0], [1], [0, 0, 1, 1], [], []>} : vector<8x512xf32>, vector<512x16xf32>, vector<8x16xf32> -> vector<8x16xf32>
    %cst_34 = arith.constant 0.176776692 : f32
    %42 = vector.broadcast %cst_34 : f32 to vector<8x16xf32>
    %43 = arith.mulf %41, %42 : vector<8x16xf32>
    %cst_35 = arith.constant dense<0xFF800000> : vector<8xf32>
    %44 = vector.multi_reduction <maximumf>, %43, %cst_35 [1] : vector<8x16xf32> to vector<8xf32>
    %45 = vector.shape_cast %44 : vector<8xf32> to vector<8x1xf32>
    %46 = vector.broadcast %45 : vector<8x1xf32> to vector<8x16xf32>
    %47 = arith.subf %43, %46 : vector<8x16xf32>
    %48 = math.exp %47 : vector<8x16xf32>
    %c0_36 = arith.constant 0 : index
    %c0_37 = arith.constant 0 : index
    %49 = vector.load %arg15[%c0_36, %c0_37] : memref<16x4xf32, #tpu.memory_space<vmem>>, vector<16x4xf32>
    %cst_38 = arith.constant dense<0.000000e+00> : vector<8x4xf32>
    %50 = tpu.matmul %48, %49, %cst_38 {dimension_numbers = #tpu.dot_dimension_numbers<[1], [0], [0], [1], [0, 0, 1, 1], [], []>} : vector<8x16xf32>, vector<16x4xf32>, vector<8x4xf32> -> vector<8x4xf32>
    %cst_39 = arith.constant 1.000000e+00 : f32
    %51 = vector.broadcast %cst_39 : f32 to vector<8x4xf32>
    %52 = arith.divf %51, %50 : vector<8x4xf32>
    %c0_40 = arith.constant 0 : index
    %c0_41 = arith.constant 0 : index
    %53 = vector.load %arg13[%c0_40, %c0_41] : memref<4x16xf32, #tpu.memory_space<vmem>>, vector<4x16xf32>
    %cst_42 = arith.constant dense<0.000000e+00> : vector<8x16xf32>
    %54 = tpu.matmul %52, %53, %cst_42 {dimension_numbers = #tpu.dot_dimension_numbers<[1], [0], [0], [1], [0, 0, 1, 1], [], []>} : vector<8x4xf32>, vector<4x16xf32>, vector<8x16xf32> -> vector<8x16xf32>
    %55 = arith.mulf %48, %54 : vector<8x16xf32>
    %56 = arith.mulf %41, %41 : vector<8x16xf32>
    %c0_43 = arith.constant 0 : index
    %c0_44 = arith.constant 0 : index
    %57 = vector.load %arg15[%c0_43, %c0_44] : memref<16x4xf32, #tpu.memory_space<vmem>>, vector<16x4xf32>
    %cst_45 = arith.constant dense<0.000000e+00> : vector<8x4xf32>
    %58 = tpu.matmul %56, %57, %cst_45 {dimension_numbers = #tpu.dot_dimension_numbers<[1], [0], [0], [1], [0, 0, 1, 1], [], []>} : vector<8x16xf32>, vector<16x4xf32>, vector<8x4xf32> -> vector<8x4xf32>
    %cst_46 = arith.constant 9.99999993E-9 : f32
    %59 = vector.broadcast %cst_46 : f32 to vector<8x16xf32>
    %60 = arith.addf %55, %59 : vector<8x16xf32>
    %61 = math.log %60 : vector<8x16xf32>
    %62 = arith.mulf %55, %61 : vector<8x16xf32>
    %c0_47 = arith.constant 0 : index
    %c0_48 = arith.constant 0 : index
    %63 = vector.load %arg15[%c0_47, %c0_48] : memref<16x4xf32, #tpu.memory_space<vmem>>, vector<16x4xf32>
    %cst_49 = arith.constant dense<0.000000e+00> : vector<8x4xf32>
    %64 = tpu.matmul %62, %63, %cst_49 {dimension_numbers = #tpu.dot_dimension_numbers<[1], [0], [0], [1], [0, 0, 1, 1], [], []>} : vector<8x16xf32>, vector<16x4xf32>, vector<8x4xf32> -> vector<8x4xf32>
    %cst_50 = arith.constant 0.000000e+00 : f32
    %65 = vector.broadcast %cst_50 : f32 to vector<8x4xf32>
    %66 = arith.subf %65, %64 : vector<8x4xf32>
    %67 = vector.extract_strided_slice %33 {offsets = [0, 1024], sizes = [8, 64], strides = [1, 1]} : vector<8x1188xf32> to vector<8x64xf32>
    %cst_51 = arith.constant 0.000000e+00 : f32
    %68 = vector.broadcast %cst_51 : f32 to vector<8x64xf32>
    %69 = arith.maximumf %67, %68 : vector<8x64xf32>
    %c0_52 = arith.constant 0 : index
    %c0_53 = arith.constant 0 : index
    %70 = vector.load %arg7[%c0_52, %c0_53] : memref<64x4xf32, #tpu.memory_space<vmem>>, vector<64x4xf32>
    %cst_54 = arith.constant dense<0.000000e+00> : vector<8x4xf32>
    %71 = tpu.matmul %69, %70, %cst_54 {dimension_numbers = #tpu.dot_dimension_numbers<[1], [0], [0], [1], [0, 0, 1, 1], [], []>} : vector<8x64xf32>, vector<64x4xf32>, vector<8x4xf32> -> vector<8x4xf32>
    %c0_55 = arith.constant 0 : index
    %c0_56 = arith.constant 0 : index
    %72 = vector.load %arg8[%c0_55, %c0_56] : memref<1x4xf32, #tpu.memory_space<vmem>>, vector<1x4xf32>
    %73 = vector.broadcast %72 : vector<1x4xf32> to vector<8x4xf32>
    %74 = arith.addf %71, %73 : vector<8x4xf32>
    %75 = math.absf %74 : vector<8x4xf32>
    %c0_57 = arith.constant 0 : index
    %c0_58 = arith.constant 0 : index
    %76 = vector.load %arg13[%c0_57, %c0_58] : memref<4x16xf32, #tpu.memory_space<vmem>>, vector<4x16xf32>
    %cst_59 = arith.constant dense<0.000000e+00> : vector<8x16xf32>
    %77 = tpu.matmul %75, %76, %cst_59 {dimension_numbers = #tpu.dot_dimension_numbers<[1], [0], [0], [1], [0, 0, 1, 1], [], []>} : vector<8x4xf32>, vector<4x16xf32>, vector<8x16xf32> -> vector<8x16xf32>
    %78 = arith.mulf %55, %77 : vector<8x16xf32>
    %c0_60 = arith.constant 0 : index
    %c0_61 = arith.constant 0 : index
    %79 = vector.load %arg14[%c0_60, %c0_61] : memref<16x4xf32, #tpu.memory_space<vmem>>, vector<16x4xf32>
    %cst_62 = arith.constant dense<0.000000e+00> : vector<8x4xf32>
    %80 = tpu.matmul %78, %79, %cst_62 {dimension_numbers = #tpu.dot_dimension_numbers<[1], [0], [0], [1], [0, 0, 1, 1], [], []>} : vector<8x16xf32>, vector<16x4xf32>, vector<8x4xf32> -> vector<8x4xf32>
    %cst_63 = arith.constant 1.000000e-10 : f32
    %81 = vector.broadcast %cst_63 : f32 to vector<8x4xf32>
    %82 = arith.addf %80, %81 : vector<8x4xf32>
    %83 = vector.extract_strided_slice %0 {offsets = [0, 36], sizes = [8, 4], strides = [1, 1]} : vector<8x64xf32> to vector<8x4xf32>
    %84 = vector.extract_strided_slice %33 {offsets = [0, 1152], sizes = [8, 32], strides = [1, 1]} : vector<8x1188xf32> to vector<8x32xf32>
    %85 = arith.negf %84 : vector<8x32xf32>
    %86 = math.exp %85 : vector<8x32xf32>
    %cst_64 = arith.constant 1.000000e+00 : f32
    %87 = vector.broadcast %cst_64 : f32 to vector<8x32xf32>
    %88 = arith.addf %87, %86 : vector<8x32xf32>
    %89 = arith.divf %87, %88 : vector<8x32xf32>
    %90 = vector.extract_strided_slice %33 {offsets = [0, 1184], sizes = [8, 4], strides = [1, 1]} : vector<8x1188xf32> to vector<8x4xf32>
    %91 = math.absf %90 : vector<8x4xf32>
    %cst_65 = arith.constant 1.000000e-10 : f32
    %92 = vector.broadcast %cst_65 : f32 to vector<8x4xf32>
    %93 = arith.addf %91, %92 : vector<8x4xf32>
    %c0_66 = arith.constant 0 : index
    %c0_67 = arith.constant 0 : index
    %94 = vector.load %arg13[%c0_66, %c0_67] : memref<4x16xf32, #tpu.memory_space<vmem>>, vector<4x16xf32>
    %cst_68 = arith.constant dense<0.000000e+00> : vector<8x16xf32>
    %95 = tpu.matmul %93, %94, %cst_68 {dimension_numbers = #tpu.dot_dimension_numbers<[1], [0], [0], [1], [0, 0, 1, 1], [], []>} : vector<8x4xf32>, vector<4x16xf32>, vector<8x16xf32> -> vector<8x16xf32>
    %96 = vector.extract_strided_slice %89 {offsets = [0, 0], sizes = [8, 16], strides = [1, 1]} : vector<8x32xf32> to vector<8x16xf32>
    %97 = arith.mulf %95, %96 : vector<8x16xf32>
    %98 = vector.extract_strided_slice %89 {offsets = [0, 16], sizes = [8, 16], strides = [1, 1]} : vector<8x32xf32> to vector<8x16xf32>
    %99 = arith.mulf %97, %98 : vector<8x16xf32>
    %c0_69 = arith.constant 0 : index
    %c0_70 = arith.constant 0 : index
    %100 = vector.load %arg14[%c0_69, %c0_70] : memref<16x4xf32, #tpu.memory_space<vmem>>, vector<16x4xf32>
    %cst_71 = arith.constant dense<0.000000e+00> : vector<8x4xf32>
    %101 = tpu.matmul %99, %100, %cst_71 {dimension_numbers = #tpu.dot_dimension_numbers<[1], [0], [0], [1], [0, 0, 1, 1], [], []>} : vector<8x16xf32>, vector<16x4xf32>, vector<8x4xf32> -> vector<8x4xf32>
    %102 = arith.subf %1, %83 : vector<8x4xf32>
    %103 = arith.mulf %82, %102 : vector<8x4xf32>
    %cst_72 = arith.constant 1.000000e+00 : f32
    %104 = vector.broadcast %cst_72 : f32 to vector<8x4xf32>
    %105 = arith.subf %101, %104 : vector<8x4xf32>
    %106 = arith.mulf %103, %105 : vector<8x4xf32>
    %cst_73 = arith.constant dense<0.000000e+00> : vector<8xf32>
    %107 = vector.multi_reduction <add>, %106, %cst_73 [1] : vector<8x4xf32> to vector<8xf32>
    %108 = vector.shape_cast %107 : vector<8xf32> to vector<8x1xf32>
    %c0_74 = arith.constant 0 : index
    %c0_75 = arith.constant 0 : index
    %109 = vector.load %arg16[%c0_74, %c0_75] : memref<8x10xf32, #tpu.memory_space<vmem>>, vector<8x1xf32>
    tpu.vector_store %arg16[%c0_74, %c0_75], %108 {strides = array<i32>} : memref<8x10xf32, #tpu.memory_space<vmem>>, vector<8x1xf32>,
    %c0_76 = arith.constant 0 : index
    %c1 = arith.constant 1 : index
    %110 = vector.load %arg16[%c0_76, %c1] : memref<8x10xf32, #tpu.memory_space<vmem>>, vector<8x1xf32>
    tpu.vector_store %arg16[%c0_76, %c1], %23 {strides = array<i32>} : memref<8x10xf32, #tpu.memory_space<vmem>>, vector<8x1xf32>,
    %c0_77 = arith.constant 0 : index
    %c2 = arith.constant 2 : index
    %111 = vector.load %arg16[%c0_77, %c2] : memref<8x10xf32, #tpu.memory_space<vmem>>, vector<8x4xf32>
    tpu.vector_store %arg16[%c0_77, %c2], %58 {strides = array<i32>} : memref<8x10xf32, #tpu.memory_space<vmem>>, vector<8x4xf32>,
    %c0_78 = arith.constant 0 : index
    %c6 = arith.constant 6 : index
    %112 = vector.load %arg16[%c0_78, %c6] : memref<8x10xf32, #tpu.memory_space<vmem>>, vector<8x4xf32>
    tpu.vector_store %arg16[%c0_78, %c6], %66 {strides = array<i32>} : memref<8x10xf32, #tpu.memory_space<vmem>>, vector<8x4xf32>,
    return
  }
  func.func @transform_0(%arg0: i32) -> (i32, i32) {
    %c0_i32 = arith.constant 0 : i32
    %c0_i32_0 = arith.constant 0 : i32
    return %arg0, %c0_i32 : i32, i32
  }
  func.func @transform_1(%arg0: i32) -> (i32, i32) {
    %c0_i32 = arith.constant 0 : i32
    %c0_i32_0 = arith.constant 0 : i32
    return %arg0, %c0_i32 : i32, i32
  }
  func.func @transform_2(%arg0: i32) -> (i32, i32) {
    %c0_i32 = arith.constant 0 : i32
    %c0_i32_0 = arith.constant 0 : i32
    %c0_i32_1 = arith.constant 0 : i32
    return %c0_i32, %c0_i32_0 : i32, i32
  }
  func.func @transform_3(%arg0: i32) -> (i32, i32) {
    %c0_i32 = arith.constant 0 : i32
    %c0_i32_0 = arith.constant 0 : i32
    %c0_i32_1 = arith.constant 0 : i32
    return %c0_i32, %c0_i32_0 : i32, i32
  }
  func.func @transform_4(%arg0: i32) -> (i32, i32) {
    %c0_i32 = arith.constant 0 : i32
    %c0_i32_0 = arith.constant 0 : i32
    %c0_i32_1 = arith.constant 0 : i32
    return %c0_i32, %c0_i32_0 : i32, i32
  }
  func.func @transform_5(%arg0: i32) -> (i32, i32) {
    %c0_i32 = arith.constant 0 : i32
    %c0_i32_0 = arith.constant 0 : i32
    %c0_i32_1 = arith.constant 0 : i32
    return %c0_i32, %c0_i32_0 : i32, i32
  }
  func.func @transform_6(%arg0: i32) -> (i32, i32) {
    %c0_i32 = arith.constant 0 : i32
    %c0_i32_0 = arith.constant 0 : i32
    %c0_i32_1 = arith.constant 0 : i32
    return %c0_i32, %c0_i32_0 : i32, i32
  }
  func.func @transform_7(%arg0: i32) -> (i32, i32) {
    %c0_i32 = arith.constant 0 : i32
    %c0_i32_0 = arith.constant 0 : i32
    %c0_i32_1 = arith.constant 0 : i32
    return %c0_i32, %c0_i32_0 : i32, i32
  }
  func.func @transform_8(%arg0: i32) -> (i32, i32) {
    %c0_i32 = arith.constant 0 : i32
    %c0_i32_0 = arith.constant 0 : i32
    %c0_i32_1 = arith.constant 0 : i32
    return %c0_i32, %c0_i32_0 : i32, i32
  }
  func.func @transform_9(%arg0: i32) -> (i32, i32) {
    %c0_i32 = arith.constant 0 : i32
    %c0_i32_0 = arith.constant 0 : i32
    %c0_i32_1 = arith.constant 0 : i32
    return %c0_i32, %c0_i32_0 : i32, i32
  }
  func.func @transform_10(%arg0: i32) -> (i32, i32) {
    %c0_i32 = arith.constant 0 : i32
    %c0_i32_0 = arith.constant 0 : i32
    %c0_i32_1 = arith.constant 0 : i32
    return %c0_i32, %c0_i32_0 : i32, i32
  }
  func.func @transform_11(%arg0: i32) -> (i32, i32) {
    %c0_i32 = arith.constant 0 : i32
    %c0_i32_0 = arith.constant 0 : i32
    %c0_i32_1 = arith.constant 0 : i32
    return %c0_i32, %c0_i32_0 : i32, i32
  }
  func.func @transform_12(%arg0: i32) -> (i32, i32) {
    %c0_i32 = arith.constant 0 : i32
    %c0_i32_0 = arith.constant 0 : i32
    %c0_i32_1 = arith.constant 0 : i32
    return %c0_i32, %c0_i32_0 : i32, i32
  }
  func.func @transform_13(%arg0: i32) -> (i32, i32) {
    %c0_i32 = arith.constant 0 : i32
    %c0_i32_0 = arith.constant 0 : i32
    %c0_i32_1 = arith.constant 0 : i32
    return %c0_i32, %c0_i32_0 : i32, i32
  }
  func.func @transform_14(%arg0: i32) -> (i32, i32) {
    %c0_i32 = arith.constant 0 : i32
    %c0_i32_0 = arith.constant 0 : i32
    %c0_i32_1 = arith.constant 0 : i32
    return %c0_i32, %c0_i32_0 : i32, i32
  }
  func.func @transform_15(%arg0: i32) -> (i32, i32) {
    %c0_i32 = arith.constant 0 : i32
    %c0_i32_0 = arith.constant 0 : i32
    return %arg0, %c0_i32 : i32, i32
  }
}

</mosaic_0001>

<llo_original>
// kernel: forward.1
$region0: #{forward.1}
  #allocation0 [shape = 'u32[]', space=smem, size = 0x4, offset = 0x4, fixed_abs, tag = 'smem constant byte address 0x4 - core index']
  #allocation1 [shape = 'u32[144,128]{1,0:T(1,128)}', space=vmem, size = 0x12000, scoped, tag = 'internal scratch']
  #allocation2 [shape = 'f32[1,1]{1,0:T(1,128)S(1)}', space=vmem, size = 0x200, scoped, tag = 'scoped memory for forward.1']
  %s0 = inlined_call_operand.vmem [shape: f32[16,128], index: 0, kind: input, shape index: {}]
  %s1 = inlined_call_operand.vmem [shape: f32[16,64], index: 1, kind: input, shape index: {}]
  %s2 = inlined_call_operand.vmem [shape: f32[128,1024], index: 2, kind: input, shape index: {}]
  %s3 = inlined_call_operand.vmem [shape: f32[64,1188], index: 3, kind: input, shape index: {}]
  %s4 = inlined_call_operand.vmem [shape: f32[1,1188], index: 4, kind: input, shape index: {}]
  %s5 = inlined_call_operand.vmem [shape: f32[4,512], index: 5, kind: input, shape index: {}]
  %s6 = inlined_call_operand.vmem [shape: f32[64,4], index: 6, kind: input, shape index: {}]
  %s7 = inlined_call_operand.vmem [shape: f32[1,4], index: 7, kind: input, shape index: {}]
  %s8 = inlined_call_operand.vmem [shape: f32[64,1], index: 8, kind: input, shape index: {}]
  %s9 = inlined_call_operand.<no memory space> [shape: f32[1,1], index: 9, kind: input, shape index: {}]
  %s10 = inlined_call_operand.vmem [shape: f32[512,16], index: 10, kind: input, shape index: {}]
  %s11 = inlined_call_operand.vmem [shape: f32[512,16], index: 11, kind: input, shape index: {}]
  %s12 = inlined_call_operand.vmem [shape: f32[4,16], index: 12, kind: input, shape index: {}]
  %s13 = inlined_call_operand.vmem [shape: f32[16,4], index: 13, kind: input, shape index: {}]
  %s14 = inlined_call_operand.vmem [shape: f32[16,4], index: 14, kind: input, shape index: {}]
  %s15 = inlined_call_operand.vmem [shape: f32[16,10], index: 15, kind: output, shape index: {}]
  %s16 = sld [smem:[#allocation0]]
  $region93: #{forward.1} parent=0
    _
  %s18 = ssub.s32 1, %s16
  %s19 = scalar_select 0, %s18, %s16
  %v20 = vstv %s9
  %21 = vst [vmem:[#allocation2] sm:$0x1] %v20
  loop: start=0, step=1, limit=4
  $region2: #{forward.1} parent=0 // loop_pre_header
    _
  $region3: #{forward.1} parent=0 // loop_header
    %s23 = sphi 0, %s27
    %p24 = scmp.ge.s32.totalorder %s23, 4
    %s33 = sphi 0, %s35
    %s36 = sphi 0, %s33
    %s37 = sphi 0, %s36
    %s53 = sphi 0, %s37
    %s59 = sphi 0, %s61
    %s62 = sphi 0, %s59
    %s63 = sphi 0, %s62
    %s79 = sphi 0, %s63
    %s83 = sphi 0, %s83
    %s85 = sphi 0, %s83
    %s86 = sphi 0, %s85
    %s100 = sphi 0, %s86
    %s104 = sphi 0, %s104
    %s106 = sphi 0, %s104
    %s107 = sphi 0, %s106
    %s121 = sphi 0, %s107
    %s125 = sphi 0, %s125
    %s127 = sphi 0, %s125
    %s128 = sphi 0, %s127
    %s142 = sphi 0, %s128
    %s146 = sphi 0, %s146
    %s148 = sphi 0, %s146
    %s149 = sphi 0, %s148
    %s163 = sphi 0, %s149
    %s167 = sphi 0, %s167
    %s169 = sphi 0, %s167
    %s170 = sphi 0, %s169
    %s184 = sphi 0, %s170
    %s188 = sphi 0, %s188
    %s190 = sphi 0, %s188
    %s191 = sphi 0, %s190
    %s205 = sphi 0, %s191
    %s209 = sphi 0, %s209
    %s211 = sphi 0, %s209
    %s212 = sphi 0, %s211
    %s226 = sphi 0, %s212
    %s230 = sphi 0, %s230
    %s232 = sphi 0, %s230
    %s233 = sphi 0, %s232
    %s247 = sphi 0, %s233
    %s251 = sphi 0, %s251
    %s253 = sphi 0, %s251
    %s254 = sphi 0, %s253
    %s268 = sphi 0, %s254
    %s272 = sphi 0, %s272
    %s274 = sphi 0, %s272
    %s275 = sphi 0, %s274
    %s289 = sphi 0, %s275
    %s293 = sphi 0, %s293
    %s295 = sphi 0, %s293
    %s296 = sphi 0, %s295
    %s310 = sphi 0, %s296
    %s314 = sphi 0, %s314
    %s316 = sphi 0, %s314
    %s317 = sphi 0, %s316
    %s331 = sphi 0, %s317
    %s335 = sphi 0, %s335
    %s337 = sphi 0, %s335
    %s338 = sphi 0, %s337
    %s352 = sphi 0, %s338
    %s358 = sphi 0, %s360
    %s361 = sphi 0, %s358
    %s362 = sphi 0, %s361
    %s378 = sphi 0, %s362
  $region4: #{forward.1} parent=0 // loop_header_branch
    %26 = sbr.rel (%p24) target = $region8
  $region5: #{forward.1} parent=0 // loop_body
    %s28 = ssub.s32 %s23, 1
    %s29 = ssub.s32 %s23, 2
    %s30 = sadd.s32 %s23, 1
    %s31 = ssub.s32 %s23, %s30
    %p32 = scmp.eq.s32.totalorder %s31, 0
    %s34 = sadd.s32 %s33, 1
    %s35 = scalar_select %p32, %s33, %s34
    %p38 = pneg %p32
    %p39 = scmp.eq.s32.totalorder %s23, 1
    %p40 = por %p38, %p39
    %p41 = scmp.ne.s32.totalorder %s33, %s36
    %p42 = scmp.eq.s32.totalorder %s23, 0
    %p43 = por %p41, %p42
    %p44 = scmp.ne.s32.totalorder %s33, %s36
    %p45 = scmp.eq.s32.totalorder %s28, 1
    %p46 = por %p44, %p45
    %p47 = scmp.ne.s32.totalorder %s36, %s37
    %p48 = scmp.eq.s32.totalorder %s28, 0
    %p49 = por %p47, %p48
    %p50 = scmp.ne.s32.totalorder %s36, %s37
    %p51 = scmp.eq.s32.totalorder %s29, 1
    %p52 = por %p50, %p51
    %p54 = scmp.ne.s32.totalorder %s37, %s53
    %p55 = scmp.eq.s32.totalorder %s29, 0
    %p56 = por %p54, %p55
    %s57 = ssub.s32 %s23, %s30
    %p58 = scmp.eq.s32.totalorder %s57, 0
    %s60 = sadd.s32 %s59, 1
    %s61 = scalar_select %p58, %s59, %s60
    %p64 = pneg %p58
    %p65 = scmp.eq.s32.totalorder %s23, 1
    %p66 = por %p64, %p65
    %p67 = scmp.ne.s32.totalorder %s59, %s62
    %p68 = scmp.eq.s32.totalorder %s23, 0
    %p69 = por %p67, %p68
    %p70 = scmp.ne.s32.totalorder %s59, %s62
    %p71 = scmp.eq.s32.totalorder %s28, 1
    %p72 = por %p70, %p71
    %p73 = scmp.ne.s32.totalorder %s62, %s63
    %p74 = scmp.eq.s32.totalorder %s28, 0
    %p75 = por %p73, %p74
    %p76 = scmp.ne.s32.totalorder %s62, %s63
    %p77 = scmp.eq.s32.totalorder %s29, 1
    %p78 = por %p76, %p77
    %p80 = scmp.ne.s32.totalorder %s63, %s79
    %p81 = scmp.eq.s32.totalorder %s29, 0
    %p82 = por %p80, %p81
    %s84 = sadd.s32 %s83, 1
    %p87 = scmp.eq.s32.totalorder %s23, 1
    %p88 = scmp.ne.s32.totalorder %s83, %s85
    %p89 = scmp.eq.s32.totalorder %s23, 0
    %p90 = por %p88, %p89
    %p91 = scmp.ne.s32.totalorder %s83, %s85
    %p92 = scmp.eq.s32.totalorder %s28, 1
    %p93 = por %p91, %p92
    %p94 = scmp.ne.s32.totalorder %s85, %s86
    %p95 = scmp.eq.s32.totalorder %s28, 0
    %p96 = por %p94, %p95
    %p97 = scmp.ne.s32.totalorder %s85, %s86
    %p98 = scmp.eq.s32.totalorder %s29, 1
    %p99 = por %p97, %p98
    %p101 = scmp.ne.s32.totalorder %s86, %s100
    %p102 = scmp.eq.s32.totalorder %s29, 0
    %p103 = por %p101, %p102
    %s105 = sadd.s32 %s104, 1
    %p108 = scmp.eq.s32.totalorder %s23, 1
    %p109 = scmp.ne.s32.totalorder %s104, %s106
    %p110 = scmp.eq.s32.totalorder %s23, 0
    %p111 = por %p109, %p110
    %p112 = scmp.ne.s32.totalorder %s104, %s106
    %p113 = scmp.eq.s32.totalorder %s28, 1
    %p114 = por %p112, %p113
    %p115 = scmp.ne.s32.totalorder %s106, %s107
    %p116 = scmp.eq.s32.totalorder %s28, 0
    %p117 = por %p115, %p116
    %p118 = scmp.ne.s32.totalorder %s106, %s107
    %p119 = scmp.eq.s32.totalorder %s29, 1
    %p120 = por %p118, %p119
    %p122 = scmp.ne.s32.totalorder %s107, %s121
    %p123 = scmp.eq.s32.totalorder %s29, 0
    %p124 = por %p122, %p123
    %s126 = sadd.s32 %s125, 1
    %p129 = scmp.eq.s32.totalorder %s23, 1
    %p130 = scmp.ne.s32.totalorder %s125, %s127
    %p131 = scmp.eq.s32.totalorder %s23, 0
    %p132 = por %p130, %p131
    %p133 = scmp.ne.s32.totalorder %s125, %s127
    %p134 = scmp.eq.s32.totalorder %s28, 1
    %p135 = por %p133, %p134
    %p136 = scmp.ne.s32.totalorder %s127, %s128
    %p137 = scmp.eq.s32.totalorder %s28, 0
    %p138 = por %p136, %p137
    %p139 = scmp.ne.s32.totalorder %s127, %s128
    %p140 = scmp.eq.s32.totalorder %s29, 1
    %p141 = por %p139, %p140
    %p143 = scmp.ne.s32.totalorder %s128, %s142
    %p144 = scmp.eq.s32.totalorder %s29, 0
    %p145 = por %p143, %p144
    %s147 = sadd.s32 %s146, 1
    %p150 = scmp.eq.s32.totalorder %s23, 1
    %p151 = scmp.ne.s32.totalorder %s146, %s148
    %p152 = scmp.eq.s32.totalorder %s23, 0
    %p153 = por %p151, %p152
    %p154 = scmp.ne.s32.totalorder %s146, %s148
    %p155 = scmp.eq.s32.totalorder %s28, 1
    %p156 = por %p154, %p155
    %p157 = scmp.ne.s32.totalorder %s148, %s149
    %p158 = scmp.eq.s32.totalorder %s28, 0
    %p159 = por %p157, %p158
    %p160 = scmp.ne.s32.totalorder %s148, %s149
    %p161 = scmp.eq.s32.totalorder %s29, 1
    %p162 = por %p160, %p161
    %p164 = scmp.ne.s32.totalorder %s149, %s163
    %p165 = scmp.eq.s32.totalorder %s29, 0
    %p166 = por %p164, %p165
    %s168 = sadd.s32 %s167, 1
    %p171 = scmp.eq.s32.totalorder %s23, 1
    %p172 = scmp.ne.s32.totalorder %s167, %s169
    %p173 = scmp.eq.s32.totalorder %s23, 0
    %p174 = por %p172, %p173
    %p175 = scmp.ne.s32.totalorder %s167, %s169
    %p176 = scmp.eq.s32.totalorder %s28, 1
    %p177 = por %p175, %p176
    %p178 = scmp.ne.s32.totalorder %s169, %s170
    %p179 = scmp.eq.s32.totalorder %s28, 0
    %p180 = por %p178, %p179
    %p181 = scmp.ne.s32.totalorder %s169, %s170
    %p182 = scmp.eq.s32.totalorder %s29, 1
    %p183 = por %p181, %p182
    %p185 = scmp.ne.s32.totalorder %s170, %s184
    %p186 = scmp.eq.s32.totalorder %s29, 0
    %p187 = por %p185, %p186
    %s189 = sadd.s32 %s188, 1
    %p192 = scmp.eq.s32.totalorder %s23, 1
    %p193 = scmp.ne.s32.totalorder %s188, %s190
    %p194 = scmp.eq.s32.totalorder %s23, 0
    %p195 = por %p193, %p194
    %p196 = scmp.ne.s32.totalorder %s188, %s190
    %p197 = scmp.eq.s32.totalorder %s28, 1
    %p198 = por %p196, %p197
    %p199 = scmp.ne.s32.totalorder %s190, %s191
    %p200 = scmp.eq.s32.totalorder %s28, 0
    %p201 = por %p199, %p200
    %p202 = scmp.ne.s32.totalorder %s190, %s191
    %p203 = scmp.eq.s32.totalorder %s29, 1
    %p204 = por %p202, %p203
    %p206 = scmp.ne.s32.totalorder %s191, %s205
    %p207 = scmp.eq.s32.totalorder %s29, 0
    %p208 = por %p206, %p207
    %s210 = sadd.s32 %s209, 1
    %p213 = scmp.eq.s32.totalorder %s23, 1
    %p214 = scmp.ne.s32.totalorder %s209, %s211
    %p215 = scmp.eq.s32.totalorder %s23, 0
    %p216 = por %p214, %p215
    %p217 = scmp.ne.s32.totalorder %s209, %s211
    %p218 = scmp.eq.s32.totalorder %s28, 1
    %p219 = por %p217, %p218
    %p220 = scmp.ne.s32.totalorder %s211, %s212
    %p221 = scmp.eq.s32.totalorder %s28, 0
    %p222 = por %p220, %p221
    %p223 = scmp.ne.s32.totalorder %s211, %s212
    %p224 = scmp.eq.s32.totalorder %s29, 1
    %p225 = por %p223, %p224
    %p227 = scmp.ne.s32.totalorder %s212, %s226
    %p228 = scmp.eq.s32.totalorder %s29, 0
    %p229 = por %p227, %p228
    %s231 = sadd.s32 %s230, 1
    %p234 = scmp.eq.s32.totalorder %s23, 1
    %p235 = scmp.ne.s32.totalorder %s230, %s232
    %p236 = scmp.eq.s32.totalorder %s23, 0
    %p237 = por %p235, %p236
    %p238 = scmp.ne.s32.totalorder %s230, %s232
    %p239 = scmp.eq.s32.totalorder %s28, 1
    %p240 = por %p238, %p239
    %p241 = scmp.ne.s32.totalorder %s232, %s233
    %p242 = scmp.eq.s32.totalorder %s28, 0
    %p243 = por %p241, %p242
    %p244 = scmp.ne.s32.totalorder %s232, %s233
    %p245 = scmp.eq.s32.totalorder %s29, 1
    %p246 = por %p244, %p245
    %p248 = scmp.ne.s32.totalorder %s233, %s247
    %p249 = scmp.eq.s32.totalorder %s29, 0
    %p250 = por %p248, %p249
    %s252 = sadd.s32 %s251, 1
    %p255 = scmp.eq.s32.totalorder %s23, 1
    %p256 = scmp.ne.s32.totalorder %s251, %s253
    %p257 = scmp.eq.s32.totalorder %s23, 0
    %p258 = por %p256, %p257
    %p259 = scmp.ne.s32.totalorder %s251, %s253
    %p260 = scmp.eq.s32.totalorder %s28, 1
    %p261 = por %p259, %p260
    %p262 = scmp.ne.s32.totalorder %s253, %s254
    %p263 = scmp.eq.s32.totalorder %s28, 0
    %p264 = por %p262, %p263
    %p265 = scmp.ne.s32.totalorder %s253, %s254
    %p266 = scmp.eq.s32.totalorder %s29, 1
    %p267 = por %p265, %p266
    %p269 = scmp.ne.s32.totalorder %s254, %s268
    %p270 = scmp.eq.s32.totalorder %s29, 0
    %p271 = por %p269, %p270
    %s273 = sadd.s32 %s272, 1
    %p276 = scmp.eq.s32.totalorder %s23, 1
    %p277 = scmp.ne.s32.totalorder %s272, %s274
    %p278 = scmp.eq.s32.totalorder %s23, 0
    %p279 = por %p277, %p278
    %p280 = scmp.ne.s32.totalorder %s272, %s274
    %p281 = scmp.eq.s32.totalorder %s28, 1
    %p282 = por %p280, %p281
    %p283 = scmp.ne.s32.totalorder %s274, %s275
    %p284 = scmp.eq.s32.totalorder %s28, 0
    %p285 = por %p283, %p284
    %p286 = scmp.ne.s32.totalorder %s274, %s275
    %p287 = scmp.eq.s32.totalorder %s29, 1
    %p288 = por %p286, %p287
    %p290 = scmp.ne.s32.totalorder %s275, %s289
    %p291 = scmp.eq.s32.totalorder %s29, 0
    %p292 = por %p290, %p291
    %s294 = sadd.s32 %s293, 1
    %p297 = scmp.eq.s32.totalorder %s23, 1
    %p298 = scmp.ne.s32.totalorder %s293, %s295
    %p299 = scmp.eq.s32.totalorder %s23, 0
    %p300 = por %p298, %p299
    %p301 = scmp.ne.s32.totalorder %s293, %s295
    %p302 = scmp.eq.s32.totalorder %s28, 1
    %p303 = por %p301, %p302
    %p304 = scmp.ne.s32.totalorder %s295, %s296
    %p305 = scmp.eq.s32.totalorder %s28, 0
    %p306 = por %p304, %p305
    %p307 = scmp.ne.s32.totalorder %s295, %s296
    %p308 = scmp.eq.s32.totalorder %s29, 1
    %p309 = por %p307, %p308
    %p311 = scmp.ne.s32.totalorder %s296, %s310
    %p312 = scmp.eq.s32.totalorder %s29, 0
    %p313 = por %p311, %p312
    %s315 = sadd.s32 %s314, 1
    %p318 = scmp.eq.s32.totalorder %s23, 1
    %p319 = scmp.ne.s32.totalorder %s314, %s316
    %p320 = scmp.eq.s32.totalorder %s23, 0
    %p321 = por %p319, %p320
    %p322 = scmp.ne.s32.totalorder %s314, %s316
    %p323 = scmp.eq.s32.totalorder %s28, 1
    %p324 = por %p322, %p323
    %p325 = scmp.ne.s32.totalorder %s316, %s317
    %p326 = scmp.eq.s32.totalorder %s28, 0
    %p327 = por %p325, %p326
    %p328 = scmp.ne.s32.totalorder %s316, %s317
    %p329 = scmp.eq.s32.totalorder %s29, 1
    %p330 = por %p328, %p329
    %p332 = scmp.ne.s32.totalorder %s317, %s331
    %p333 = scmp.eq.s32.totalorder %s29, 0
    %p334 = por %p332, %p333
    %s336 = sadd.s32 %s335, 1
    %p339 = scmp.eq.s32.totalorder %s23, 1
    %p340 = scmp.ne.s32.totalorder %s335, %s337
    %p341 = scmp.eq.s32.totalorder %s23, 0
    %p342 = por %p340, %p341
    %p343 = scmp.ne.s32.totalorder %s335, %s337
    %p344 = scmp.eq.s32.totalorder %s28, 1
    %p345 = por %p343, %p344
    %p346 = scmp.ne.s32.totalorder %s337, %s338
    %p347 = scmp.eq.s32.totalorder %s28, 0
    %p348 = por %p346, %p347
    %p349 = scmp.ne.s32.totalorder %s337, %s338
    %p350 = scmp.eq.s32.totalorder %s29, 1
    %p351 = por %p349, %p350
    %p353 = scmp.ne.s32.totalorder %s338, %s352
    %p354 = scmp.eq.s32.totalorder %s29, 0
    %p355 = por %p353, %p354
    %s356 = ssub.s32 %s23, %s30
    %p357 = scmp.eq.s32.totalorder %s356, 0
    %s359 = sadd.s32 %s358, 1
    %s360 = scalar_select %p357, %s358, %s359
    %p363 = pneg %p357
    %p364 = scmp.eq.s32.totalorder %s23, 1
    %p365 = por %p363, %p364
    %p366 = scmp.ne.s32.totalorder %s358, %s361
    %p367 = scmp.eq.s32.totalorder %s23, 0
    %p368 = por %p366, %p367
    %p369 = scmp.ne.s32.totalorder %s358, %s361
    %p370 = scmp.eq.s32.totalorder %s28, 1
    %p371 = por %p369, %p370
    %p372 = scmp.ne.s32.totalorder %s361, %s362
    %p373 = scmp.eq.s32.totalorder %s28, 0
    %p374 = por %p372, %p373
    %p375 = scmp.ne.s32.totalorder %s361, %s362
    %p376 = scmp.eq.s32.totalorder %s29, 1
    %p377 = por %p375, %p376
    %p379 = scmp.ne.s32.totalorder %s362, %s378
    %p380 = scmp.eq.s32.totalorder %s29, 0
    %p381 = por %p379, %p380
    %p382 = scmp.le.s32.totalorder 1, %s23
    %p383 = scmp.lt.s32.totalorder %s23, 3
    %p384 = pnand %p382, %p383
    %p385 = pneg %p384
    // Predicated region
    $region9: #{forward.1} parent=5 // pred_check
      _
    $region10: #{forward.1} parent=5 // pred_check_branch
      %387 = sbr.rel (%p384) target = $region12
    $region11: #{forward.1} parent=5 // pred_region
      %s388 = ssub.s32 %s23, 1
      // Predicated region
      $region13: #{forward.1} parent=11 // pred_check
        %p389 = pneg %p96
      $region14: #{forward.1} parent=11 // pred_check_branch
        %391 = sbr.rel (%p389) target = $region16
      $region15: #{forward.1} parent=11 // pred_region
        _
      $region16: #{forward.1} parent=11 // pred_fallthru
        _
      // Predicated region
      $region17: #{forward.1} parent=11 // pred_check
        %p392 = pneg %p117
      $region18: #{forward.1} parent=11 // pred_check_branch
        %394 = sbr.rel (%p392) target = $region20
      $region19: #{forward.1} parent=11 // pred_region
        _
      $region20: #{forward.1} parent=11 // pred_fallthru
        _
      // Predicated region
      $region21: #{forward.1} parent=11 // pred_check
        %p395 = pneg %p138
      $region22: #{forward.1} parent=11 // pred_check_branch
        %397 = sbr.rel (%p395) target = $region24
      $region23: #{forward.1} parent=11 // pred_region
        _
      $region24: #{forward.1} parent=11 // pred_fallthru
        _
      // Predicated region
      $region25: #{forward.1} parent=11 // pred_check
        %p398 = pneg %p159
      $region26: #{forward.1} parent=11 // pred_check_branch
        %400 = sbr.rel (%p398) target = $region28
      $region27: #{forward.1} parent=11 // pred_region
        _
      $region28: #{forward.1} parent=11 // pred_fallthru
        _
      // Predicated region
      $region29: #{forward.1} parent=11 // pred_check
        %p401 = pneg %p180
      $region30: #{forward.1} parent=11 // pred_check_branch
        %403 = sbr.rel (%p401) target = $region32
      $region31: #{forward.1} parent=11 // pred_region
        _
      $region32: #{forward.1} parent=11 // pred_fallthru
        _
      // Predicated region
      $region33: #{forward.1} parent=11 // pred_check
        %p404 = pneg %p201
      $region34: #{forward.1} parent=11 // pred_check_branch
        %406 = sbr.rel (%p404) target = $region36
      $region35: #{forward.1} parent=11 // pred_region
        _
      $region36: #{forward.1} parent=11 // pred_fallthru
        _
      // Predicated region
      $region37: #{forward.1} parent=11 // pred_check
        %p407 = pneg %p222
      $region38: #{forward.1} parent=11 // pred_check_branch
        %409 = sbr.rel (%p407) target = $region40
      $region39: #{forward.1} parent=11 // pred_region
        _
      $region40: #{forward.1} parent=11 // pred_fallthru
        _
      // Predicated region
      $region41: #{forward.1} parent=11 // pred_check
        %p410 = pneg %p243
      $region42: #{forward.1} parent=11 // pred_check_branch
        %412 = sbr.rel (%p410) target = $region44
      $region43: #{forward.1} parent=11 // pred_region
        _
      $region44: #{forward.1} parent=11 // pred_fallthru
        _
      // Predicated region
      $region45: #{forward.1} parent=11 // pred_check
        %p413 = pneg %p264
      $region46: #{forward.1} parent=11 // pred_check_branch
        %415 = sbr.rel (%p413) target = $region48
      $region47: #{forward.1} parent=11 // pred_region
        _
      $region48: #{forward.1} parent=11 // pred_fallthru
        _
      // Predicated region
      $region49: #{forward.1} parent=11 // pred_check
        %p416 = pneg %p285
      $region50: #{forward.1} parent=11 // pred_check_branch
        %418 = sbr.rel (%p416) target = $region52
      $region51: #{forward.1} parent=11 // pred_region
        _
      $region52: #{forward.1} parent=11 // pred_fallthru
        _
      // Predicated region
      $region53: #{forward.1} parent=11 // pred_check
        %p419 = pneg %p306
      $region54: #{forward.1} parent=11 // pred_check_branch
        %421 = sbr.rel (%p419) target = $region56
      $region55: #{forward.1} parent=11 // pred_region
        _
      $region56: #{forward.1} parent=11 // pred_fallthru
        _
      // Predicated region
      $region57: #{forward.1} parent=11 // pred_check
        %p422 = pneg %p327
      $region58: #{forward.1} parent=11 // pred_check_branch
        %424 = sbr.rel (%p422) target = $region60
      $region59: #{forward.1} parent=11 // pred_region
        _
      $region60: #{forward.1} parent=11 // pred_fallthru
        _
      // Predicated region
      $region61: #{forward.1} parent=11 // pred_check
        %p425 = pneg %p348
      $region62: #{forward.1} parent=11 // pred_check_branch
        %427 = sbr.rel (%p425) target = $region64
      $region63: #{forward.1} parent=11 // pred_region
        _
      $region64: #{forward.1} parent=11 // pred_fallthru
        _
    $region12: #{forward.1} parent=5 // pred_fallthru
      _
    %p428 = scmp.lt.s32.totalorder %s23, 2
    // Predicated region
    $region65: #{forward.1} parent=5 // pred_check
      %p429 = pneg %p428
    $region66: #{forward.1} parent=5 // pred_check_branch
      %431 = sbr.rel (%p429) target = $region68
    $region67: #{forward.1} parent=5 // pred_region
      // Predicated region
      $region69: #{forward.1} parent=67 // pred_check
        %p432 = pneg %p43
      $region70: #{forward.1} parent=67 // pred_check_branch
        %434 = sbr.rel (%p432) target = $region72
      $region71: #{forward.1} parent=67 // pred_region
        %p435 = scmp.lt.s32.totalorder %s23, 1
        %s436 = scalar_select %p435, %s23, 1
        %s437 = smul.addr %s436, 8
        %s438 = scalar_lea.vmem %s0, %s437
      $region72: #{forward.1} parent=67 // pred_fallthru
        _
      // Predicated region
      $region73: #{forward.1} parent=67 // pred_check
        %p439 = pneg %p69
      $region74: #{forward.1} parent=67 // pred_check_branch
        %441 = sbr.rel (%p439) target = $region76
      $region75: #{forward.1} parent=67 // pred_region
        %p442 = scmp.lt.s32.totalorder %s23, 1
        %s443 = scalar_select %p442, %s23, 1
        %s444 = smul.addr %s443, 8
        %s445 = scalar_lea.vmem %s1, %s444
      $region76: #{forward.1} parent=67 // pred_fallthru
        _
    $region68: #{forward.1} parent=5 // pred_fallthru
      _
    %p446 = scmp.le.s32.totalorder 1, %s23
    %p447 = scmp.lt.s32.totalorder %s23, 3
    %p448 = pnand %p446, %p447
    %p449 = pneg %p448
    // Predicated region
    $region77: #{forward.1} parent=5 // pred_check
      _
    $region78: #{forward.1} parent=5 // pred_check_branch
      %451 = sbr.rel (%p448) target = $region80
    $region79: #{forward.1} parent=5 // pred_region
      %s452 = ssub.s32 %s23, 1
      %p453 = scmp.lt.s32.totalorder %s28, 1
      %s454 = scalar_select %p453, %s28, 1
      %s455 = smul.addr %s454, 8
      %s456 = scalar_lea.vmem %s0, %s455
      %p457 = pneg %p49
      %p458 = pneg %p46
      %p459 = scmp.lt.s32.totalorder %s28, 1
      %s460 = scalar_select %p459, %s28, 1
      %s461 = smul.addr %s460, 8
      %s462 = scalar_lea.vmem %s1, %s461
      %p463 = pneg %p75
      %p464 = pneg %p72
      %p465 = pneg %p96
      %p466 = pneg %p93
      %p467 = pneg %p117
      %p468 = pneg %p114
      %p469 = pneg %p138
      %p470 = pneg %p135
      %p471 = pneg %p159
      %p472 = pneg %p156
      %p473 = pneg %p180
      %p474 = pneg %p177
      %p475 = pneg %p201
      %p476 = pneg %p198
      %p477 = pneg %p222
      %p478 = pneg %p219
      %p479 = pneg %p243
      %p480 = pneg %p240
      %p481 = pneg %p264
      %p482 = pneg %p261
      %p483 = pneg %p285
      %p484 = pneg %p282
      %p485 = pneg %p306
      %p486 = pneg %p303
      %p487 = pneg %p327
      %p488 = pneg %p324
      %p489 = pneg %p348
      %p490 = pneg %p345
      %p491 = pneg %p374
      %p492 = pneg %p371
      %p493 = scmp.lt.s32.totalorder %s28, 1
      %s494 = scalar_select %p493, %s28, 1
      %s495 = smul.addr %s494, 8
      %s496 = scalar_lea.vmem %s15, %s495
      %p497 = scmp.lt.s32.totalorder %s28, 1
      %s498 = scalar_select %p497, %s28, 1
      %s499 = smul.addr %s498, 8
      %s500 = scalar_lea.vmem %s0, %s499
      %p501 = scmp.lt.s32.totalorder %s28, 1
      %s502 = scalar_select %p501, %s28, 1
      %s503 = smul.addr %s502, 8
      %s504 = scalar_lea.vmem %s1, %s503
      %p505 = scmp.lt.s32.totalorder %s28, 1
      %s506 = scalar_select %p505, %s28, 1
      %s507 = smul.addr %s506, 8
      %s508 = scalar_lea.vmem %s15, %s507
      %v509 = vld [vmem:[%s504] sm:$0xff]
      %v510 = vld [vmem:[%s500] sm:$0xff]
      %v511 = vld [vmem:[%s2] sm:$0xff]
      %v512 = vld [vmem:[%s2 + $0x8] sm:$0xff]
      %v513 = vld [vmem:[%s2 + $0x10] sm:$0xff]
      %v514 = vld [vmem:[%s2 + $0x18] sm:$0xff]
      %v515 = vld [vmem:[%s2 + $0x20] sm:$0xff]
      %v516 = vld [vmem:[%s2 + $0x28] sm:$0xff]
      %v517 = vld [vmem:[%s2 + $0x30] sm:$0xff]
      %v518 = vld [vmem:[%s2 + $0x38] sm:$0xff]
      %v519 = vld [vmem:[%s2 + $0x40] sm:$0xff]
      %v520 = vld [vmem:[%s2 + $0x48] sm:$0xff]
      %v521 = vld [vmem:[%s2 + $0x50] sm:$0xff]
      %v522 = vld [vmem:[%s2 + $0x58] sm:$0xff]
      %v523 = vld [vmem:[%s2 + $0x60] sm:$0xff]
      %v524 = vld [vmem:[%s2 + $0x68] sm:$0xff]
      %v525 = vld [vmem:[%s2 + $0x70] sm:$0xff]
      %v526 = vld [vmem:[%s2 + $0x78] sm:$0xff]
      %v527 = vld [vmem:[%s2 + $0x80] sm:$0xff]
      %v528 = vld [vmem:[%s2 + $0x88] sm:$0xff]
      %v529 = vld [vmem:[%s2 + $0x90] sm:$0xff]
      %v530 = vld [vmem:[%s2 + $0x98] sm:$0xff]
      %v531 = vld [vmem:[%s2 + $0xa0] sm:$0xff]
      %v532 = vld [vmem:[%s2 + $0xa8] sm:$0xff]
      %v533 = vld [vmem:[%s2 + $0xb0] sm:$0xff]
      %v534 = vld [vmem:[%s2 + $0xb8] sm:$0xff]
      %v535 = vld [vmem:[%s2 + $0xc0] sm:$0xff]
      %v536 = vld [vmem:[%s2 + $0xc8] sm:$0xff]
      %v537 = vld [vmem:[%s2 + $0xd0] sm:$0xff]
      %v538 = vld [vmem:[%s2 + $0xd8] sm:$0xff]
      %v539 = vld [vmem:[%s2 + $0xe0] sm:$0xff]
      %v540 = vld [vmem:[%s2 + $0xe8] sm:$0xff]
      %v541 = vld [vmem:[%s2 + $0xf0] sm:$0xff]
      %v542 = vld [vmem:[%s2 + $0xf8] sm:$0xff]
      %v543 = vld [vmem:[%s2 + $0x100] sm:$0xff]
      %v544 = vld [vmem:[%s2 + $0x108] sm:$0xff]
      %v545 = vld [vmem:[%s2 + $0x110] sm:$0xff]
      %v546 = vld [vmem:[%s2 + $0x118] sm:$0xff]
      %v547 = vld [vmem:[%s2 + $0x120] sm:$0xff]
      %v548 = vld [vmem:[%s2 + $0x128] sm:$0xff]
      %v549 = vld [vmem:[%s2 + $0x130] sm:$0xff]
      %v550 = vld [vmem:[%s2 + $0x138] sm:$0xff]
      %v551 = vld [vmem:[%s2 + $0x140] sm:$0xff]
      %v552 = vld [vmem:[%s2 + $0x148] sm:$0xff]
      %v553 = vld [vmem:[%s2 + $0x150] sm:$0xff]
      %v554 = vld [vmem:[%s2 + $0x158] sm:$0xff]
      %v555 = vld [vmem:[%s2 + $0x160] sm:$0xff]
      %v556 = vld [vmem:[%s2 + $0x168] sm:$0xff]
      %v557 = vld [vmem:[%s2 + $0x170] sm:$0xff]
      %v558 = vld [vmem:[%s2 + $0x178] sm:$0xff]
      %v559 = vld [vmem:[%s2 + $0x180] sm:$0xff]
      %v560 = vld [vmem:[%s2 + $0x188] sm:$0xff]
      %v561 = vld [vmem:[%s2 + $0x190] sm:$0xff]
      %v562 = vld [vmem:[%s2 + $0x198] sm:$0xff]
      %v563 = vld [vmem:[%s2 + $0x1a0] sm:$0xff]
      %v564 = vld [vmem:[%s2 + $0x1a8] sm:$0xff]
      %v565 = vld [vmem:[%s2 + $0x1b0] sm:$0xff]
      %v566 = vld [vmem:[%s2 + $0x1b8] sm:$0xff]
      %v567 = vld [vmem:[%s2 + $0x1c0] sm:$0xff]
      %v568 = vld [vmem:[%s2 + $0x1c8] sm:$0xff]
      %v569 = vld [vmem:[%s2 + $0x1d0] sm:$0xff]
      %v570 = vld [vmem:[%s2 + $0x1d8] sm:$0xff]
      %v571 = vld [vmem:[%s2 + $0x1e0] sm:$0xff]
      %v572 = vld [vmem:[%s2 + $0x1e8] sm:$0xff]
      %v573 = vld [vmem:[%s2 + $0x1f0] sm:$0xff]
      %v574 = vld [vmem:[%s2 + $0x1f8] sm:$0xff]
      %v575 = vld [vmem:[%s2 + $0x200] sm:$0xff]
      %v576 = vld [vmem:[%s2 + $0x208] sm:$0xff]
      %v577 = vld [vmem:[%s2 + $0x210] sm:$0xff]
      %v578 = vld [vmem:[%s2 + $0x218] sm:$0xff]
      %v579 = vld [vmem:[%s2 + $0x220] sm:$0xff]
      %v580 = vld [vmem:[%s2 + $0x228] sm:$0xff]
      %v581 = vld [vmem:[%s2 + $0x230] sm:$0xff]
      %v582 = vld [vmem:[%s2 + $0x238] sm:$0xff]
      %v583 = vld [vmem:[%s2 + $0x240] sm:$0xff]
      %v584 = vld [vmem:[%s2 + $0x248] sm:$0xff]
      %v585 = vld [vmem:[%s2 + $0x250] sm:$0xff]
      %v586 = vld [vmem:[%s2 + $0x258] sm:$0xff]
      %v587 = vld [vmem:[%s2 + $0x260] sm:$0xff]
      %v588 = vld [vmem:[%s2 + $0x268] sm:$0xff]
      %v589 = vld [vmem:[%s2 + $0x270] sm:$0xff]
      %v590 = vld [vmem:[%s2 + $0x278] sm:$0xff]
      %v591 = vld [vmem:[%s2 + $0x280] sm:$0xff]
      %v592 = vld [vmem:[%s2 + $0x288] sm:$0xff]
      %v593 = vld [vmem:[%s2 + $0x290] sm:$0xff]
      %v594 = vld [vmem:[%s2 + $0x298] sm:$0xff]
      %v595 = vld [vmem:[%s2 + $0x2a0] sm:$0xff]
      %v596 = vld [vmem:[%s2 + $0x2a8] sm:$0xff]
      %v597 = vld [vmem:[%s2 + $0x2b0] sm:$0xff]
      %v598 = vld [vmem:[%s2 + $0x2b8] sm:$0xff]
      %v599 = vld [vmem:[%s2 + $0x2c0] sm:$0xff]
      %v600 = vld [vmem:[%s2 + $0x2c8] sm:$0xff]
      %v601 = vld [vmem:[%s2 + $0x2d0] sm:$0xff]
      %v602 = vld [vmem:[%s2 + $0x2d8] sm:$0xff]
      %v603 = vld [vmem:[%s2 + $0x2e0] sm:$0xff]
      %v604 = vld [vmem:[%s2 + $0x2e8] sm:$0xff]
      %v605 = vld [vmem:[%s2 + $0x2f0] sm:$0xff]
      %v606 = vld [vmem:[%s2 + $0x2f8] sm:$0xff]
      %v607 = vld [vmem:[%s2 + $0x300] sm:$0xff]
      %v608 = vld [vmem:[%s2 + $0x308] sm:$0xff]
      %v609 = vld [vmem:[%s2 + $0x310] sm:$0xff]
      %v610 = vld [vmem:[%s2 + $0x318] sm:$0xff]
      %v611 = vld [vmem:[%s2 + $0x320] sm:$0xff]
      %v612 = vld [vmem:[%s2 + $0x328] sm:$0xff]
      %v613 = vld [vmem:[%s2 + $0x330] sm:$0xff]
      %v614 = vld [vmem:[%s2 + $0x338] sm:$0xff]
      %v615 = vld [vmem:[%s2 + $0x340] sm:$0xff]
      %v616 = vld [vmem:[%s2 + $0x348] sm:$0xff]
      %v617 = vld [vmem:[%s2 + $0x350] sm:$0xff]
      %v618 = vld [vmem:[%s2 + $0x358] sm:$0xff]
      %v619 = vld [vmem:[%s2 + $0x360] sm:$0xff]
      %v620 = vld [vmem:[%s2 + $0x368] sm:$0xff]
      %v621 = vld [vmem:[%s2 + $0x370] sm:$0xff]
      %v622 = vld [vmem:[%s2 + $0x378] sm:$0xff]
      %v623 = vld [vmem:[%s2 + $0x380] sm:$0xff]
      %v624 = vld [vmem:[%s2 + $0x388] sm:$0xff]
      %v625 = vld [vmem:[%s2 + $0x390] sm:$0xff]
      %v626 = vld [vmem:[%s2 + $0x398] sm:$0xff]
      %v627 = vld [vmem:[%s2 + $0x3a0] sm:$0xff]
      %v628 = vld [vmem:[%s2 + $0x3a8] sm:$0xff]
      %v629 = vld [vmem:[%s2 + $0x3b0] sm:$0xff]
      %v630 = vld [vmem:[%s2 + $0x3b8] sm:$0xff]
      %v631 = vld [vmem:[%s2 + $0x3c0] sm:$0xff]
      %v632 = vld [vmem:[%s2 + $0x3c8] sm:$0xff]
      %v633 = vld [vmem:[%s2 + $0x3d0] sm:$0xff]
      %v634 = vld [vmem:[%s2 + $0x3d8] sm:$0xff]
      %v635 = vld [vmem:[%s2 + $0x3e0] sm:$0xff]
      %v636 = vld [vmem:[%s2 + $0x3e8] sm:$0xff]
      %v637 = vld [vmem:[%s2 + $0x3f0] sm:$0xff]
      %v638 = vld [vmem:[%s2 + $0x3f8] sm:$0xff]
      %639 = vmatprep.subr.mxu0 %v632
      %640 = vmatpush1.msra.mxu0 %v631
      %641 = vmatprep.subr.mxu0 %v624
      %642 = vmatpush1.msra.mxu0 %v623
      %643 = vmatprep.subr.mxu0 %v616
      %644 = vmatpush1.msra.mxu0 %v615
      %645 = vmatprep.subr.mxu0 %v608
      %646 = vmatpush1.msra.mxu0 %v607
      %647 = vmatprep.subr.mxu0 %v600
      %648 = vmatpush1.msra.mxu0 %v599
      %649 = vmatprep.subr.mxu0 %v592
      %650 = vmatpush1.msra.mxu0 %v591
      %651 = vmatprep.subr.mxu0 %v584
      %652 = vmatpush1.msra.mxu0 %v583
      %653 = vmatprep.subr.mxu0 %v576
      %654 = vmatpush1.msra.mxu0 %v575
      %655 = vmatprep.subr.mxu0 %v568
      %656 = vmatpush1.msra.mxu0 %v567
      %657 = vmatprep.subr.mxu0 %v560
      %658 = vmatpush1.msra.mxu0 %v559
      %659 = vmatprep.subr.mxu0 %v552
      %660 = vmatpush1.msra.mxu0 %v551
      %661 = vmatprep.subr.mxu0 %v544
      %662 = vmatpush1.msra.mxu0 %v543
      %663 = vmatprep.subr.mxu0 %v536
      %664 = vmatpush1.msra.mxu0 %v535
      %665 = vmatprep.subr.mxu0 %v528
      %666 = vmatpush1.msra.mxu0 %v527
      %667 = vmatprep.subr.mxu0 %v520
      %668 = vmatpush1.msra.mxu0 %v519
      %669 = vmatprep.subr.mxu0 %v512
      %670 = vmatpush1.msra.mxu0 %v511
      %671 = vmatprep.subr.mxu0 0.0
      %672 = vmatpush2.msra.mxu0 0.0
      %673 = vmatprep.subr.mxu0 0.0
      %674 = vmatpush2.msra.mxu0 0.0
      %675 = vmatprep.subr.mxu0 0.0
      %676 = vmatpush2.msra.mxu0 0.0
      %677 = vmatprep.subr.mxu0 0.0
      %678 = vmatpush2.msra.mxu0 0.0
      %679 = vmatprep.subr.mxu0 0.0
      %680 = vmatpush2.msra.mxu0 0.0
      %681 = vmatprep.subr.mxu0 0.0
      %682 = vmatpush2.msra.mxu0 0.0
      %683 = vmatprep.subr.mxu0 0.0
      %684 = vmatpush2.msra.mxu0 0.0
      %685 = vmatprep.subr.mxu0 0.0
      %686 = vmatpush2.msra.mxu0 0.0
      %687 = vmatprep.subr.mxu0 0.0
      %688 = vmatpush2.msra.mxu0 0.0
      %689 = vmatprep.subr.mxu0 0.0
      %690 = vmatpush2.msra.mxu0 0.0
      %691 = vmatprep.subr.mxu0 0.0
      %692 = vmatpush2.msra.mxu0 0.0
      %693 = vmatprep.subr.mxu0 0.0
      %694 = vmatpush2.msra.mxu0 0.0
      %695 = vmatprep.subr.mxu0 0.0
      %696 = vmatpush2.msra.mxu0 0.0
      %697 = vmatprep.subr.mxu0 0.0
      %698 = vmatpush2.msra.mxu0 0.0
      %699 = vmatprep.subr.mxu0 0.0
      %700 = vmatpush2.msra.mxu0 0.0
      %701 = vmatprep.subr.mxu0 0.0
      %702 = vmatpush2.msra.mxu0 0.0
      %703 = vmatprep.mubr.f32.mxu0 0.0
      %704 = vmatmul.mubr.f32.gmra.mxu0 %v510
      %v705 = vpop.f32.mrf.mxu0
      %v706 = vadd.f32 0.0, %v705
      %v707 = vpop.f32.mrf.mxu0
      %v708 = vadd.f32 0.0, %v707
      %709 = vdwg.mxu0
      %710 = vmatprep.subr.mxu0 %v634
      %711 = vmatpush1.msra.mxu0 %v633
      %712 = vmatprep.subr.mxu0 %v626
      %713 = vmatpush1.msra.mxu0 %v625
      %714 = vmatprep.subr.mxu0 %v618
      %715 = vmatpush1.msra.mxu0 %v617
      %716 = vmatprep.subr.mxu0 %v610
      %717 = vmatpush1.msra.mxu0 %v609
      %718 = vmatprep.subr.mxu0 %v602
      %719 = vmatpush1.msra.mxu0 %v601
      %720 = vmatprep.subr.mxu0 %v594
      %721 = vmatpush1.msra.mxu0 %v593
      %722 = vmatprep.subr.mxu0 %v586
      %723 = vmatpush1.msra.mxu0 %v585
      %724 = vmatprep.subr.mxu0 %v578
      %725 = vmatpush1.msra.mxu0 %v577
      %726 = vmatprep.subr.mxu0 %v570
      %727 = vmatpush1.msra.mxu0 %v569
      %728 = vmatprep.subr.mxu0 %v562
      %729 = vmatpush1.msra.mxu0 %v561
      %730 = vmatprep.subr.mxu0 %v554
      %731 = vmatpush1.msra.mxu0 %v553
      %732 = vmatprep.subr.mxu0 %v546
      %733 = vmatpush1.msra.mxu0 %v545
      %734 = vmatprep.subr.mxu0 %v538
      %735 = vmatpush1.msra.mxu0 %v537
      %736 = vmatprep.subr.mxu0 %v530
      %737 = vmatpush1.msra.mxu0 %v529
      %738 = vmatprep.subr.mxu0 %v522
      %739 = vmatpush1.msra.mxu0 %v521
      %740 = vmatprep.subr.mxu0 %v514
      %741 = vmatpush1.msra.mxu0 %v513
      %742 = vmatprep.subr.mxu0 0.0
      %743 = vmatpush2.msra.mxu0 0.0
      %744 = vmatprep.subr.mxu0 0.0
      %745 = vmatpush2.msra.mxu0 0.0
      %746 = vmatprep.subr.mxu0 0.0
      %747 = vmatpush2.msra.mxu0 0.0
      %748 = vmatprep.subr.mxu0 0.0
      %749 = vmatpush2.msra.mxu0 0.0
      %750 = vmatprep.subr.mxu0 0.0
      %751 = vmatpush2.msra.mxu0 0.0
      %752 = vmatprep.subr.mxu0 0.0
      %753 = vmatpush2.msra.mxu0 0.0
      %754 = vmatprep.subr.mxu0 0.0
      %755 = vmatpush2.msra.mxu0 0.0
      %756 = vmatprep.subr.mxu0 0.0
      %757 = vmatpush2.msra.mxu0 0.0
      %758 = vmatprep.subr.mxu0 0.0
      %759 = vmatpush2.msra.mxu0 0.0
      %760 = vmatprep.subr.mxu0 0.0
      %761 = vmatpush2.msra.mxu0 0.0
      %762 = vmatprep.subr.mxu0 0.0
      %763 = vmatpush2.msra.mxu0 0.0
      %764 = vmatprep.subr.mxu0 0.0
      %765 = vmatpush2.msra.mxu0 0.0
      %766 = vmatprep.subr.mxu0 0.0
      %767 = vmatpush2.msra.mxu0 0.0
      %768 = vmatprep.subr.mxu0 0.0
      %769 = vmatpush2.msra.mxu0 0.0
      %770 = vmatprep.subr.mxu0 0.0
      %771 = vmatpush2.msra.mxu0 0.0
      %772 = vmatprep.subr.mxu0 0.0
      %773 = vmatpush2.msra.mxu0 0.0
      %774 = vmatprep.mubr.f32.mxu0 0.0
      %775 = vmatmul.mubr.f32.gmra.mxu0 %v510
      %v776 = vpop.f32.mrf.mxu0
      %v777 = vadd.f32 0.0, %v776
      %v778 = vpop.f32.mrf.mxu0
      %v779 = vadd.f32 0.0, %v778
      %780 = vdwg.mxu0
      %781 = vmatprep.subr.mxu0 %v636
      %782 = vmatpush1.msra.mxu0 %v635
      %783 = vmatprep.subr.mxu0 %v628
      %784 = vmatpush1.msra.mxu0 %v627
      %785 = vmatprep.subr.mxu0 %v620
      %786 = vmatpush1.msra.mxu0 %v619
      %787 = vmatprep.subr.mxu0 %v612
      %788 = vmatpush1.msra.mxu0 %v611
      %789 = vmatprep.subr.mxu0 %v604
      %790 = vmatpush1.msra.mxu0 %v603
      %791 = vmatprep.subr.mxu0 %v596
      %792 = vmatpush1.msra.mxu0 %v595
      %793 = vmatprep.subr.mxu0 %v588
      %794 = vmatpush1.msra.mxu0 %v587
      %795 = vmatprep.subr.mxu0 %v580
      %796 = vmatpush1.msra.mxu0 %v579
      %797 = vmatprep.subr.mxu0 %v572
      %798 = vmatpush1.msra.mxu0 %v571
      %799 = vmatprep.subr.mxu0 %v564
      %800 = vmatpush1.msra.mxu0 %v563
      %801 = vmatprep.subr.mxu0 %v556
      %802 = vmatpush1.msra.mxu0 %v555
      %803 = vmatprep.subr.mxu0 %v548
      %804 = vmatpush1.msra.mxu0 %v547
      %805 = vmatprep.subr.mxu0 %v540
      %806 = vmatpush1.msra.mxu0 %v539
      %807 = vmatprep.subr.mxu0 %v532
      %808 = vmatpush1.msra.mxu0 %v531
      %809 = vmatprep.subr.mxu0 %v524
      %810 = vmatpush1.msra.mxu0 %v523
      %811 = vmatprep.subr.mxu0 %v516
      %812 = vmatpush1.msra.mxu0 %v515
      %813 = vmatprep.subr.mxu0 0.0
      %814 = vmatpush2.msra.mxu0 0.0
      %815 = vmatprep.subr.mxu0 0.0
      %816 = vmatpush2.msra.mxu0 0.0
      %817 = vmatprep.subr.mxu0 0.0
      %818 = vmatpush2.msra.mxu0 0.0
      %819 = vmatprep.subr.mxu0 0.0
      %820 = vmatpush2.msra.mxu0 0.0
      %821 = vmatprep.subr.mxu0 0.0
      %822 = vmatpush2.msra.mxu0 0.0
      %823 = vmatprep.subr.mxu0 0.0
      %824 = vmatpush2.msra.mxu0 0.0
      %825 = vmatprep.subr.mxu0 0.0
      %826 = vmatpush2.msra.mxu0 0.0
      %827 = vmatprep.subr.mxu0 0.0
      %828 = vmatpush2.msra.mxu0 0.0
      %829 = vmatprep.subr.mxu0 0.0
      %830 = vmatpush2.msra.mxu0 0.0
      %831 = vmatprep.subr.mxu0 0.0
      %832 = vmatpush2.msra.mxu0 0.0
      %833 = vmatprep.subr.mxu0 0.0
      %834 = vmatpush2.msra.mxu0 0.0
      %835 = vmatprep.subr.mxu0 0.0
      %836 = vmatpush2.msra.mxu0 0.0
      %837 = vmatprep.subr.mxu0 0.0
      %838 = vmatpush2.msra.mxu0 0.0
      %839 = vmatprep.subr.mxu0 0.0
      %840 = vmatpush2.msra.mxu0 0.0
      %841 = vmatprep.subr.mxu0 0.0
      %842 = vmatpush2.msra.mxu0 0.0
      %843 = vmatprep.subr.mxu0 0.0
      %844 = vmatpush2.msra.mxu0 0.0
      %845 = vmatprep.mubr.f32.mxu0 0.0
      %846 = vmatmul.mubr.f32.gmra.mxu0 %v510
      %v847 = vpop.f32.mrf.mxu0
      %v848 = vadd.f32 0.0, %v847
      %v849 = vpop.f32.mrf.mxu0
      %v850 = vadd.f32 0.0, %v849
      %851 = vdwg.mxu0
      %852 = vmatprep.subr.mxu0 %v638
      %853 = vmatpush1.msra.mxu0 %v637
      %854 = vmatprep.subr.mxu0 %v630
      %855 = vmatpush1.msra.mxu0 %v629
      %856 = vmatprep.subr.mxu0 %v622
      %857 = vmatpush1.msra.mxu0 %v621
      %858 = vmatprep.subr.mxu0 %v614
      %859 = vmatpush1.msra.mxu0 %v613
      %860 = vmatprep.subr.mxu0 %v606
      %861 = vmatpush1.msra.mxu0 %v605
      %862 = vmatprep.subr.mxu0 %v598
      %863 = vmatpush1.msra.mxu0 %v597
      %864 = vmatprep.subr.mxu0 %v590
      %865 = vmatpush1.msra.mxu0 %v589
      %866 = vmatprep.subr.mxu0 %v582
      %867 = vmatpush1.msra.mxu0 %v581
      %868 = vmatprep.subr.mxu0 %v574
      %869 = vmatpush1.msra.mxu0 %v573
      %870 = vmatprep.subr.mxu0 %v566
      %871 = vmatpush1.msra.mxu0 %v565
      %872 = vmatprep.subr.mxu0 %v558
      %873 = vmatpush1.msra.mxu0 %v557
      %874 = vmatprep.subr.mxu0 %v550
      %875 = vmatpush1.msra.mxu0 %v549
      %876 = vmatprep.subr.mxu0 %v542
      %877 = vmatpush1.msra.mxu0 %v541
      %878 = vmatprep.subr.mxu0 %v534
      %879 = vmatpush1.msra.mxu0 %v533
      %880 = vmatprep.subr.mxu0 %v526
      %881 = vmatpush1.msra.mxu0 %v525
      %882 = vmatprep.subr.mxu0 %v518
      %883 = vmatpush1.msra.mxu0 %v517
      %884 = vmatprep.subr.mxu0 0.0
      %885 = vmatpush2.msra.mxu0 0.0
      %886 = vmatprep.subr.mxu0 0.0
      %887 = vmatpush2.msra.mxu0 0.0
      %888 = vmatprep.subr.mxu0 0.0
      %889 = vmatpush2.msra.mxu0 0.0
      %890 = vmatprep.subr.mxu0 0.0
      %891 = vmatpush2.msra.mxu0 0.0
      %892 = vmatprep.subr.mxu0 0.0
      %893 = vmatpush2.msra.mxu0 0.0
      %894 = vmatprep.subr.mxu0 0.0
      %895 = vmatpush2.msra.mxu0 0.0
      %896 = vmatprep.subr.mxu0 0.0
      %897 = vmatpush2.msra.mxu0 0.0
      %898 = vmatprep.subr.mxu0 0.0
      %899 = vmatpush2.msra.mxu0 0.0
      %900 = vmatprep.subr.mxu0 0.0
      %901 = vmatpush2.msra.mxu0 0.0
      %902 = vmatprep.subr.mxu0 0.0
      %903 = vmatpush2.msra.mxu0 0.0
      %904 = vmatprep.subr.mxu0 0.0
      %905 = vmatpush2.msra.mxu0 0.0
      %906 = vmatprep.subr.mxu0 0.0
      %907 = vmatpush2.msra.mxu0 0.0
      %908 = vmatprep.subr.mxu0 0.0
      %909 = vmatpush2.msra.mxu0 0.0
      %910 = vmatprep.subr.mxu0 0.0
      %911 = vmatpush2.msra.mxu0 0.0
      %912 = vmatprep.subr.mxu0 0.0
      %913 = vmatpush2.msra.mxu0 0.0
      %914 = vmatprep.subr.mxu0 0.0
      %915 = vmatpush2.msra.mxu0 0.0
      %916 = vmatprep.mubr.f32.mxu0 0.0
      %917 = vmatmul.mubr.f32.gmra.mxu0 %v510
      %v918 = vpop.f32.mrf.mxu0
      %v919 = vadd.f32 0.0, %v918
      %v920 = vpop.f32.mrf.mxu0
      %v921 = vadd.f32 0.0, %v920
      %922 = vdwg.mxu0
      %v923 = vmul.f32 %v706, %v848
      %v924 = vmul.f32 %v708, %v850
      %v925 = vmul.f32 %v777, %v919
      %v926 = vmul.f32 %v779, %v921
      %v927 = vld [vmem:[%s10] sm:$0xff]
      %v928 = vld [vmem:[%s10 + $0x8] sm:$0xff]
      %v929 = vld [vmem:[%s10 + $0x10] sm:$0xff]
      %v930 = vld [vmem:[%s10 + $0x18] sm:$0xff]
      %v931 = vld [vmem:[%s10 + $0x20] sm:$0xff]
      %v932 = vld [vmem:[%s10 + $0x28] sm:$0xff]
      %v933 = vld [vmem:[%s10 + $0x30] sm:$0xff]
      %v934 = vld [vmem:[%s10 + $0x38] sm:$0xff]
      %v935 = vld [vmem:[%s10 + $0x40] sm:$0xff]
      %v936 = vld [vmem:[%s10 + $0x48] sm:$0xff]
      %v937 = vld [vmem:[%s10 + $0x50] sm:$0xff]
      %v938 = vld [vmem:[%s10 + $0x58] sm:$0xff]
      %v939 = vld [vmem:[%s10 + $0x60] sm:$0xff]
      %v940 = vld [vmem:[%s10 + $0x68] sm:$0xff]
      %v941 = vld [vmem:[%s10 + $0x70] sm:$0xff]
      %v942 = vld [vmem:[%s10 + $0x78] sm:$0xff]
      %v943 = vld [vmem:[%s10 + $0x80] sm:$0xff]
      %v944 = vld [vmem:[%s10 + $0x88] sm:$0xff]
      %v945 = vld [vmem:[%s10 + $0x90] sm:$0xff]
      %v946 = vld [vmem:[%s10 + $0x98] sm:$0xff]
      %v947 = vld [vmem:[%s10 + $0xa0] sm:$0xff]
      %v948 = vld [vmem:[%s10 + $0xa8] sm:$0xff]
      %v949 = vld [vmem:[%s10 + $0xb0] sm:$0xff]
      %v950 = vld [vmem:[%s10 + $0xb8] sm:$0xff]
      %v951 = vld [vmem:[%s10 + $0xc0] sm:$0xff]
      %v952 = vld [vmem:[%s10 + $0xc8] sm:$0xff]
      %v953 = vld [vmem:[%s10 + $0xd0] sm:$0xff]
      %v954 = vld [vmem:[%s10 + $0xd8] sm:$0xff]
      %v955 = vld [vmem:[%s10 + $0xe0] sm:$0xff]
      %v956 = vld [vmem:[%s10 + $0xe8] sm:$0xff]
      %v957 = vld [vmem:[%s10 + $0xf0] sm:$0xff]
      %v958 = vld [vmem:[%s10 + $0xf8] sm:$0xff]
      %v959 = vld [vmem:[%s10 + $0x100] sm:$0xff]
      %v960 = vld [vmem:[%s10 + $0x108] sm:$0xff]
      %v961 = vld [vmem:[%s10 + $0x110] sm:$0xff]
      %v962 = vld [vmem:[%s10 + $0x118] sm:$0xff]
      %v963 = vld [vmem:[%s10 + $0x120] sm:$0xff]
      %v964 = vld [vmem:[%s10 + $0x128] sm:$0xff]
      %v965 = vld [vmem:[%s10 + $0x130] sm:$0xff]
      %v966 = vld [vmem:[%s10 + $0x138] sm:$0xff]
      %v967 = vld [vmem:[%s10 + $0x140] sm:$0xff]
      %v968 = vld [vmem:[%s10 + $0x148] sm:$0xff]
      %v969 = vld [vmem:[%s10 + $0x150] sm:$0xff]
      %v970 = vld [vmem:[%s10 + $0x158] sm:$0xff]
      %v971 = vld [vmem:[%s10 + $0x160] sm:$0xff]
      %v972 = vld [vmem:[%s10 + $0x168] sm:$0xff]
      %v973 = vld [vmem:[%s10 + $0x170] sm:$0xff]
      %v974 = vld [vmem:[%s10 + $0x178] sm:$0xff]
      %v975 = vld [vmem:[%s10 + $0x180] sm:$0xff]
      %v976 = vld [vmem:[%s10 + $0x188] sm:$0xff]
      %v977 = vld [vmem:[%s10 + $0x190] sm:$0xff]
      %v978 = vld [vmem:[%s10 + $0x198] sm:$0xff]
      %v979 = vld [vmem:[%s10 + $0x1a0] sm:$0xff]
      %v980 = vld [vmem:[%s10 + $0x1a8] sm:$0xff]
      %v981 = vld [vmem:[%s10 + $0x1b0] sm:$0xff]
      %v982 = vld [vmem:[%s10 + $0x1b8] sm:$0xff]
      %v983 = vld [vmem:[%s10 + $0x1c0] sm:$0xff]
      %v984 = vld [vmem:[%s10 + $0x1c8] sm:$0xff]
      %v985 = vld [vmem:[%s10 + $0x1d0] sm:$0xff]
      %v986 = vld [vmem:[%s10 + $0x1d8] sm:$0xff]
      %v987 = vld [vmem:[%s10 + $0x1e0] sm:$0xff]
      %v988 = vld [vmem:[%s10 + $0x1e8] sm:$0xff]
      %v989 = vld [vmem:[%s10 + $0x1f0] sm:$0xff]
      %v990 = vld [vmem:[%s10 + $0x1f8] sm:$0xff]
      %991 = vmatprep.subr.mxu0 0.0
      %992 = vmatpush1.msra.mxu0 %v942
      %993 = vmatprep.subr.mxu0 0.0
      %994 = vmatpush1.msra.mxu0 %v941
      %995 = vmatprep.subr.mxu0 0.0
      %996 = vmatpush1.msra.mxu0 %v940
      %997 = vmatprep.subr.mxu0 0.0
      %998 = vmatpush1.msra.mxu0 %v939
      %999 = vmatprep.subr.mxu0 0.0
      %1000 = vmatpush1.msra.mxu0 %v938
      %1001 = vmatprep.subr.mxu0 0.0
      %1002 = vmatpush1.msra.mxu0 %v937
      %1003 = vmatprep.subr.mxu0 0.0
      %1004 = vmatpush1.msra.mxu0 %v936
      %1005 = vmatprep.subr.mxu0 0.0
      %1006 = vmatpush1.msra.mxu0 %v935
      %1007 = vmatprep.subr.mxu0 0.0
      %1008 = vmatpush1.msra.mxu0 %v934
      %1009 = vmatprep.subr.mxu0 0.0
      %1010 = vmatpush1.msra.mxu0 %v933
      %1011 = vmatprep.subr.mxu0 0.0
      %1012 = vmatpush1.msra.mxu0 %v932
      %1013 = vmatprep.subr.mxu0 0.0
      %1014 = vmatpush1.msra.mxu0 %v931
      %1015 = vmatprep.subr.mxu0 0.0
      %1016 = vmatpush1.msra.mxu0 %v930
      %1017 = vmatprep.subr.mxu0 0.0
      %1018 = vmatpush1.msra.mxu0 %v929
      %1019 = vmatprep.subr.mxu0 0.0
      %1020 = vmatpush1.msra.mxu0 %v928
      %1021 = vmatprep.subr.mxu0 0.0
      %1022 = vmatpush1.msra.mxu0 %v927
      %1023 = vmatprep.subr.mxu0 0.0
      %1024 = vmatpush2.msra.mxu0 %v958
      %1025 = vmatprep.subr.mxu0 0.0
      %1026 = vmatpush2.msra.mxu0 %v957
      %1027 = vmatprep.subr.mxu0 0.0
      %1028 = vmatpush2.msra.mxu0 %v956
      %1029 = vmatprep.subr.mxu0 0.0
      %1030 = vmatpush2.msra.mxu0 %v955
      %1031 = vmatprep.subr.mxu0 0.0
      %1032 = vmatpush2.msra.mxu0 %v954
      %1033 = vmatprep.subr.mxu0 0.0
      %1034 = vmatpush2.msra.mxu0 %v953
      %1035 = vmatprep.subr.mxu0 0.0
      %1036 = vmatpush2.msra.mxu0 %v952
      %1037 = vmatprep.subr.mxu0 0.0
      %1038 = vmatpush2.msra.mxu0 %v951
      %1039 = vmatprep.subr.mxu0 0.0
      %1040 = vmatpush2.msra.mxu0 %v950
      %1041 = vmatprep.subr.mxu0 0.0
      %1042 = vmatpush2.msra.mxu0 %v949
      %1043 = vmatprep.subr.mxu0 0.0
      %1044 = vmatpush2.msra.mxu0 %v948
      %1045 = vmatprep.subr.mxu0 0.0
      %1046 = vmatpush2.msra.mxu0 %v947
      %1047 = vmatprep.subr.mxu0 0.0
      %1048 = vmatpush2.msra.mxu0 %v946
      %1049 = vmatprep.subr.mxu0 0.0
      %1050 = vmatpush2.msra.mxu0 %v945
      %1051 = vmatprep.subr.mxu0 0.0
      %1052 = vmatpush2.msra.mxu0 %v944
      %1053 = vmatprep.subr.mxu0 0.0
      %1054 = vmatpush2.msra.mxu0 %v943
      %1055 = vmatprep.mubr.f32.mxu0 %v924
      %1056 = vmatmul.mubr.f32.gmra.mxu0 %v923
      %v1057 = vpop.f32.mrf.mxu0
      %v1058 = vadd.f32 0.0, %v1057
      %v1059 = vpop.f32.mrf.mxu0
      %1060 = vdwg.mxu0
      %1061 = vmatprep.subr.mxu0 0.0
      %1062 = vmatpush1.msra.mxu0 %v974
      %1063 = vmatprep.subr.mxu0 0.0
      %1064 = vmatpush1.msra.mxu0 %v973
      %1065 = vmatprep.subr.mxu0 0.0
      %1066 = vmatpush1.msra.mxu0 %v972
      %1067 = vmatprep.subr.mxu0 0.0
      %1068 = vmatpush1.msra.mxu0 %v971
      %1069 = vmatprep.subr.mxu0 0.0
      %1070 = vmatpush1.msra.mxu0 %v970
      %1071 = vmatprep.subr.mxu0 0.0
      %1072 = vmatpush1.msra.mxu0 %v969
      %1073 = vmatprep.subr.mxu0 0.0
      %1074 = vmatpush1.msra.mxu0 %v968
      %1075 = vmatprep.subr.mxu0 0.0
      %1076 = vmatpush1.msra.mxu0 %v967
      %1077 = vmatprep.subr.mxu0 0.0
      %1078 = vmatpush1.msra.mxu0 %v966
      %1079 = vmatprep.subr.mxu0 0.0
      %1080 = vmatpush1.msra.mxu0 %v965
      %1081 = vmatprep.subr.mxu0 0.0
      %1082 = vmatpush1.msra.mxu0 %v964
      %1083 = vmatprep.subr.mxu0 0.0
      %1084 = vmatpush1.msra.mxu0 %v963
      %1085 = vmatprep.subr.mxu0 0.0
      %1086 = vmatpush1.msra.mxu0 %v962
      %1087 = vmatprep.subr.mxu0 0.0
      %1088 = vmatpush1.msra.mxu0 %v961
      %1089 = vmatprep.subr.mxu0 0.0
      %1090 = vmatpush1.msra.mxu0 %v960
      %1091 = vmatprep.subr.mxu0 0.0
      %1092 = vmatpush1.msra.mxu0 %v959
      %1093 = vmatprep.subr.mxu0 0.0
      %1094 = vmatpush2.msra.mxu0 %v990
      %1095 = vmatprep.subr.mxu0 0.0
      %1096 = vmatpush2.msra.mxu0 %v989
      %1097 = vmatprep.subr.mxu0 0.0
      %1098 = vmatpush2.msra.mxu0 %v988
      %1099 = vmatprep.subr.mxu0 0.0
      %1100 = vmatpush2.msra.mxu0 %v987
      %1101 = vmatprep.subr.mxu0 0.0
      %1102 = vmatpush2.msra.mxu0 %v986
      %1103 = vmatprep.subr.mxu0 0.0
      %1104 = vmatpush2.msra.mxu0 %v985
      %1105 = vmatprep.subr.mxu0 0.0
      %1106 = vmatpush2.msra.mxu0 %v984
      %1107 = vmatprep.subr.mxu0 0.0
      %1108 = vmatpush2.msra.mxu0 %v983
      %1109 = vmatprep.subr.mxu0 0.0
      %1110 = vmatpush2.msra.mxu0 %v982
      %1111 = vmatprep.subr.mxu0 0.0
      %1112 = vmatpush2.msra.mxu0 %v981
      %1113 = vmatprep.subr.mxu0 0.0
      %1114 = vmatpush2.msra.mxu0 %v980
      %1115 = vmatprep.subr.mxu0 0.0
      %1116 = vmatpush2.msra.mxu0 %v979
      %1117 = vmatprep.subr.mxu0 0.0
      %1118 = vmatpush2.msra.mxu0 %v978
      %1119 = vmatprep.subr.mxu0 0.0
      %1120 = vmatpush2.msra.mxu0 %v977
      %1121 = vmatprep.subr.mxu0 0.0
      %1122 = vmatpush2.msra.mxu0 %v976
      %1123 = vmatprep.subr.mxu0 0.0
      %1124 = vmatpush2.msra.mxu0 %v975
      %1125 = vmatprep.mubr.f32.mxu0 %v926
      %1126 = vmatmul.mubr.f32.gmra.mxu0 %v925
      %v1127 = vpop.f32.mrf.mxu0
      %v1128 = vadd.f32 %v1058, %v1127
      %v1129 = vpop.f32.mrf.mxu0
      %1130 = vdwg.mxu0
      %vm1131 = vcmask 130048
      %v1132 = vsel %vm1131, %v1128, -inf
      %1133 = vmax.xlane.f32.xlu0 %v1132
      %v1134 = vpop.xlane.xlu0 %1133
      %v1135 = vsub.f32 %v1128, %v1134
      %v1136 = vmul.f32 %v1135, 1.442695
      %v1137 = vpow.pop %v1136
      %v1138 = vld [vmem:[%s14] sm:$0xff]
      %v1139 = vld [vmem:[%s14 + $0x8] sm:$0xff]
      %v1141 = vsel %vm1131, %v1137, 0
      %1143 = vmatprep.subr.mxu0 0.0
      %1144 = vmatpush1.msra.mxu0 0.0
      %1145 = vmatprep.subr.mxu0 0.0
      %1146 = vmatpush1.msra.mxu0 0.0
      %1147 = vmatprep.subr.mxu0 0.0
      %1148 = vmatpush1.msra.mxu0 0.0
      %1149 = vmatprep.subr.mxu0 0.0
      %1150 = vmatpush1.msra.mxu0 0.0
      %1151 = vmatprep.subr.mxu0 0.0
      %1152 = vmatpush1.msra.mxu0 0.0
      %1153 = vmatprep.subr.mxu0 0.0
      %1154 = vmatpush1.msra.mxu0 0.0
      %1155 = vmatprep.subr.mxu0 0.0
      %1156 = vmatpush1.msra.mxu0 0.0
      %1157 = vmatprep.subr.mxu0 0.0
      %1158 = vmatpush1.msra.mxu0 0.0
      %1159 = vmatprep.subr.mxu0 0.0
      %1160 = vmatpush1.msra.mxu0 0.0
      %1161 = vmatprep.subr.mxu0 0.0
      %1162 = vmatpush1.msra.mxu0 0.0
      %1163 = vmatprep.subr.mxu0 0.0
      %1164 = vmatpush1.msra.mxu0 0.0
      %1165 = vmatprep.subr.mxu0 0.0
      %1166 = vmatpush1.msra.mxu0 0.0
      %1167 = vmatprep.subr.mxu0 0.0
      %1168 = vmatpush1.msra.mxu0 0.0
      %1169 = vmatprep.subr.mxu0 0.0
      %1170 = vmatpush1.msra.mxu0 0.0
      %1171 = vmatprep.subr.mxu0 0.0
      %1172 = vmatpush1.msra.mxu0 %v1139
      %1173 = vmatprep.subr.mxu0 0.0
      %1174 = vmatpush1.msra.mxu0 %v1138
      %1175 = vmatprep.subr.mxu0 0.0
      %1176 = vmatpush2.msra.mxu0 0.0
      %1177 = vmatprep.subr.mxu0 0.0
      %1178 = vmatpush2.msra.mxu0 0.0
      %1179 = vmatprep.subr.mxu0 0.0
      %1180 = vmatpush2.msra.mxu0 0.0
      %1181 = vmatprep.subr.mxu0 0.0
      %1182 = vmatpush2.msra.mxu0 0.0
      %1183 = vmatprep.subr.mxu0 0.0
      %1184 = vmatpush2.msra.mxu0 0.0
      %1185 = vmatprep.subr.mxu0 0.0
      %1186 = vmatpush2.msra.mxu0 0.0
      %1187 = vmatprep.subr.mxu0 0.0
      %1188 = vmatpush2.msra.mxu0 0.0
      %1189 = vmatprep.subr.mxu0 0.0
      %1190 = vmatpush2.msra.mxu0 0.0
      %1191 = vmatprep.subr.mxu0 0.0
      %1192 = vmatpush2.msra.mxu0 0.0
      %1193 = vmatprep.subr.mxu0 0.0
      %1194 = vmatpush2.msra.mxu0 0.0
      %1195 = vmatprep.subr.mxu0 0.0
      %1196 = vmatpush2.msra.mxu0 0.0
      %1197 = vmatprep.subr.mxu0 0.0
      %1198 = vmatpush2.msra.mxu0 0.0
      %1199 = vmatprep.subr.mxu0 0.0
      %1200 = vmatpush2.msra.mxu0 0.0
      %1201 = vmatprep.subr.mxu0 0.0
      %1202 = vmatpush2.msra.mxu0 0.0
      %1203 = vmatprep.subr.mxu0 0.0
      %1204 = vmatpush2.msra.mxu0 0.0
      %1205 = vmatprep.subr.mxu0 0.0
      %1206 = vmatpush2.msra.mxu0 0.0
      %1207 = vmatprep.mubr.f32.mxu0 0.0
      %1208 = vmatmul.mubr.f32.gmra.mxu0 %v1141
      %v1209 = vpop.f32.mrf.mxu0
      %v1210 = vadd.f32 0.0, %v1209
      %v1211 = vpop.f32.mrf.mxu0
      %1212 = vdwg.mxu0
      %v1213 = vrcp.pop %v1210
      %v1214 = vmul.f32 1.0, %v1213
      %v1215 = vld [vmem:[%s12] sm:$0xf]
      %vm1216 = vcmask 31744
      %v1218 = vsel %vm1216, %v1214, 0
      %vm1220 = vcmask 1043456
      %v1222 = vsel %vm1220, %v1215, 0
      %1224 = vmatprep.subr.mxu0 0.0
      %1225 = vmatpush1.msra.mxu0 0.0
      %1226 = vmatprep.subr.mxu0 0.0
      %1227 = vmatpush1.msra.mxu0 0.0
      %1228 = vmatprep.subr.mxu0 0.0
      %1229 = vmatpush1.msra.mxu0 0.0
      %1230 = vmatprep.subr.mxu0 0.0
      %1231 = vmatpush1.msra.mxu0 0.0
      %1232 = vmatprep.subr.mxu0 0.0
      %1233 = vmatpush1.msra.mxu0 0.0
      %1234 = vmatprep.subr.mxu0 0.0
      %1235 = vmatpush1.msra.mxu0 0.0
      %1236 = vmatprep.subr.mxu0 0.0
      %1237 = vmatpush1.msra.mxu0 0.0
      %1238 = vmatprep.subr.mxu0 0.0
      %1239 = vmatpush1.msra.mxu0 0.0
      %1240 = vmatprep.subr.mxu0 0.0
      %1241 = vmatpush1.msra.mxu0 0.0
      %1242 = vmatprep.subr.mxu0 0.0
      %1243 = vmatpush1.msra.mxu0 0.0
      %1244 = vmatprep.subr.mxu0 0.0
      %1245 = vmatpush1.msra.mxu0 0.0
      %1246 = vmatprep.subr.mxu0 0.0
      %1247 = vmatpush1.msra.mxu0 0.0
      %1248 = vmatprep.subr.mxu0 0.0
      %1249 = vmatpush1.msra.mxu0 0.0
      %1250 = vmatprep.subr.mxu0 0.0
      %1251 = vmatpush1.msra.mxu0 0.0
      %1252 = vmatprep.subr.mxu0 0.0
      %1253 = vmatpush1.msra.mxu0 0.0
      %1254 = vmatprep.subr.mxu0 0.0
      %1255 = vmatpush1.msra.mxu0 %v1222
      %1256 = vmatprep.subr.mxu0 0.0
      %1257 = vmatpush2.msra.mxu0 0.0
      %1258 = vmatprep.subr.mxu0 0.0
      %1259 = vmatpush2.msra.mxu0 0.0
      %1260 = vmatprep.subr.mxu0 0.0
      %1261 = vmatpush2.msra.mxu0 0.0
      %1262 = vmatprep.subr.mxu0 0.0
      %1263 = vmatpush2.msra.mxu0 0.0
      %1264 = vmatprep.subr.mxu0 0.0
      %1265 = vmatpush2.msra.mxu0 0.0
      %1266 = vmatprep.subr.mxu0 0.0
      %1267 = vmatpush2.msra.mxu0 0.0
      %1268 = vmatprep.subr.mxu0 0.0
      %1269 = vmatpush2.msra.mxu0 0.0
      %1270 = vmatprep.subr.mxu0 0.0
      %1271 = vmatpush2.msra.mxu0 0.0
      %1272 = vmatprep.subr.mxu0 0.0
      %1273 = vmatpush2.msra.mxu0 0.0
      %1274 = vmatprep.subr.mxu0 0.0
      %1275 = vmatpush2.msra.mxu0 0.0
      %1276 = vmatprep.subr.mxu0 0.0
      %1277 = vmatpush2.msra.mxu0 0.0
      %1278 = vmatprep.subr.mxu0 0.0
      %1279 = vmatpush2.msra.mxu0 0.0
      %1280 = vmatprep.subr.mxu0 0.0
      %1281 = vmatpush2.msra.mxu0 0.0
      %1282 = vmatprep.subr.mxu0 0.0
      %1283 = vmatpush2.msra.mxu0 0.0
      %1284 = vmatprep.subr.mxu0 0.0
      %1285 = vmatpush2.msra.mxu0 0.0
      %1286 = vmatprep.subr.mxu0 0.0
      %1287 = vmatpush2.msra.mxu0 0.0
      %1288 = vmatprep.mubr.f32.mxu0 0.0
      %1289 = vmatmul.mubr.f32.gmra.mxu0 %v1218
      %v1290 = vpop.f32.mrf.mxu0
      %v1291 = vadd.f32 0.0, %v1290
      %v1292 = vpop.f32.mrf.mxu0
      %1293 = vdwg.mxu0
      %v1294 = vmul.f32 %v1137, %v1291
      %v1295 = vsel %vm1131, %v1294, 0.0
      %1296 = vadd.xlane.f32.xlu0 %v1295
      %v1297 = vpop.xlane.xlu0 %1296
      %1299 = vrot.lane.b32.xlu0 %v509, 96
      %v1300 = vpop.permute.xlu0 %1299
      %v1301 = vsel %vm1216, %v1300, 0
      %1303 = vmatprep.subr.mxu0 0.0
      %1304 = vmatpush1.msra.mxu0 0.0
      %1305 = vmatprep.subr.mxu0 0.0
      %1306 = vmatpush1.msra.mxu0 0.0
      %1307 = vmatprep.subr.mxu0 0.0
      %1308 = vmatpush1.msra.mxu0 0.0
      %1309 = vmatprep.subr.mxu0 0.0
      %1310 = vmatpush1.msra.mxu0 0.0
      %1311 = vmatprep.subr.mxu0 0.0
      %1312 = vmatpush1.msra.mxu0 0.0
      %1313 = vmatprep.subr.mxu0 0.0
      %1314 = vmatpush1.msra.mxu0 0.0
      %1315 = vmatprep.subr.mxu0 0.0
      %1316 = vmatpush1.msra.mxu0 0.0
      %1317 = vmatprep.subr.mxu0 0.0
      %1318 = vmatpush1.msra.mxu0 0.0
      %1319 = vmatprep.subr.mxu0 0.0
      %1320 = vmatpush1.msra.mxu0 0.0
      %1321 = vmatprep.subr.mxu0 0.0
      %1322 = vmatpush1.msra.mxu0 0.0
      %1323 = vmatprep.subr.mxu0 0.0
      %1324 = vmatpush1.msra.mxu0 0.0
      %1325 = vmatprep.subr.mxu0 0.0
      %1326 = vmatpush1.msra.mxu0 0.0
      %1327 = vmatprep.subr.mxu0 0.0
      %1328 = vmatpush1.msra.mxu0 0.0
      %1329 = vmatprep.subr.mxu0 0.0
      %1330 = vmatpush1.msra.mxu0 0.0
      %1331 = vmatprep.subr.mxu0 0.0
      %1332 = vmatpush1.msra.mxu0 0.0
      %1333 = vmatprep.subr.mxu0 0.0
      %1334 = vmatpush1.msra.mxu0 %v1222
      %1335 = vmatprep.subr.mxu0 0.0
      %1336 = vmatpush2.msra.mxu0 0.0
      %1337 = vmatprep.subr.mxu0 0.0
      %1338 = vmatpush2.msra.mxu0 0.0
      %1339 = vmatprep.subr.mxu0 0.0
      %1340 = vmatpush2.msra.mxu0 0.0
      %1341 = vmatprep.subr.mxu0 0.0
      %1342 = vmatpush2.msra.mxu0 0.0
      %1343 = vmatprep.subr.mxu0 0.0
      %1344 = vmatpush2.msra.mxu0 0.0
      %1345 = vmatprep.subr.mxu0 0.0
      %1346 = vmatpush2.msra.mxu0 0.0
      %1347 = vmatprep.subr.mxu0 0.0
      %1348 = vmatpush2.msra.mxu0 0.0
      %1349 = vmatprep.subr.mxu0 0.0
      %1350 = vmatpush2.msra.mxu0 0.0
      %1351 = vmatprep.subr.mxu0 0.0
      %1352 = vmatpush2.msra.mxu0 0.0
      %1353 = vmatprep.subr.mxu0 0.0
      %1354 = vmatpush2.msra.mxu0 0.0
      %1355 = vmatprep.subr.mxu0 0.0
      %1356 = vmatpush2.msra.mxu0 0.0
      %1357 = vmatprep.subr.mxu0 0.0
      %1358 = vmatpush2.msra.mxu0 0.0
      %1359 = vmatprep.subr.mxu0 0.0
      %1360 = vmatpush2.msra.mxu0 0.0
      %1361 = vmatprep.subr.mxu0 0.0
      %1362 = vmatpush2.msra.mxu0 0.0
      %1363 = vmatprep.subr.mxu0 0.0
      %1364 = vmatpush2.msra.mxu0 0.0
      %1365 = vmatprep.subr.mxu0 0.0
      %1366 = vmatpush2.msra.mxu0 0.0
      %1367 = vmatprep.mubr.f32.mxu0 0.0
      %1368 = vmatmul.mubr.f32.gmra.mxu0 %v1301
      %v1369 = vpop.f32.mrf.mxu0
      %v1370 = vadd.f32 0.0, %v1369
      %v1371 = vpop.f32.mrf.mxu0
      %1372 = vdwg.mxu0
      %v1373 = vmul.f32 %v1294, %v1370
      %v1374 = vld [vmem:[%s13] sm:$0xff]
      %v1375 = vld [vmem:[%s13 + $0x8] sm:$0xff]
      %v1377 = vsel %vm1131, %v1373, 0
      %1379 = vmatprep.subr.mxu0 0.0
      %1380 = vmatpush1.msra.mxu0 0.0
      %1381 = vmatprep.subr.mxu0 0.0
      %1382 = vmatpush1.msra.mxu0 0.0
      %1383 = vmatprep.subr.mxu0 0.0
      %1384 = vmatpush1.msra.mxu0 0.0
      %1385 = vmatprep.subr.mxu0 0.0
      %1386 = vmatpush1.msra.mxu0 0.0
      %1387 = vmatprep.subr.mxu0 0.0
      %1388 = vmatpush1.msra.mxu0 0.0
      %1389 = vmatprep.subr.mxu0 0.0
      %1390 = vmatpush1.msra.mxu0 0.0
      %1391 = vmatprep.subr.mxu0 0.0
      %1392 = vmatpush1.msra.mxu0 0.0
      %1393 = vmatprep.subr.mxu0 0.0
      %1394 = vmatpush1.msra.mxu0 0.0
      %1395 = vmatprep.subr.mxu0 0.0
      %1396 = vmatpush1.msra.mxu0 0.0
      %1397 = vmatprep.subr.mxu0 0.0
      %1398 = vmatpush1.msra.mxu0 0.0
      %1399 = vmatprep.subr.mxu0 0.0
      %1400 = vmatpush1.msra.mxu0 0.0
      %1401 = vmatprep.subr.mxu0 0.0
      %1402 = vmatpush1.msra.mxu0 0.0
      %1403 = vmatprep.subr.mxu0 0.0
      %1404 = vmatpush1.msra.mxu0 0.0
      %1405 = vmatprep.subr.mxu0 0.0
      %1406 = vmatpush1.msra.mxu0 0.0
      %1407 = vmatprep.subr.mxu0 0.0
      %1408 = vmatpush1.msra.mxu0 %v1375
      %1409 = vmatprep.subr.mxu0 0.0
      %1410 = vmatpush1.msra.mxu0 %v1374
      %1411 = vmatprep.subr.mxu0 0.0
      %1412 = vmatpush2.msra.mxu0 0.0
      %1413 = vmatprep.subr.mxu0 0.0
      %1414 = vmatpush2.msra.mxu0 0.0
      %1415 = vmatprep.subr.mxu0 0.0
      %1416 = vmatpush2.msra.mxu0 0.0
      %1417 = vmatprep.subr.mxu0 0.0
      %1418 = vmatpush2.msra.mxu0 0.0
      %1419 = vmatprep.subr.mxu0 0.0
      %1420 = vmatpush2.msra.mxu0 0.0
      %1421 = vmatprep.subr.mxu0 0.0
      %1422 = vmatpush2.msra.mxu0 0.0
      %1423 = vmatprep.subr.mxu0 0.0
      %1424 = vmatpush2.msra.mxu0 0.0
      %1425 = vmatprep.subr.mxu0 0.0
      %1426 = vmatpush2.msra.mxu0 0.0
      %1427 = vmatprep.subr.mxu0 0.0
      %1428 = vmatpush2.msra.mxu0 0.0
      %1429 = vmatprep.subr.mxu0 0.0
      %1430 = vmatpush2.msra.mxu0 0.0
      %1431 = vmatprep.subr.mxu0 0.0
      %1432 = vmatpush2.msra.mxu0 0.0
      %1433 = vmatprep.subr.mxu0 0.0
      %1434 = vmatpush2.msra.mxu0 0.0
      %1435 = vmatprep.subr.mxu0 0.0
      %1436 = vmatpush2.msra.mxu0 0.0
      %1437 = vmatprep.subr.mxu0 0.0
      %1438 = vmatpush2.msra.mxu0 0.0
      %1439 = vmatprep.subr.mxu0 0.0
      %1440 = vmatpush2.msra.mxu0 0.0
      %1441 = vmatprep.subr.mxu0 0.0
      %1442 = vmatpush2.msra.mxu0 0.0
      %1443 = vmatprep.mubr.f32.mxu0 0.0
      %1444 = vmatmul.mubr.f32.gmra.mxu0 %v1377
      %v1445 = vpop.f32.mrf.mxu0
      %v1446 = vadd.f32 0.0, %v1445
      %v1447 = vpop.f32.mrf.mxu0
      %1448 = vdwg.mxu0
      %v1449 = vld [vmem:[%s3] sm:$0xff]
      %v1450 = vld [vmem:[%s3 + $0x8] sm:$0xff]
      %v1451 = vld [vmem:[%s3 + $0x10] sm:$0xff]
      %v1452 = vld [vmem:[%s3 + $0x18] sm:$0xff]
      %v1453 = vld [vmem:[%s3 + $0x20] sm:$0xff]
      %v1454 = vld [vmem:[%s3 + $0x28] sm:$0xff]
      %v1455 = vld [vmem:[%s3 + $0x30] sm:$0xff]
      %v1456 = vld [vmem:[%s3 + $0x38] sm:$0xff]
      %v1457 = vld [vmem:[%s3 + $0x40] sm:$0xff]
      %v1458 = vld [vmem:[%s3 + $0x48] sm:$0xff]
      %v1459 = vld [vmem:[%s3 + $0x50] sm:$0xff]
      %v1460 = vld [vmem:[%s3 + $0x58] sm:$0xff]
      %v1461 = vld [vmem:[%s3 + $0x60] sm:$0xff]
      %v1462 = vld [vmem:[%s3 + $0x68] sm:$0xff]
      %v1463 = vld [vmem:[%s3 + $0x70] sm:$0xff]
      %v1464 = vld [vmem:[%s3 + $0x78] sm:$0xff]
      %v1465 = vld [vmem:[%s3 + $0x80] sm:$0xff]
      %v1466 = vld [vmem:[%s3 + $0x88] sm:$0xff]
      %v1467 = vld [vmem:[%s3 + $0x90] sm:$0xff]
      %v1468 = vld [vmem:[%s3 + $0x98] sm:$0xff]
      %v1469 = vld [vmem:[%s3 + $0xa0] sm:$0xff]
      %v1470 = vld [vmem:[%s3 + $0xa8] sm:$0xff]
      %v1471 = vld [vmem:[%s3 + $0xb0] sm:$0xff]
      %v1472 = vld [vmem:[%s3 + $0xb8] sm:$0xff]
      %v1473 = vld [vmem:[%s3 + $0xc0] sm:$0xff]
      %v1474 = vld [vmem:[%s3 + $0xc8] sm:$0xff]
      %v1475 = vld [vmem:[%s3 + $0xd0] sm:$0xff]
      %v1476 = vld [vmem:[%s3 + $0xd8] sm:$0xff]
      %v1477 = vld [vmem:[%s3 + $0xe0] sm:$0xff]
      %v1478 = vld [vmem:[%s3 + $0xe8] sm:$0xff]
      %v1479 = vld [vmem:[%s3 + $0xf0] sm:$0xff]
      %v1480 = vld [vmem:[%s3 + $0xf8] sm:$0xff]
      %v1481 = vld [vmem:[%s3 + $0x100] sm:$0xff]
      %v1482 = vld [vmem:[%s3 + $0x108] sm:$0xff]
      %v1483 = vld [vmem:[%s3 + $0x110] sm:$0xff]
      %v1484 = vld [vmem:[%s3 + $0x118] sm:$0xff]
      %v1485 = vld [vmem:[%s3 + $0x120] sm:$0xff]
      %v1486 = vld [vmem:[%s3 + $0x128] sm:$0xff]
      %v1487 = vld [vmem:[%s3 + $0x130] sm:$0xff]
      %v1488 = vld [vmem:[%s3 + $0x138] sm:$0xff]
      %v1489 = vld [vmem:[%s3 + $0x140] sm:$0xff]
      %v1490 = vld [vmem:[%s3 + $0x148] sm:$0xff]
      %v1491 = vld [vmem:[%s3 + $0x150] sm:$0xff]
      %v1492 = vld [vmem:[%s3 + $0x158] sm:$0xff]
      %v1493 = vld [vmem:[%s3 + $0x160] sm:$0xff]
      %v1494 = vld [vmem:[%s3 + $0x168] sm:$0xff]
      %v1495 = vld [vmem:[%s3 + $0x170] sm:$0xff]
      %v1496 = vld [vmem:[%s3 + $0x178] sm:$0xff]
      %v1497 = vld [vmem:[%s3 + $0x180] sm:$0xff]
      %v1498 = vld [vmem:[%s3 + $0x188] sm:$0xff]
      %v1499 = vld [vmem:[%s3 + $0x190] sm:$0xff]
      %v1500 = vld [vmem:[%s3 + $0x198] sm:$0xff]
      %v1501 = vld [vmem:[%s3 + $0x1a0] sm:$0xff]
      %v1502 = vld [vmem:[%s3 + $0x1a8] sm:$0xff]
      %v1503 = vld [vmem:[%s3 + $0x1b0] sm:$0xff]
      %v1504 = vld [vmem:[%s3 + $0x1b8] sm:$0xff]
      %v1505 = vld [vmem:[%s3 + $0x1c0] sm:$0xff]
      %v1506 = vld [vmem:[%s3 + $0x1c8] sm:$0xff]
      %v1507 = vld [vmem:[%s3 + $0x1d0] sm:$0xff]
      %v1508 = vld [vmem:[%s3 + $0x1d8] sm:$0xff]
      %v1509 = vld [vmem:[%s3 + $0x1e0] sm:$0xff]
      %v1510 = vld [vmem:[%s3 + $0x1e8] sm:$0xff]
      %v1511 = vld [vmem:[%s3 + $0x1f0] sm:$0xff]
      %v1512 = vld [vmem:[%s3 + $0x1f8] sm:$0xff]
      %v1513 = vld [vmem:[%s3 + $0x200] sm:$0xff]
      %v1514 = vld [vmem:[%s3 + $0x208] sm:$0xff]
      %v1515 = vld [vmem:[%s3 + $0x210] sm:$0xff]
      %v1516 = vld [vmem:[%s3 + $0x218] sm:$0xff]
      %v1517 = vld [vmem:[%s3 + $0x220] sm:$0xff]
      %v1518 = vld [vmem:[%s3 + $0x228] sm:$0xff]
      %v1519 = vld [vmem:[%s3 + $0x230] sm:$0xff]
      %v1520 = vld [vmem:[%s3 + $0x238] sm:$0xff]
      %v1521 = vld [vmem:[%s3 + $0x240] sm:$0xff]
      %v1522 = vld [vmem:[%s3 + $0x248] sm:$0xff]
      %v1523 = vld [vmem:[%s3 + $0x250] sm:$0xff]
      %v1524 = vld [vmem:[%s3 + $0x258] sm:$0xff]
      %v1525 = vld [vmem:[%s3 + $0x260] sm:$0xff]
      %v1526 = vld [vmem:[%s3 + $0x268] sm:$0xff]
      %v1527 = vld [vmem:[%s3 + $0x270] sm:$0xff]
      %v1528 = vld [vmem:[%s3 + $0x278] sm:$0xff]
      %v1529 = vld [vmem:[%s4] sm:$0xff]
      %v1530 = vld [vmem:[%s4 + $0x8] sm:$0x3]
      %v1533 = vlaneseq
      %v1534 = vshrl.u32 %v1533, 7
      %v1535 = vsub.s32 0, %v1534
      %v1536 = vrot.slane %v1529, %v1535
      %v1537 = vlaneseq
      %v1538 = vshrl.u32 %v1537, 7
      %v1539 = vsub.s32 1, %v1538
      %v1540 = vrot.slane %v1529, %v1539
      %v1541 = vlaneseq
      %v1542 = vshrl.u32 %v1541, 7
      %v1543 = vsub.s32 2, %v1542
      %v1544 = vrot.slane %v1529, %v1543
      %v1545 = vlaneseq
      %v1546 = vshrl.u32 %v1545, 7
      %v1547 = vsub.s32 3, %v1546
      %v1548 = vrot.slane %v1529, %v1547
      %v1549 = vlaneseq
      %v1550 = vshrl.u32 %v1549, 7
      %v1551 = vsub.s32 4, %v1550
      %v1552 = vrot.slane %v1529, %v1551
      %v1553 = vlaneseq
      %v1554 = vshrl.u32 %v1553, 7
      %v1555 = vsub.s32 5, %v1554
      %v1556 = vrot.slane %v1529, %v1555
      %v1557 = vlaneseq
      %v1558 = vshrl.u32 %v1557, 7
      %v1559 = vsub.s32 6, %v1558
      %v1560 = vrot.slane %v1529, %v1559
      %v1561 = vlaneseq
      %v1562 = vshrl.u32 %v1561, 7
      %v1563 = vsub.s32 7, %v1562
      %v1564 = vrot.slane %v1529, %v1563
      %v1565 = vlaneseq
      %v1566 = vshrl.u32 %v1565, 7
      %v1567 = vsub.s32 0, %v1566
      %v1568 = vrot.slane %v1530, %v1567
      %v1569 = vlaneseq
      %v1570 = vshrl.u32 %v1569, 7
      %v1571 = vsub.s32 1, %v1570
      %v1572 = vrot.slane %v1530, %v1571
      %vm1583 = vcmask 523264
      %v1584 = vsel %vm1583, %v509, 0
      %1586 = vmatprep.subr.mxu0 0.0
      %1587 = vmatpush1.msra.mxu0 0.0
      %1588 = vmatprep.subr.mxu0 0.0
      %1589 = vmatpush1.msra.mxu0 0.0
      %1590 = vmatprep.subr.mxu0 0.0
      %1591 = vmatpush1.msra.mxu0 0.0
      %1592 = vmatprep.subr.mxu0 0.0
      %1593 = vmatpush1.msra.mxu0 0.0
      %1594 = vmatprep.subr.mxu0 0.0
      %1595 = vmatpush1.msra.mxu0 0.0
      %1596 = vmatprep.subr.mxu0 0.0
      %1597 = vmatpush1.msra.mxu0 0.0
      %1598 = vmatprep.subr.mxu0 0.0
      %1599 = vmatpush1.msra.mxu0 0.0
      %1600 = vmatprep.subr.mxu0 0.0
      %1601 = vmatpush1.msra.mxu0 0.0
      %1602 = vmatprep.subr.mxu0 %v1520
      %1603 = vmatpush1.msra.mxu0 %v1519
      %1604 = vmatprep.subr.mxu0 %v1510
      %1605 = vmatpush1.msra.mxu0 %v1509
      %1606 = vmatprep.subr.mxu0 %v1500
      %1607 = vmatpush1.msra.mxu0 %v1499
      %1608 = vmatprep.subr.mxu0 %v1490
      %1609 = vmatpush1.msra.mxu0 %v1489
      %1610 = vmatprep.subr.mxu0 %v1480
      %1611 = vmatpush1.msra.mxu0 %v1479
      %1612 = vmatprep.subr.mxu0 %v1470
      %1613 = vmatpush1.msra.mxu0 %v1469
      %1614 = vmatprep.subr.mxu0 %v1460
      %1615 = vmatpush1.msra.mxu0 %v1459
      %1616 = vmatprep.subr.mxu0 %v1450
      %1617 = vmatpush1.msra.mxu0 %v1449
      %1618 = vmatprep.subr.mxu0 0.0
      %1619 = vmatpush2.msra.mxu0 0.0
      %1620 = vmatprep.subr.mxu0 0.0
      %1621 = vmatpush2.msra.mxu0 0.0
      %1622 = vmatprep.subr.mxu0 0.0
      %1623 = vmatpush2.msra.mxu0 0.0
      %1624 = vmatprep.subr.mxu0 0.0
      %1625 = vmatpush2.msra.mxu0 0.0
      %1626 = vmatprep.subr.mxu0 0.0
      %1627 = vmatpush2.msra.mxu0 0.0
      %1628 = vmatprep.subr.mxu0 0.0
      %1629 = vmatpush2.msra.mxu0 0.0
      %1630 = vmatprep.subr.mxu0 0.0
      %1631 = vmatpush2.msra.mxu0 0.0
      %1632 = vmatprep.subr.mxu0 0.0
      %1633 = vmatpush2.msra.mxu0 0.0
      %1634 = vmatprep.subr.mxu0 0.0
      %1635 = vmatpush2.msra.mxu0 0.0
      %1636 = vmatprep.subr.mxu0 0.0
      %1637 = vmatpush2.msra.mxu0 0.0
      %1638 = vmatprep.subr.mxu0 0.0
      %1639 = vmatpush2.msra.mxu0 0.0
      %1640 = vmatprep.subr.mxu0 0.0
      %1641 = vmatpush2.msra.mxu0 0.0
      %1642 = vmatprep.subr.mxu0 0.0
      %1643 = vmatpush2.msra.mxu0 0.0
      %1644 = vmatprep.subr.mxu0 0.0
      %1645 = vmatpush2.msra.mxu0 0.0
      %1646 = vmatprep.subr.mxu0 0.0
      %1647 = vmatpush2.msra.mxu0 0.0
      %1648 = vmatprep.subr.mxu0 0.0
      %1649 = vmatpush2.msra.mxu0 0.0
      %1650 = vmatprep.mubr.f32.mxu0 0.0
      %1651 = vmatmul.mubr.f32.gmra.mxu0 %v1584
      %v1652 = vpop.f32.mrf.mxu0
      %v1653 = vadd.f32 %v1536, %v1652
      %v1654 = vpop.f32.mrf.mxu0
      %v1655 = vadd.f32 %v1540, %v1654
      %1656 = vdwg.mxu0
      %1657 = vmatprep.subr.mxu0 0.0
      %1658 = vmatpush1.msra.mxu0 0.0
      %1659 = vmatprep.subr.mxu0 0.0
      %1660 = vmatpush1.msra.mxu0 0.0
      %1661 = vmatprep.subr.mxu0 0.0
      %1662 = vmatpush1.msra.mxu0 0.0
      %1663 = vmatprep.subr.mxu0 0.0
      %1664 = vmatpush1.msra.mxu0 0.0
      %1665 = vmatprep.subr.mxu0 0.0
      %1666 = vmatpush1.msra.mxu0 0.0
      %1667 = vmatprep.subr.mxu0 0.0
      %1668 = vmatpush1.msra.mxu0 0.0
      %1669 = vmatprep.subr.mxu0 0.0
      %1670 = vmatpush1.msra.mxu0 0.0
      %1671 = vmatprep.subr.mxu0 0.0
      %1672 = vmatpush1.msra.mxu0 0.0
      %1673 = vmatprep.subr.mxu0 %v1522
      %1674 = vmatpush1.msra.mxu0 %v1521
      %1675 = vmatprep.subr.mxu0 %v1512
      %1676 = vmatpush1.msra.mxu0 %v1511
      %1677 = vmatprep.subr.mxu0 %v1502
      %1678 = vmatpush1.msra.mxu0 %v1501
      %1679 = vmatprep.subr.mxu0 %v1492
      %1680 = vmatpush1.msra.mxu0 %v1491
      %1681 = vmatprep.subr.mxu0 %v1482
      %1682 = vmatpush1.msra.mxu0 %v1481
      %1683 = vmatprep.subr.mxu0 %v1472
      %1684 = vmatpush1.msra.mxu0 %v1471
      %1685 = vmatprep.subr.mxu0 %v1462
      %1686 = vmatpush1.msra.mxu0 %v1461
      %1687 = vmatprep.subr.mxu0 %v1452
      %1688 = vmatpush1.msra.mxu0 %v1451
      %1689 = vmatprep.subr.mxu0 0.0
      %1690 = vmatpush2.msra.mxu0 0.0
      %1691 = vmatprep.subr.mxu0 0.0
      %1692 = vmatpush2.msra.mxu0 0.0
      %1693 = vmatprep.subr.mxu0 0.0
      %1694 = vmatpush2.msra.mxu0 0.0
      %1695 = vmatprep.subr.mxu0 0.0
      %1696 = vmatpush2.msra.mxu0 0.0
      %1697 = vmatprep.subr.mxu0 0.0
      %1698 = vmatpush2.msra.mxu0 0.0
      %1699 = vmatprep.subr.mxu0 0.0
      %1700 = vmatpush2.msra.mxu0 0.0
      %1701 = vmatprep.subr.mxu0 0.0
      %1702 = vmatpush2.msra.mxu0 0.0
      %1703 = vmatprep.subr.mxu0 0.0
      %1704 = vmatpush2.msra.mxu0 0.0
      %1705 = vmatprep.subr.mxu0 0.0
      %1706 = vmatpush2.msra.mxu0 0.0
      %1707 = vmatprep.subr.mxu0 0.0
      %1708 = vmatpush2.msra.mxu0 0.0
      %1709 = vmatprep.subr.mxu0 0.0
      %1710 = vmatpush2.msra.mxu0 0.0
      %1711 = vmatprep.subr.mxu0 0.0
      %1712 = vmatpush2.msra.mxu0 0.0
      %1713 = vmatprep.subr.mxu0 0.0
      %1714 = vmatpush2.msra.mxu0 0.0
      %1715 = vmatprep.subr.mxu0 0.0
      %1716 = vmatpush2.msra.mxu0 0.0
      %1717 = vmatprep.subr.mxu0 0.0
      %1718 = vmatpush2.msra.mxu0 0.0
      %1719 = vmatprep.subr.mxu0 0.0
      %1720 = vmatpush2.msra.mxu0 0.0
      %1721 = vmatprep.mubr.f32.mxu0 0.0
      %1722 = vmatmul.mubr.f32.gmra.mxu0 %v1584
      %v1723 = vpop.f32.mrf.mxu0
      %v1724 = vadd.f32 %v1544, %v1723
      %v1725 = vpop.f32.mrf.mxu0
      %v1726 = vadd.f32 %v1548, %v1725
      %1727 = vdwg.mxu0
      %1728 = vmatprep.subr.mxu0 0.0
      %1729 = vmatpush1.msra.mxu0 0.0
      %1730 = vmatprep.subr.mxu0 0.0
      %1731 = vmatpush1.msra.mxu0 0.0
      %1732 = vmatprep.subr.mxu0 0.0
      %1733 = vmatpush1.msra.mxu0 0.0
      %1734 = vmatprep.subr.mxu0 0.0
      %1735 = vmatpush1.msra.mxu0 0.0
      %1736 = vmatprep.subr.mxu0 0.0
      %1737 = vmatpush1.msra.mxu0 0.0
      %1738 = vmatprep.subr.mxu0 0.0
      %1739 = vmatpush1.msra.mxu0 0.0
      %1740 = vmatprep.subr.mxu0 0.0
      %1741 = vmatpush1.msra.mxu0 0.0
      %1742 = vmatprep.subr.mxu0 0.0
      %1743 = vmatpush1.msra.mxu0 0.0
      %1744 = vmatprep.subr.mxu0 %v1524
      %1745 = vmatpush1.msra.mxu0 %v1523
      %1746 = vmatprep.subr.mxu0 %v1514
      %1747 = vmatpush1.msra.mxu0 %v1513
      %1748 = vmatprep.subr.mxu0 %v1504
      %1749 = vmatpush1.msra.mxu0 %v1503
      %1750 = vmatprep.subr.mxu0 %v1494
      %1751 = vmatpush1.msra.mxu0 %v1493
      %1752 = vmatprep.subr.mxu0 %v1484
      %1753 = vmatpush1.msra.mxu0 %v1483
      %1754 = vmatprep.subr.mxu0 %v1474
      %1755 = vmatpush1.msra.mxu0 %v1473
      %1756 = vmatprep.subr.mxu0 %v1464
      %1757 = vmatpush1.msra.mxu0 %v1463
      %1758 = vmatprep.subr.mxu0 %v1454
      %1759 = vmatpush1.msra.mxu0 %v1453
      %1760 = vmatprep.subr.mxu0 0.0
      %1761 = vmatpush2.msra.mxu0 0.0
      %1762 = vmatprep.subr.mxu0 0.0
      %1763 = vmatpush2.msra.mxu0 0.0
      %1764 = vmatprep.subr.mxu0 0.0
      %1765 = vmatpush2.msra.mxu0 0.0
      %1766 = vmatprep.subr.mxu0 0.0
      %1767 = vmatpush2.msra.mxu0 0.0
      %1768 = vmatprep.subr.mxu0 0.0
      %1769 = vmatpush2.msra.mxu0 0.0
      %1770 = vmatprep.subr.mxu0 0.0
      %1771 = vmatpush2.msra.mxu0 0.0
      %1772 = vmatprep.subr.mxu0 0.0
      %1773 = vmatpush2.msra.mxu0 0.0
      %1774 = vmatprep.subr.mxu0 0.0
      %1775 = vmatpush2.msra.mxu0 0.0
      %1776 = vmatprep.subr.mxu0 0.0
      %1777 = vmatpush2.msra.mxu0 0.0
      %1778 = vmatprep.subr.mxu0 0.0
      %1779 = vmatpush2.msra.mxu0 0.0
      %1780 = vmatprep.subr.mxu0 0.0
      %1781 = vmatpush2.msra.mxu0 0.0
      %1782 = vmatprep.subr.mxu0 0.0
      %1783 = vmatpush2.msra.mxu0 0.0
      %1784 = vmatprep.subr.mxu0 0.0
      %1785 = vmatpush2.msra.mxu0 0.0
      %1786 = vmatprep.subr.mxu0 0.0
      %1787 = vmatpush2.msra.mxu0 0.0
      %1788 = vmatprep.subr.mxu0 0.0
      %1789 = vmatpush2.msra.mxu0 0.0
      %1790 = vmatprep.subr.mxu0 0.0
      %1791 = vmatpush2.msra.mxu0 0.0
      %1792 = vmatprep.mubr.f32.mxu0 0.0
      %1793 = vmatmul.mubr.f32.gmra.mxu0 %v1584
      %v1794 = vpop.f32.mrf.mxu0
      %v1795 = vadd.f32 %v1552, %v1794
      %v1796 = vpop.f32.mrf.mxu0
      %v1797 = vadd.f32 %v1556, %v1796
      %1798 = vdwg.mxu0
      %1799 = vmatprep.subr.mxu0 0.0
      %1800 = vmatpush1.msra.mxu0 0.0
      %1801 = vmatprep.subr.mxu0 0.0
      %1802 = vmatpush1.msra.mxu0 0.0
      %1803 = vmatprep.subr.mxu0 0.0
      %1804 = vmatpush1.msra.mxu0 0.0
      %1805 = vmatprep.subr.mxu0 0.0
      %1806 = vmatpush1.msra.mxu0 0.0
      %1807 = vmatprep.subr.mxu0 0.0
      %1808 = vmatpush1.msra.mxu0 0.0
      %1809 = vmatprep.subr.mxu0 0.0
      %1810 = vmatpush1.msra.mxu0 0.0
      %1811 = vmatprep.subr.mxu0 0.0
      %1812 = vmatpush1.msra.mxu0 0.0
      %1813 = vmatprep.subr.mxu0 0.0
      %1814 = vmatpush1.msra.mxu0 0.0
      %1815 = vmatprep.subr.mxu0 %v1526
      %1816 = vmatpush1.msra.mxu0 %v1525
      %1817 = vmatprep.subr.mxu0 %v1516
      %1818 = vmatpush1.msra.mxu0 %v1515
      %1819 = vmatprep.subr.mxu0 %v1506
      %1820 = vmatpush1.msra.mxu0 %v1505
      %1821 = vmatprep.subr.mxu0 %v1496
      %1822 = vmatpush1.msra.mxu0 %v1495
      %1823 = vmatprep.subr.mxu0 %v1486
      %1824 = vmatpush1.msra.mxu0 %v1485
      %1825 = vmatprep.subr.mxu0 %v1476
      %1826 = vmatpush1.msra.mxu0 %v1475
      %1827 = vmatprep.subr.mxu0 %v1466
      %1828 = vmatpush1.msra.mxu0 %v1465
      %1829 = vmatprep.subr.mxu0 %v1456
      %1830 = vmatpush1.msra.mxu0 %v1455
      %1831 = vmatprep.subr.mxu0 0.0
      %1832 = vmatpush2.msra.mxu0 0.0
      %1833 = vmatprep.subr.mxu0 0.0
      %1834 = vmatpush2.msra.mxu0 0.0
      %1835 = vmatprep.subr.mxu0 0.0
      %1836 = vmatpush2.msra.mxu0 0.0
      %1837 = vmatprep.subr.mxu0 0.0
      %1838 = vmatpush2.msra.mxu0 0.0
      %1839 = vmatprep.subr.mxu0 0.0
      %1840 = vmatpush2.msra.mxu0 0.0
      %1841 = vmatprep.subr.mxu0 0.0
      %1842 = vmatpush2.msra.mxu0 0.0
      %1843 = vmatprep.subr.mxu0 0.0
      %1844 = vmatpush2.msra.mxu0 0.0
      %1845 = vmatprep.subr.mxu0 0.0
      %1846 = vmatpush2.msra.mxu0 0.0
      %1847 = vmatprep.subr.mxu0 0.0
      %1848 = vmatpush2.msra.mxu0 0.0
      %1849 = vmatprep.subr.mxu0 0.0
      %1850 = vmatpush2.msra.mxu0 0.0
      %1851 = vmatprep.subr.mxu0 0.0
      %1852 = vmatpush2.msra.mxu0 0.0
      %1853 = vmatprep.subr.mxu0 0.0
      %1854 = vmatpush2.msra.mxu0 0.0
      %1855 = vmatprep.subr.mxu0 0.0
      %1856 = vmatpush2.msra.mxu0 0.0
      %1857 = vmatprep.subr.mxu0 0.0
      %1858 = vmatpush2.msra.mxu0 0.0
      %1859 = vmatprep.subr.mxu0 0.0
      %1860 = vmatpush2.msra.mxu0 0.0
      %1861 = vmatprep.subr.mxu0 0.0
      %1862 = vmatpush2.msra.mxu0 0.0
      %1863 = vmatprep.mubr.f32.mxu0 0.0
      %1864 = vmatmul.mubr.f32.gmra.mxu0 %v1584
      %v1865 = vpop.f32.mrf.mxu0
      %v1866 = vadd.f32 %v1560, %v1865
      %v1867 = vpop.f32.mrf.mxu0
      %v1868 = vadd.f32 %v1564, %v1867
      %1869 = vdwg.mxu0
      %1870 = vmatprep.subr.mxu0 0.0
      %1871 = vmatpush1.msra.mxu0 0.0
      %1872 = vmatprep.subr.mxu0 0.0
      %1873 = vmatpush1.msra.mxu0 0.0
      %1874 = vmatprep.subr.mxu0 0.0
      %1875 = vmatpush1.msra.mxu0 0.0
      %1876 = vmatprep.subr.mxu0 0.0
      %1877 = vmatpush1.msra.mxu0 0.0
      %1878 = vmatprep.subr.mxu0 0.0
      %1879 = vmatpush1.msra.mxu0 0.0
      %1880 = vmatprep.subr.mxu0 0.0
      %1881 = vmatpush1.msra.mxu0 0.0
      %1882 = vmatprep.subr.mxu0 0.0
      %1883 = vmatpush1.msra.mxu0 0.0
      %1884 = vmatprep.subr.mxu0 0.0
      %1885 = vmatpush1.msra.mxu0 0.0
      %1886 = vmatprep.subr.mxu0 %v1528
      %1887 = vmatpush1.msra.mxu0 %v1527
      %1888 = vmatprep.subr.mxu0 %v1518
      %1889 = vmatpush1.msra.mxu0 %v1517
      %1890 = vmatprep.subr.mxu0 %v1508
      %1891 = vmatpush1.msra.mxu0 %v1507
      %1892 = vmatprep.subr.mxu0 %v1498
      %1893 = vmatpush1.msra.mxu0 %v1497
      %1894 = vmatprep.subr.mxu0 %v1488
      %1895 = vmatpush1.msra.mxu0 %v1487
      %1896 = vmatprep.subr.mxu0 %v1478
      %1897 = vmatpush1.msra.mxu0 %v1477
      %1898 = vmatprep.subr.mxu0 %v1468
      %1899 = vmatpush1.msra.mxu0 %v1467
      %1900 = vmatprep.subr.mxu0 %v1458
      %1901 = vmatpush1.msra.mxu0 %v1457
      %1902 = vmatprep.subr.mxu0 0.0
      %1903 = vmatpush2.msra.mxu0 0.0
      %1904 = vmatprep.subr.mxu0 0.0
      %1905 = vmatpush2.msra.mxu0 0.0
      %1906 = vmatprep.subr.mxu0 0.0
      %1907 = vmatpush2.msra.mxu0 0.0
      %1908 = vmatprep.subr.mxu0 0.0
      %1909 = vmatpush2.msra.mxu0 0.0
      %1910 = vmatprep.subr.mxu0 0.0
      %1911 = vmatpush2.msra.mxu0 0.0
      %1912 = vmatprep.subr.mxu0 0.0
      %1913 = vmatpush2.msra.mxu0 0.0
      %1914 = vmatprep.subr.mxu0 0.0
      %1915 = vmatpush2.msra.mxu0 0.0
      %1916 = vmatprep.subr.mxu0 0.0
      %1917 = vmatpush2.msra.mxu0 0.0
      %1918 = vmatprep.subr.mxu0 0.0
      %1919 = vmatpush2.msra.mxu0 0.0
      %1920 = vmatprep.subr.mxu0 0.0
      %1921 = vmatpush2.msra.mxu0 0.0
      %1922 = vmatprep.subr.mxu0 0.0
      %1923 = vmatpush2.msra.mxu0 0.0
      %1924 = vmatprep.subr.mxu0 0.0
      %1925 = vmatpush2.msra.mxu0 0.0
      %1926 = vmatprep.subr.mxu0 0.0
      %1927 = vmatpush2.msra.mxu0 0.0
      %1928 = vmatprep.subr.mxu0 0.0
      %1929 = vmatpush2.msra.mxu0 0.0
      %1930 = vmatprep.subr.mxu0 0.0
      %1931 = vmatpush2.msra.mxu0 0.0
      %1932 = vmatprep.subr.mxu0 0.0
      %1933 = vmatpush2.msra.mxu0 0.0
      %1934 = vmatprep.mubr.f32.mxu0 0.0
      %1935 = vmatmul.mubr.f32.gmra.mxu0 %v1584
      %v1936 = vpop.f32.mrf.mxu0
      %v1937 = vadd.f32 %v1568, %v1936
      %v1938 = vpop.f32.mrf.mxu0
      %v1939 = vadd.f32 %v1572, %v1938
      %1940 = vdwg.mxu0
      %v1941 = vld [vmem:[%s5] sm:$0xff]
      %v1942 = vld [vmem:[%s5 + $0x8] sm:$0xff]
      %v1945 = vcombine.high %v1941, %v1941
      %v1946 = vcombine.high %v1942, %v1942
      %v1948 = vsel %vm1216, %v1446, 0
      %v1950 = vsel %vm1220, %v1941, 0
      %v1952 = vsel %vm1220, %v1945, 0
      %v1954 = vsel %vm1220, %v1942, 0
      %v1956 = vsel %vm1220, %v1946, 0
      %1958 = vmatprep.subr.mxu0 0.0
      %1959 = vmatpush1.msra.mxu0 0.0
      %1960 = vmatprep.subr.mxu0 0.0
      %1961 = vmatpush1.msra.mxu0 0.0
      %1962 = vmatprep.subr.mxu0 0.0
      %1963 = vmatpush1.msra.mxu0 0.0
      %1964 = vmatprep.subr.mxu0 0.0
      %1965 = vmatpush1.msra.mxu0 0.0
      %1966 = vmatprep.subr.mxu0 0.0
      %1967 = vmatpush1.msra.mxu0 0.0
      %1968 = vmatprep.subr.mxu0 0.0
      %1969 = vmatpush1.msra.mxu0 0.0
      %1970 = vmatprep.subr.mxu0 0.0
      %1971 = vmatpush1.msra.mxu0 0.0
      %1972 = vmatprep.subr.mxu0 0.0
      %1973 = vmatpush1.msra.mxu0 0.0
      %1974 = vmatprep.subr.mxu0 0.0
      %1975 = vmatpush1.msra.mxu0 0.0
      %1976 = vmatprep.subr.mxu0 0.0
      %1977 = vmatpush1.msra.mxu0 0.0
      %1978 = vmatprep.subr.mxu0 0.0
      %1979 = vmatpush1.msra.mxu0 0.0
      %1980 = vmatprep.subr.mxu0 0.0
      %1981 = vmatpush1.msra.mxu0 0.0
      %1982 = vmatprep.subr.mxu0 0.0
      %1983 = vmatpush1.msra.mxu0 0.0
      %1984 = vmatprep.subr.mxu0 0.0
      %1985 = vmatpush1.msra.mxu0 0.0
      %1986 = vmatprep.subr.mxu0 0.0
      %1987 = vmatpush1.msra.mxu0 0.0
      %1988 = vmatprep.subr.mxu0 %v1952
      %1989 = vmatpush1.msra.mxu0 %v1950
      %1990 = vmatprep.subr.mxu0 0.0
      %1991 = vmatpush2.msra.mxu0 0.0
      %1992 = vmatprep.subr.mxu0 0.0
      %1993 = vmatpush2.msra.mxu0 0.0
      %1994 = vmatprep.subr.mxu0 0.0
      %1995 = vmatpush2.msra.mxu0 0.0
      %1996 = vmatprep.subr.mxu0 0.0
      %1997 = vmatpush2.msra.mxu0 0.0
      %1998 = vmatprep.subr.mxu0 0.0
      %1999 = vmatpush2.msra.mxu0 0.0
      %2000 = vmatprep.subr.mxu0 0.0
      %2001 = vmatpush2.msra.mxu0 0.0
      %2002 = vmatprep.subr.mxu0 0.0
      %2003 = vmatpush2.msra.mxu0 0.0
      %2004 = vmatprep.subr.mxu0 0.0
      %2005 = vmatpush2.msra.mxu0 0.0
      %2006 = vmatprep.subr.mxu0 0.0
      %2007 = vmatpush2.msra.mxu0 0.0
      %2008 = vmatprep.subr.mxu0 0.0
      %2009 = vmatpush2.msra.mxu0 0.0
      %2010 = vmatprep.subr.mxu0 0.0
      %2011 = vmatpush2.msra.mxu0 0.0
      %2012 = vmatprep.subr.mxu0 0.0
      %2013 = vmatpush2.msra.mxu0 0.0
      %2014 = vmatprep.subr.mxu0 0.0
      %2015 = vmatpush2.msra.mxu0 0.0
      %2016 = vmatprep.subr.mxu0 0.0
      %2017 = vmatpush2.msra.mxu0 0.0
      %2018 = vmatprep.subr.mxu0 0.0
      %2019 = vmatpush2.msra.mxu0 0.0
      %2020 = vmatprep.subr.mxu0 0.0
      %2021 = vmatpush2.msra.mxu0 0.0
      %2022 = vmatprep.mubr.f32.mxu0 0.0
      %2023 = vmatmul.mubr.f32.gmra.mxu0 %v1948
      %v2024 = vpop.f32.mrf.mxu0
      %v2025 = vadd.f32 0.0, %v2024
      %v2026 = vpop.f32.mrf.mxu0
      %v2027 = vadd.f32 0.0, %v2026
      %2028 = vdwg.mxu0
      %2029 = vmatprep.subr.mxu0 0.0
      %2030 = vmatpush1.msra.mxu0 0.0
      %2031 = vmatprep.subr.mxu0 0.0
      %2032 = vmatpush1.msra.mxu0 0.0
      %2033 = vmatprep.subr.mxu0 0.0
      %2034 = vmatpush1.msra.mxu0 0.0
      %2035 = vmatprep.subr.mxu0 0.0
      %2036 = vmatpush1.msra.mxu0 0.0
      %2037 = vmatprep.subr.mxu0 0.0
      %2038 = vmatpush1.msra.mxu0 0.0
      %2039 = vmatprep.subr.mxu0 0.0
      %2040 = vmatpush1.msra.mxu0 0.0
      %2041 = vmatprep.subr.mxu0 0.0
      %2042 = vmatpush1.msra.mxu0 0.0
      %2043 = vmatprep.subr.mxu0 0.0
      %2044 = vmatpush1.msra.mxu0 0.0
      %2045 = vmatprep.subr.mxu0 0.0
      %2046 = vmatpush1.msra.mxu0 0.0
      %2047 = vmatprep.subr.mxu0 0.0
      %2048 = vmatpush1.msra.mxu0 0.0
      %2049 = vmatprep.subr.mxu0 0.0
      %2050 = vmatpush1.msra.mxu0 0.0
      %2051 = vmatprep.subr.mxu0 0.0
      %2052 = vmatpush1.msra.mxu0 0.0
      %2053 = vmatprep.subr.mxu0 0.0
      %2054 = vmatpush1.msra.mxu0 0.0
      %2055 = vmatprep.subr.mxu0 0.0
      %2056 = vmatpush1.msra.mxu0 0.0
      %2057 = vmatprep.subr.mxu0 0.0
      %2058 = vmatpush1.msra.mxu0 0.0
      %2059 = vmatprep.subr.mxu0 %v1956
      %2060 = vmatpush1.msra.mxu0 %v1954
      %2061 = vmatprep.subr.mxu0 0.0
      %2062 = vmatpush2.msra.mxu0 0.0
      %2063 = vmatprep.subr.mxu0 0.0
      %2064 = vmatpush2.msra.mxu0 0.0
      %2065 = vmatprep.subr.mxu0 0.0
      %2066 = vmatpush2.msra.mxu0 0.0
      %2067 = vmatprep.subr.mxu0 0.0
      %2068 = vmatpush2.msra.mxu0 0.0
      %2069 = vmatprep.subr.mxu0 0.0
      %2070 = vmatpush2.msra.mxu0 0.0
      %2071 = vmatprep.subr.mxu0 0.0
      %2072 = vmatpush2.msra.mxu0 0.0
      %2073 = vmatprep.subr.mxu0 0.0
      %2074 = vmatpush2.msra.mxu0 0.0
      %2075 = vmatprep.subr.mxu0 0.0
      %2076 = vmatpush2.msra.mxu0 0.0
      %2077 = vmatprep.subr.mxu0 0.0
      %2078 = vmatpush2.msra.mxu0 0.0
      %2079 = vmatprep.subr.mxu0 0.0
      %2080 = vmatpush2.msra.mxu0 0.0
      %2081 = vmatprep.subr.mxu0 0.0
      %2082 = vmatpush2.msra.mxu0 0.0
      %2083 = vmatprep.subr.mxu0 0.0
      %2084 = vmatpush2.msra.mxu0 0.0
      %2085 = vmatprep.subr.mxu0 0.0
      %2086 = vmatpush2.msra.mxu0 0.0
      %2087 = vmatprep.subr.mxu0 0.0
      %2088 = vmatpush2.msra.mxu0 0.0
      %2089 = vmatprep.subr.mxu0 0.0
      %2090 = vmatpush2.msra.mxu0 0.0
      %2091 = vmatprep.subr.mxu0 0.0
      %2092 = vmatpush2.msra.mxu0 0.0
      %2093 = vmatprep.mubr.f32.mxu0 0.0
      %2094 = vmatmul.mubr.f32.gmra.mxu0 %v1948
      %v2095 = vpop.f32.mrf.mxu0
      %v2096 = vadd.f32 0.0, %v2095
      %v2097 = vpop.f32.mrf.mxu0
      %v2098 = vadd.f32 0.0, %v2097
      %2099 = vdwg.mxu0
      %v2100 = vadd.f32 %v1795, %v2025
      %v2101 = vadd.f32 %v1797, %v2027
      %v2102 = vadd.f32 %v1866, %v2096
      %v2103 = vadd.f32 %v1868, %v2098
      %v2104 = vmul.f32 %v1653, %v2100
      %v2105 = vmul.f32 %v1655, %v2101
      %v2106 = vmul.f32 %v1724, %v2102
      %v2107 = vmul.f32 %v1726, %v2103
      %v2108 = vld [vmem:[%s11] sm:$0xff]
      %v2109 = vld [vmem:[%s11 + $0x8] sm:$0xff]
      %v2110 = vld [vmem:[%s11 + $0x10] sm:$0xff]
      %v2111 = vld [vmem:[%s11 + $0x18] sm:$0xff]
      %v2112 = vld [vmem:[%s11 + $0x20] sm:$0xff]
      %v2113 = vld [vmem:[%s11 + $0x28] sm:$0xff]
      %v2114 = vld [vmem:[%s11 + $0x30] sm:$0xff]
      %v2115 = vld [vmem:[%s11 + $0x38] sm:$0xff]
      %v2116 = vld [vmem:[%s11 + $0x40] sm:$0xff]
      %v2117 = vld [vmem:[%s11 + $0x48] sm:$0xff]
      %v2118 = vld [vmem:[%s11 + $0x50] sm:$0xff]
      %v2119 = vld [vmem:[%s11 + $0x58] sm:$0xff]
      %v2120 = vld [vmem:[%s11 + $0x60] sm:$0xff]
      %v2121 = vld [vmem:[%s11 + $0x68] sm:$0xff]
      %v2122 = vld [vmem:[%s11 + $0x70] sm:$0xff]
      %v2123 = vld [vmem:[%s11 + $0x78] sm:$0xff]
      %v2124 = vld [vmem:[%s11 + $0x80] sm:$0xff]
      %v2125 = vld [vmem:[%s11 + $0x88] sm:$0xff]
      %v2126 = vld [vmem:[%s11 + $0x90] sm:$0xff]
      %v2127 = vld [vmem:[%s11 + $0x98] sm:$0xff]
      %v2128 = vld [vmem:[%s11 + $0xa0] sm:$0xff]
      %v2129 = vld [vmem:[%s11 + $0xa8] sm:$0xff]
      %v2130 = vld [vmem:[%s11 + $0xb0] sm:$0xff]
      %v2131 = vld [vmem:[%s11 + $0xb8] sm:$0xff]
      %v2132 = vld [vmem:[%s11 + $0xc0] sm:$0xff]
      %v2133 = vld [vmem:[%s11 + $0xc8] sm:$0xff]
      %v2134 = vld [vmem:[%s11 + $0xd0] sm:$0xff]
      %v2135 = vld [vmem:[%s11 + $0xd8] sm:$0xff]
      %v2136 = vld [vmem:[%s11 + $0xe0] sm:$0xff]
      %v2137 = vld [vmem:[%s11 + $0xe8] sm:$0xff]
      %v2138 = vld [vmem:[%s11 + $0xf0] sm:$0xff]
      %v2139 = vld [vmem:[%s11 + $0xf8] sm:$0xff]
      %v2140 = vld [vmem:[%s11 + $0x100] sm:$0xff]
      %v2141 = vld [vmem:[%s11 + $0x108] sm:$0xff]
      %v2142 = vld [vmem:[%s11 + $0x110] sm:$0xff]
      %v2143 = vld [vmem:[%s11 + $0x118] sm:$0xff]
      %v2144 = vld [vmem:[%s11 + $0x120] sm:$0xff]
      %v2145 = vld [vmem:[%s11 + $0x128] sm:$0xff]
      %v2146 = vld [vmem:[%s11 + $0x130] sm:$0xff]
      %v2147 = vld [vmem:[%s11 + $0x138] sm:$0xff]
      %v2148 = vld [vmem:[%s11 + $0x140] sm:$0xff]
      %v2149 = vld [vmem:[%s11 + $0x148] sm:$0xff]
      %v2150 = vld [vmem:[%s11 + $0x150] sm:$0xff]
      %v2151 = vld [vmem:[%s11 + $0x158] sm:$0xff]
      %v2152 = vld [vmem:[%s11 + $0x160] sm:$0xff]
      %v2153 = vld [vmem:[%s11 + $0x168] sm:$0xff]
      %v2154 = vld [vmem:[%s11 + $0x170] sm:$0xff]
      %v2155 = vld [vmem:[%s11 + $0x178] sm:$0xff]
      %v2156 = vld [vmem:[%s11 + $0x180] sm:$0xff]
      %v2157 = vld [vmem:[%s11 + $0x188] sm:$0xff]
      %v2158 = vld [vmem:[%s11 + $0x190] sm:$0xff]
      %v2159 = vld [vmem:[%s11 + $0x198] sm:$0xff]
      %v2160 = vld [vmem:[%s11 + $0x1a0] sm:$0xff]
      %v2161 = vld [vmem:[%s11 + $0x1a8] sm:$0xff]
      %v2162 = vld [vmem:[%s11 + $0x1b0] sm:$0xff]
      %v2163 = vld [vmem:[%s11 + $0x1b8] sm:$0xff]
      %v2164 = vld [vmem:[%s11 + $0x1c0] sm:$0xff]
      %v2165 = vld [vmem:[%s11 + $0x1c8] sm:$0xff]
      %v2166 = vld [vmem:[%s11 + $0x1d0] sm:$0xff]
      %v2167 = vld [vmem:[%s11 + $0x1d8] sm:$0xff]
      %v2168 = vld [vmem:[%s11 + $0x1e0] sm:$0xff]
      %v2169 = vld [vmem:[%s11 + $0x1e8] sm:$0xff]
      %v2170 = vld [vmem:[%s11 + $0x1f0] sm:$0xff]
      %v2171 = vld [vmem:[%s11 + $0x1f8] sm:$0xff]
      %2172 = vmatprep.subr.mxu0 0.0
      %2173 = vmatpush1.msra.mxu0 %v2123
      %2174 = vmatprep.subr.mxu0 0.0
      %2175 = vmatpush1.msra.mxu0 %v2122
      %2176 = vmatprep.subr.mxu0 0.0
      %2177 = vmatpush1.msra.mxu0 %v2121
      %2178 = vmatprep.subr.mxu0 0.0
      %2179 = vmatpush1.msra.mxu0 %v2120
      %2180 = vmatprep.subr.mxu0 0.0
      %2181 = vmatpush1.msra.mxu0 %v2119
      %2182 = vmatprep.subr.mxu0 0.0
      %2183 = vmatpush1.msra.mxu0 %v2118
      %2184 = vmatprep.subr.mxu0 0.0
      %2185 = vmatpush1.msra.mxu0 %v2117
      %2186 = vmatprep.subr.mxu0 0.0
      %2187 = vmatpush1.msra.mxu0 %v2116
      %2188 = vmatprep.subr.mxu0 0.0
      %2189 = vmatpush1.msra.mxu0 %v2115
      %2190 = vmatprep.subr.mxu0 0.0
      %2191 = vmatpush1.msra.mxu0 %v2114
      %2192 = vmatprep.subr.mxu0 0.0
      %2193 = vmatpush1.msra.mxu0 %v2113
      %2194 = vmatprep.subr.mxu0 0.0
      %2195 = vmatpush1.msra.mxu0 %v2112
      %2196 = vmatprep.subr.mxu0 0.0
      %2197 = vmatpush1.msra.mxu0 %v2111
      %2198 = vmatprep.subr.mxu0 0.0
      %2199 = vmatpush1.msra.mxu0 %v2110
      %2200 = vmatprep.subr.mxu0 0.0
      %2201 = vmatpush1.msra.mxu0 %v2109
      %2202 = vmatprep.subr.mxu0 0.0
      %2203 = vmatpush1.msra.mxu0 %v2108
      %2204 = vmatprep.subr.mxu0 0.0
      %2205 = vmatpush2.msra.mxu0 %v2139
      %2206 = vmatprep.subr.mxu0 0.0
      %2207 = vmatpush2.msra.mxu0 %v2138
      %2208 = vmatprep.subr.mxu0 0.0
      %2209 = vmatpush2.msra.mxu0 %v2137
      %2210 = vmatprep.subr.mxu0 0.0
      %2211 = vmatpush2.msra.mxu0 %v2136
      %2212 = vmatprep.subr.mxu0 0.0
      %2213 = vmatpush2.msra.mxu0 %v2135
      %2214 = vmatprep.subr.mxu0 0.0
      %2215 = vmatpush2.msra.mxu0 %v2134
      %2216 = vmatprep.subr.mxu0 0.0
      %2217 = vmatpush2.msra.mxu0 %v2133
      %2218 = vmatprep.subr.mxu0 0.0
      %2219 = vmatpush2.msra.mxu0 %v2132
      %2220 = vmatprep.subr.mxu0 0.0
      %2221 = vmatpush2.msra.mxu0 %v2131
      %2222 = vmatprep.subr.mxu0 0.0
      %2223 = vmatpush2.msra.mxu0 %v2130
      %2224 = vmatprep.subr.mxu0 0.0
      %2225 = vmatpush2.msra.mxu0 %v2129
      %2226 = vmatprep.subr.mxu0 0.0
      %2227 = vmatpush2.msra.mxu0 %v2128
      %2228 = vmatprep.subr.mxu0 0.0
      %2229 = vmatpush2.msra.mxu0 %v2127
      %2230 = vmatprep.subr.mxu0 0.0
      %2231 = vmatpush2.msra.mxu0 %v2126
      %2232 = vmatprep.subr.mxu0 0.0
      %2233 = vmatpush2.msra.mxu0 %v2125
      %2234 = vmatprep.subr.mxu0 0.0
      %2235 = vmatpush2.msra.mxu0 %v2124
      %2236 = vmatprep.mubr.f32.mxu0 %v2105
      %2237 = vmatmul.mubr.f32.gmra.mxu0 %v2104
      %v2238 = vpop.f32.mrf.mxu0
      %v2239 = vadd.f32 0.0, %v2238
      %v2240 = vpop.f32.mrf.mxu0
      %2241 = vdwg.mxu0
      %2242 = vmatprep.subr.mxu0 0.0
      %2243 = vmatpush1.msra.mxu0 %v2155
      %2244 = vmatprep.subr.mxu0 0.0
      %2245 = vmatpush1.msra.mxu0 %v2154
      %2246 = vmatprep.subr.mxu0 0.0
      %2247 = vmatpush1.msra.mxu0 %v2153
      %2248 = vmatprep.subr.mxu0 0.0
      %2249 = vmatpush1.msra.mxu0 %v2152
      %2250 = vmatprep.subr.mxu0 0.0
      %2251 = vmatpush1.msra.mxu0 %v2151
      %2252 = vmatprep.subr.mxu0 0.0
      %2253 = vmatpush1.msra.mxu0 %v2150
      %2254 = vmatprep.subr.mxu0 0.0
      %2255 = vmatpush1.msra.mxu0 %v2149
      %2256 = vmatprep.subr.mxu0 0.0
      %2257 = vmatpush1.msra.mxu0 %v2148
      %2258 = vmatprep.subr.mxu0 0.0
      %2259 = vmatpush1.msra.mxu0 %v2147
      %2260 = vmatprep.subr.mxu0 0.0
      %2261 = vmatpush1.msra.mxu0 %v2146
      %2262 = vmatprep.subr.mxu0 0.0
      %2263 = vmatpush1.msra.mxu0 %v2145
      %2264 = vmatprep.subr.mxu0 0.0
      %2265 = vmatpush1.msra.mxu0 %v2144
      %2266 = vmatprep.subr.mxu0 0.0
      %2267 = vmatpush1.msra.mxu0 %v2143
      %2268 = vmatprep.subr.mxu0 0.0
      %2269 = vmatpush1.msra.mxu0 %v2142
      %2270 = vmatprep.subr.mxu0 0.0
      %2271 = vmatpush1.msra.mxu0 %v2141
      %2272 = vmatprep.subr.mxu0 0.0
      %2273 = vmatpush1.msra.mxu0 %v2140
      %2274 = vmatprep.subr.mxu0 0.0
      %2275 = vmatpush2.msra.mxu0 %v2171
      %2276 = vmatprep.subr.mxu0 0.0
      %2277 = vmatpush2.msra.mxu0 %v2170
      %2278 = vmatprep.subr.mxu0 0.0
      %2279 = vmatpush2.msra.mxu0 %v2169
      %2280 = vmatprep.subr.mxu0 0.0
      %2281 = vmatpush2.msra.mxu0 %v2168
      %2282 = vmatprep.subr.mxu0 0.0
      %2283 = vmatpush2.msra.mxu0 %v2167
      %2284 = vmatprep.subr.mxu0 0.0
      %2285 = vmatpush2.msra.mxu0 %v2166
      %2286 = vmatprep.subr.mxu0 0.0
      %2287 = vmatpush2.msra.mxu0 %v2165
      %2288 = vmatprep.subr.mxu0 0.0
      %2289 = vmatpush2.msra.mxu0 %v2164
      %2290 = vmatprep.subr.mxu0 0.0
      %2291 = vmatpush2.msra.mxu0 %v2163
      %2292 = vmatprep.subr.mxu0 0.0
      %2293 = vmatpush2.msra.mxu0 %v2162
      %2294 = vmatprep.subr.mxu0 0.0
      %2295 = vmatpush2.msra.mxu0 %v2161
      %2296 = vmatprep.subr.mxu0 0.0
      %2297 = vmatpush2.msra.mxu0 %v2160
      %2298 = vmatprep.subr.mxu0 0.0
      %2299 = vmatpush2.msra.mxu0 %v2159
      %2300 = vmatprep.subr.mxu0 0.0
      %2301 = vmatpush2.msra.mxu0 %v2158
      %2302 = vmatprep.subr.mxu0 0.0
      %2303 = vmatpush2.msra.mxu0 %v2157
      %2304 = vmatprep.subr.mxu0 0.0
      %2305 = vmatpush2.msra.mxu0 %v2156
      %2306 = vmatprep.mubr.f32.mxu0 %v2107
      %2307 = vmatmul.mubr.f32.gmra.mxu0 %v2106
      %v2308 = vpop.f32.mrf.mxu0
      %v2309 = vadd.f32 %v2239, %v2308
      %v2310 = vpop.f32.mrf.mxu0
      %2311 = vdwg.mxu0
      %v2312 = vmul.f32 %v2309, 0.17677669
      %v2313 = vsel %vm1131, %v2312, -inf
      %2314 = vmax.xlane.f32.xlu0 %v2313
      %v2315 = vpop.xlane.xlu0 %2314
      %v2316 = vsub.f32 %v2312, %v2315
      %v2317 = vmul.f32 %v2316, 1.442695
      %v2318 = vpow.pop %v2317
      %v2320 = vsel %vm1131, %v2318, 0
      %2322 = vmatprep.subr.mxu0 0.0
      %2323 = vmatpush1.msra.mxu0 0.0
      %2324 = vmatprep.subr.mxu0 0.0
      %2325 = vmatpush1.msra.mxu0 0.0
      %2326 = vmatprep.subr.mxu0 0.0
      %2327 = vmatpush1.msra.mxu0 0.0
      %2328 = vmatprep.subr.mxu0 0.0
      %2329 = vmatpush1.msra.mxu0 0.0
      %2330 = vmatprep.subr.mxu0 0.0
      %2331 = vmatpush1.msra.mxu0 0.0
      %2332 = vmatprep.subr.mxu0 0.0
      %2333 = vmatpush1.msra.mxu0 0.0
      %2334 = vmatprep.subr.mxu0 0.0
      %2335 = vmatpush1.msra.mxu0 0.0
      %2336 = vmatprep.subr.mxu0 0.0
      %2337 = vmatpush1.msra.mxu0 0.0
      %2338 = vmatprep.subr.mxu0 0.0
      %2339 = vmatpush1.msra.mxu0 0.0
      %2340 = vmatprep.subr.mxu0 0.0
      %2341 = vmatpush1.msra.mxu0 0.0
      %2342 = vmatprep.subr.mxu0 0.0
      %2343 = vmatpush1.msra.mxu0 0.0
      %2344 = vmatprep.subr.mxu0 0.0
      %2345 = vmatpush1.msra.mxu0 0.0
      %2346 = vmatprep.subr.mxu0 0.0
      %2347 = vmatpush1.msra.mxu0 0.0
      %2348 = vmatprep.subr.mxu0 0.0
      %2349 = vmatpush1.msra.mxu0 0.0
      %2350 = vmatprep.subr.mxu0 0.0
      %2351 = vmatpush1.msra.mxu0 %v1139
      %2352 = vmatprep.subr.mxu0 0.0
      %2353 = vmatpush1.msra.mxu0 %v1138
      %2354 = vmatprep.subr.mxu0 0.0
      %2355 = vmatpush2.msra.mxu0 0.0
      %2356 = vmatprep.subr.mxu0 0.0
      %2357 = vmatpush2.msra.mxu0 0.0
      %2358 = vmatprep.subr.mxu0 0.0
      %2359 = vmatpush2.msra.mxu0 0.0
      %2360 = vmatprep.subr.mxu0 0.0
      %2361 = vmatpush2.msra.mxu0 0.0
      %2362 = vmatprep.subr.mxu0 0.0
      %2363 = vmatpush2.msra.mxu0 0.0
      %2364 = vmatprep.subr.mxu0 0.0
      %2365 = vmatpush2.msra.mxu0 0.0
      %2366 = vmatprep.subr.mxu0 0.0
      %2367 = vmatpush2.msra.mxu0 0.0
      %2368 = vmatprep.subr.mxu0 0.0
      %2369 = vmatpush2.msra.mxu0 0.0
      %2370 = vmatprep.subr.mxu0 0.0
      %2371 = vmatpush2.msra.mxu0 0.0
      %2372 = vmatprep.subr.mxu0 0.0
      %2373 = vmatpush2.msra.mxu0 0.0
      %2374 = vmatprep.subr.mxu0 0.0
      %2375 = vmatpush2.msra.mxu0 0.0
      %2376 = vmatprep.subr.mxu0 0.0
      %2377 = vmatpush2.msra.mxu0 0.0
      %2378 = vmatprep.subr.mxu0 0.0
      %2379 = vmatpush2.msra.mxu0 0.0
      %2380 = vmatprep.subr.mxu0 0.0
      %2381 = vmatpush2.msra.mxu0 0.0
      %2382 = vmatprep.subr.mxu0 0.0
      %2383 = vmatpush2.msra.mxu0 0.0
      %2384 = vmatprep.subr.mxu0 0.0
      %2385 = vmatpush2.msra.mxu0 0.0
      %2386 = vmatprep.mubr.f32.mxu0 0.0
      %2387 = vmatmul.mubr.f32.gmra.mxu0 %v2320
      %v2388 = vpop.f32.mrf.mxu0
      %v2389 = vadd.f32 0.0, %v2388
      %v2390 = vpop.f32.mrf.mxu0
      %2391 = vdwg.mxu0
      %v2392 = vrcp.pop %v2389
      %v2393 = vmul.f32 1.0, %v2392
      %v2395 = vsel %vm1216, %v2393, 0
      %2397 = vmatprep.subr.mxu0 0.0
      %2398 = vmatpush1.msra.mxu0 0.0
      %2399 = vmatprep.subr.mxu0 0.0
      %2400 = vmatpush1.msra.mxu0 0.0
      %2401 = vmatprep.subr.mxu0 0.0
      %2402 = vmatpush1.msra.mxu0 0.0
      %2403 = vmatprep.subr.mxu0 0.0
      %2404 = vmatpush1.msra.mxu0 0.0
      %2405 = vmatprep.subr.mxu0 0.0
      %2406 = vmatpush1.msra.mxu0 0.0
      %2407 = vmatprep.subr.mxu0 0.0
      %2408 = vmatpush1.msra.mxu0 0.0
      %2409 = vmatprep.subr.mxu0 0.0
      %2410 = vmatpush1.msra.mxu0 0.0
      %2411 = vmatprep.subr.mxu0 0.0
      %2412 = vmatpush1.msra.mxu0 0.0
      %2413 = vmatprep.subr.mxu0 0.0
      %2414 = vmatpush1.msra.mxu0 0.0
      %2415 = vmatprep.subr.mxu0 0.0
      %2416 = vmatpush1.msra.mxu0 0.0
      %2417 = vmatprep.subr.mxu0 0.0
      %2418 = vmatpush1.msra.mxu0 0.0
      %2419 = vmatprep.subr.mxu0 0.0
      %2420 = vmatpush1.msra.mxu0 0.0
      %2421 = vmatprep.subr.mxu0 0.0
      %2422 = vmatpush1.msra.mxu0 0.0
      %2423 = vmatprep.subr.mxu0 0.0
      %2424 = vmatpush1.msra.mxu0 0.0
      %2425 = vmatprep.subr.mxu0 0.0
      %2426 = vmatpush1.msra.mxu0 0.0
      %2427 = vmatprep.subr.mxu0 0.0
      %2428 = vmatpush1.msra.mxu0 %v1222
      %2429 = vmatprep.subr.mxu0 0.0
      %2430 = vmatpush2.msra.mxu0 0.0
      %2431 = vmatprep.subr.mxu0 0.0
      %2432 = vmatpush2.msra.mxu0 0.0
      %2433 = vmatprep.subr.mxu0 0.0
      %2434 = vmatpush2.msra.mxu0 0.0
      %2435 = vmatprep.subr.mxu0 0.0
      %2436 = vmatpush2.msra.mxu0 0.0
      %2437 = vmatprep.subr.mxu0 0.0
      %2438 = vmatpush2.msra.mxu0 0.0
      %2439 = vmatprep.subr.mxu0 0.0
      %2440 = vmatpush2.msra.mxu0 0.0
      %2441 = vmatprep.subr.mxu0 0.0
      %2442 = vmatpush2.msra.mxu0 0.0
      %2443 = vmatprep.subr.mxu0 0.0
      %2444 = vmatpush2.msra.mxu0 0.0
      %2445 = vmatprep.subr.mxu0 0.0
      %2446 = vmatpush2.msra.mxu0 0.0
      %2447 = vmatprep.subr.mxu0 0.0
      %2448 = vmatpush2.msra.mxu0 0.0
      %2449 = vmatprep.subr.mxu0 0.0
      %2450 = vmatpush2.msra.mxu0 0.0
      %2451 = vmatprep.subr.mxu0 0.0
      %2452 = vmatpush2.msra.mxu0 0.0
      %2453 = vmatprep.subr.mxu0 0.0
      %2454 = vmatpush2.msra.mxu0 0.0
      %2455 = vmatprep.subr.mxu0 0.0
      %2456 = vmatpush2.msra.mxu0 0.0
      %2457 = vmatprep.subr.mxu0 0.0
      %2458 = vmatpush2.msra.mxu0 0.0
      %2459 = vmatprep.subr.mxu0 0.0
      %2460 = vmatpush2.msra.mxu0 0.0
      %2461 = vmatprep.mubr.f32.mxu0 0.0
      %2462 = vmatmul.mubr.f32.gmra.mxu0 %v2395
      %v2463 = vpop.f32.mrf.mxu0
      %v2464 = vadd.f32 0.0, %v2463
      %v2465 = vpop.f32.mrf.mxu0
      %2466 = vdwg.mxu0
      %v2467 = vmul.f32 %v2318, %v2464
      %v2468 = vmul.f32 %v2309, %v2309
      %v2470 = vsel %vm1131, %v2468, 0
      %2472 = vmatprep.subr.mxu0 0.0
      %2473 = vmatpush1.msra.mxu0 0.0
      %2474 = vmatprep.subr.mxu0 0.0
      %2475 = vmatpush1.msra.mxu0 0.0
      %2476 = vmatprep.subr.mxu0 0.0
      %2477 = vmatpush1.msra.mxu0 0.0
      %2478 = vmatprep.subr.mxu0 0.0
      %2479 = vmatpush1.msra.mxu0 0.0
      %2480 = vmatprep.subr.mxu0 0.0
      %2481 = vmatpush1.msra.mxu0 0.0
      %2482 = vmatprep.subr.mxu0 0.0
      %2483 = vmatpush1.msra.mxu0 0.0
      %2484 = vmatprep.subr.mxu0 0.0
      %2485 = vmatpush1.msra.mxu0 0.0
      %2486 = vmatprep.subr.mxu0 0.0
      %2487 = vmatpush1.msra.mxu0 0.0
      %2488 = vmatprep.subr.mxu0 0.0
      %2489 = vmatpush1.msra.mxu0 0.0
      %2490 = vmatprep.subr.mxu0 0.0
      %2491 = vmatpush1.msra.mxu0 0.0
      %2492 = vmatprep.subr.mxu0 0.0
      %2493 = vmatpush1.msra.mxu0 0.0
      %2494 = vmatprep.subr.mxu0 0.0
      %2495 = vmatpush1.msra.mxu0 0.0
      %2496 = vmatprep.subr.mxu0 0.0
      %2497 = vmatpush1.msra.mxu0 0.0
      %2498 = vmatprep.subr.mxu0 0.0
      %2499 = vmatpush1.msra.mxu0 0.0
      %2500 = vmatprep.subr.mxu0 0.0
      %2501 = vmatpush1.msra.mxu0 %v1139
      %2502 = vmatprep.subr.mxu0 0.0
      %2503 = vmatpush1.msra.mxu0 %v1138
      %2504 = vmatprep.subr.mxu0 0.0
      %2505 = vmatpush2.msra.mxu0 0.0
      %2506 = vmatprep.subr.mxu0 0.0
      %2507 = vmatpush2.msra.mxu0 0.0
      %2508 = vmatprep.subr.mxu0 0.0
      %2509 = vmatpush2.msra.mxu0 0.0
      %2510 = vmatprep.subr.mxu0 0.0
      %2511 = vmatpush2.msra.mxu0 0.0
      %2512 = vmatprep.subr.mxu0 0.0
      %2513 = vmatpush2.msra.mxu0 0.0
      %2514 = vmatprep.subr.mxu0 0.0
      %2515 = vmatpush2.msra.mxu0 0.0
      %2516 = vmatprep.subr.mxu0 0.0
      %2517 = vmatpush2.msra.mxu0 0.0
      %2518 = vmatprep.subr.mxu0 0.0
      %2519 = vmatpush2.msra.mxu0 0.0
      %2520 = vmatprep.subr.mxu0 0.0
      %2521 = vmatpush2.msra.mxu0 0.0
      %2522 = vmatprep.subr.mxu0 0.0
      %2523 = vmatpush2.msra.mxu0 0.0
      %2524 = vmatprep.subr.mxu0 0.0
      %2525 = vmatpush2.msra.mxu0 0.0
      %2526 = vmatprep.subr.mxu0 0.0
      %2527 = vmatpush2.msra.mxu0 0.0
      %2528 = vmatprep.subr.mxu0 0.0
      %2529 = vmatpush2.msra.mxu0 0.0
      %2530 = vmatprep.subr.mxu0 0.0
      %2531 = vmatpush2.msra.mxu0 0.0
      %2532 = vmatprep.subr.mxu0 0.0
      %2533 = vmatpush2.msra.mxu0 0.0
      %2534 = vmatprep.subr.mxu0 0.0
      %2535 = vmatpush2.msra.mxu0 0.0
      %2536 = vmatprep.mubr.f32.mxu0 0.0
      %2537 = vmatmul.mubr.f32.gmra.mxu0 %v2470
      %v2538 = vpop.f32.mrf.mxu0
      %v2539 = vadd.f32 0.0, %v2538
      %v2540 = vpop.f32.mrf.mxu0
      %2541 = vdwg.mxu0
      %v2542 = vadd.f32 %v2467, 1e-08
      %v2543 = vlog2.pop %v2542
      %v2544 = vmul.f32 %v2543, 0.6931472
      %v2545 = vmul.f32 %v2467, %v2544
      %v2547 = vsel %vm1131, %v2545, 0
      %2549 = vmatprep.subr.mxu0 0.0
      %2550 = vmatpush1.msra.mxu0 0.0
      %2551 = vmatprep.subr.mxu0 0.0
      %2552 = vmatpush1.msra.mxu0 0.0
      %2553 = vmatprep.subr.mxu0 0.0
      %2554 = vmatpush1.msra.mxu0 0.0
      %2555 = vmatprep.subr.mxu0 0.0
      %2556 = vmatpush1.msra.mxu0 0.0
      %2557 = vmatprep.subr.mxu0 0.0
      %2558 = vmatpush1.msra.mxu0 0.0
      %2559 = vmatprep.subr.mxu0 0.0
      %2560 = vmatpush1.msra.mxu0 0.0
      %2561 = vmatprep.subr.mxu0 0.0
      %2562 = vmatpush1.msra.mxu0 0.0
      %2563 = vmatprep.subr.mxu0 0.0
      %2564 = vmatpush1.msra.mxu0 0.0
      %2565 = vmatprep.subr.mxu0 0.0
      %2566 = vmatpush1.msra.mxu0 0.0
      %2567 = vmatprep.subr.mxu0 0.0
      %2568 = vmatpush1.msra.mxu0 0.0
      %2569 = vmatprep.subr.mxu0 0.0
      %2570 = vmatpush1.msra.mxu0 0.0
      %2571 = vmatprep.subr.mxu0 0.0
      %2572 = vmatpush1.msra.mxu0 0.0
      %2573 = vmatprep.subr.mxu0 0.0
      %2574 = vmatpush1.msra.mxu0 0.0
      %2575 = vmatprep.subr.mxu0 0.0
      %2576 = vmatpush1.msra.mxu0 0.0
      %2577 = vmatprep.subr.mxu0 0.0
      %2578 = vmatpush1.msra.mxu0 %v1139
      %2579 = vmatprep.subr.mxu0 0.0
      %2580 = vmatpush1.msra.mxu0 %v1138
      %2581 = vmatprep.subr.mxu0 0.0
      %2582 = vmatpush2.msra.mxu0 0.0
      %2583 = vmatprep.subr.mxu0 0.0
      %2584 = vmatpush2.msra.mxu0 0.0
      %2585 = vmatprep.subr.mxu0 0.0
      %2586 = vmatpush2.msra.mxu0 0.0
      %2587 = vmatprep.subr.mxu0 0.0
      %2588 = vmatpush2.msra.mxu0 0.0
      %2589 = vmatprep.subr.mxu0 0.0
      %2590 = vmatpush2.msra.mxu0 0.0
      %2591 = vmatprep.subr.mxu0 0.0
      %2592 = vmatpush2.msra.mxu0 0.0
      %2593 = vmatprep.subr.mxu0 0.0
      %2594 = vmatpush2.msra.mxu0 0.0
      %2595 = vmatprep.subr.mxu0 0.0
      %2596 = vmatpush2.msra.mxu0 0.0
      %2597 = vmatprep.subr.mxu0 0.0
      %2598 = vmatpush2.msra.mxu0 0.0
      %2599 = vmatprep.subr.mxu0 0.0
      %2600 = vmatpush2.msra.mxu0 0.0
      %2601 = vmatprep.subr.mxu0 0.0
      %2602 = vmatpush2.msra.mxu0 0.0
      %2603 = vmatprep.subr.mxu0 0.0
      %2604 = vmatpush2.msra.mxu0 0.0
      %2605 = vmatprep.subr.mxu0 0.0
      %2606 = vmatpush2.msra.mxu0 0.0
      %2607 = vmatprep.subr.mxu0 0.0
      %2608 = vmatpush2.msra.mxu0 0.0
      %2609 = vmatprep.subr.mxu0 0.0
      %2610 = vmatpush2.msra.mxu0 0.0
      %2611 = vmatprep.subr.mxu0 0.0
      %2612 = vmatpush2.msra.mxu0 0.0
      %2613 = vmatprep.mubr.f32.mxu0 0.0
      %2614 = vmatmul.mubr.f32.gmra.mxu0 %v2547
      %v2615 = vpop.f32.mrf.mxu0
      %v2616 = vadd.f32 0.0, %v2615
      %v2617 = vpop.f32.mrf.mxu0
      %2618 = vdwg.mxu0
      %v2619 = vsub.f32 0.0, %v2616
      %v2620 = vmax.f32 %v1937, 0.0
      %v2621 = vld [vmem:[%s6] sm:$0xff]
      %v2622 = vld [vmem:[%s6 + $0x8] sm:$0xff]
      %v2623 = vld [vmem:[%s6 + $0x10] sm:$0xff]
      %v2624 = vld [vmem:[%s6 + $0x18] sm:$0xff]
      %v2625 = vld [vmem:[%s6 + $0x20] sm:$0xff]
      %v2626 = vld [vmem:[%s6 + $0x28] sm:$0xff]
      %v2627 = vld [vmem:[%s6 + $0x30] sm:$0xff]
      %v2628 = vld [vmem:[%s6 + $0x38] sm:$0xff]
      %v2629 = vld [vmem:[%s7] sm:$0x1]
      %v2631 = vlaneseq
      %v2632 = vshrl.u32 %v2631, 7
      %v2633 = vsub.s32 0, %v2632
      %v2634 = vrot.slane %v2629, %v2633
      %v2637 = vsel %vm1583, %v2620, 0
      %2639 = vmatprep.subr.mxu0 0.0
      %2640 = vmatpush1.msra.mxu0 0.0
      %2641 = vmatprep.subr.mxu0 0.0
      %2642 = vmatpush1.msra.mxu0 0.0
      %2643 = vmatprep.subr.mxu0 0.0
      %2644 = vmatpush1.msra.mxu0 0.0
      %2645 = vmatprep.subr.mxu0 0.0
      %2646 = vmatpush1.msra.mxu0 0.0
      %2647 = vmatprep.subr.mxu0 0.0
      %2648 = vmatpush1.msra.mxu0 0.0
      %2649 = vmatprep.subr.mxu0 0.0
      %2650 = vmatpush1.msra.mxu0 0.0
      %2651 = vmatprep.subr.mxu0 0.0
      %2652 = vmatpush1.msra.mxu0 0.0
      %2653 = vmatprep.subr.mxu0 0.0
      %2654 = vmatpush1.msra.mxu0 0.0
      %2655 = vmatprep.subr.mxu0 0.0
      %2656 = vmatpush1.msra.mxu0 %v2628
      %2657 = vmatprep.subr.mxu0 0.0
      %2658 = vmatpush1.msra.mxu0 %v2627
      %2659 = vmatprep.subr.mxu0 0.0
      %2660 = vmatpush1.msra.mxu0 %v2626
      %2661 = vmatprep.subr.mxu0 0.0
      %2662 = vmatpush1.msra.mxu0 %v2625
      %2663 = vmatprep.subr.mxu0 0.0
      %2664 = vmatpush1.msra.mxu0 %v2624
      %2665 = vmatprep.subr.mxu0 0.0
      %2666 = vmatpush1.msra.mxu0 %v2623
      %2667 = vmatprep.subr.mxu0 0.0
      %2668 = vmatpush1.msra.mxu0 %v2622
      %2669 = vmatprep.subr.mxu0 0.0
      %2670 = vmatpush1.msra.mxu0 %v2621
      %2671 = vmatprep.subr.mxu0 0.0
      %2672 = vmatpush2.msra.mxu0 0.0
      %2673 = vmatprep.subr.mxu0 0.0
      %2674 = vmatpush2.msra.mxu0 0.0
      %2675 = vmatprep.subr.mxu0 0.0
      %2676 = vmatpush2.msra.mxu0 0.0
      %2677 = vmatprep.subr.mxu0 0.0
      %2678 = vmatpush2.msra.mxu0 0.0
      %2679 = vmatprep.subr.mxu0 0.0
      %2680 = vmatpush2.msra.mxu0 0.0
      %2681 = vmatprep.subr.mxu0 0.0
      %2682 = vmatpush2.msra.mxu0 0.0
      %2683 = vmatprep.subr.mxu0 0.0
      %2684 = vmatpush2.msra.mxu0 0.0
      %2685 = vmatprep.subr.mxu0 0.0
      %2686 = vmatpush2.msra.mxu0 0.0
      %2687 = vmatprep.subr.mxu0 0.0
      %2688 = vmatpush2.msra.mxu0 0.0
      %2689 = vmatprep.subr.mxu0 0.0
      %2690 = vmatpush2.msra.mxu0 0.0
      %2691 = vmatprep.subr.mxu0 0.0
      %2692 = vmatpush2.msra.mxu0 0.0
      %2693 = vmatprep.subr.mxu0 0.0
      %2694 = vmatpush2.msra.mxu0 0.0
      %2695 = vmatprep.subr.mxu0 0.0
      %2696 = vmatpush2.msra.mxu0 0.0
      %2697 = vmatprep.subr.mxu0 0.0
      %2698 = vmatpush2.msra.mxu0 0.0
      %2699 = vmatprep.subr.mxu0 0.0
      %2700 = vmatpush2.msra.mxu0 0.0
      %2701 = vmatprep.subr.mxu0 0.0
      %2702 = vmatpush2.msra.mxu0 0.0
      %2703 = vmatprep.mubr.f32.mxu0 0.0
      %2704 = vmatmul.mubr.f32.gmra.mxu0 %v2637
      %v2705 = vpop.f32.mrf.mxu0
      %v2706 = vadd.f32 %v2634, %v2705
      %v2707 = vpop.f32.mrf.mxu0
      %2708 = vdwg.mxu0
      %v2709 = vand.u32 2147483647, %v2706
      %v2711 = vsel %vm1216, %v2709, 0
      %2713 = vmatprep.subr.mxu0 0.0
      %2714 = vmatpush1.msra.mxu0 0.0
      %2715 = vmatprep.subr.mxu0 0.0
      %2716 = vmatpush1.msra.mxu0 0.0
      %2717 = vmatprep.subr.mxu0 0.0
      %2718 = vmatpush1.msra.mxu0 0.0
      %2719 = vmatprep.subr.mxu0 0.0
      %2720 = vmatpush1.msra.mxu0 0.0
      %2721 = vmatprep.subr.mxu0 0.0
      %2722 = vmatpush1.msra.mxu0 0.0
      %2723 = vmatprep.subr.mxu0 0.0
      %2724 = vmatpush1.msra.mxu0 0.0
      %2725 = vmatprep.subr.mxu0 0.0
      %2726 = vmatpush1.msra.mxu0 0.0
      %2727 = vmatprep.subr.mxu0 0.0
      %2728 = vmatpush1.msra.mxu0 0.0
      %2729 = vmatprep.subr.mxu0 0.0
      %2730 = vmatpush1.msra.mxu0 0.0
      %2731 = vmatprep.subr.mxu0 0.0
      %2732 = vmatpush1.msra.mxu0 0.0
      %2733 = vmatprep.subr.mxu0 0.0
      %2734 = vmatpush1.msra.mxu0 0.0
      %2735 = vmatprep.subr.mxu0 0.0
      %2736 = vmatpush1.msra.mxu0 0.0
      %2737 = vmatprep.subr.mxu0 0.0
      %2738 = vmatpush1.msra.mxu0 0.0
      %2739 = vmatprep.subr.mxu0 0.0
      %2740 = vmatpush1.msra.mxu0 0.0
      %2741 = vmatprep.subr.mxu0 0.0
      %2742 = vmatpush1.msra.mxu0 0.0
      %2743 = vmatprep.subr.mxu0 0.0
      %2744 = vmatpush1.msra.mxu0 %v1222
      %2745 = vmatprep.subr.mxu0 0.0
      %2746 = vmatpush2.msra.mxu0 0.0
      %2747 = vmatprep.subr.mxu0 0.0
      %2748 = vmatpush2.msra.mxu0 0.0
      %2749 = vmatprep.subr.mxu0 0.0
      %2750 = vmatpush2.msra.mxu0 0.0
      %2751 = vmatprep.subr.mxu0 0.0
      %2752 = vmatpush2.msra.mxu0 0.0
      %2753 = vmatprep.subr.mxu0 0.0
      %2754 = vmatpush2.msra.mxu0 0.0
      %2755 = vmatprep.subr.mxu0 0.0
      %2756 = vmatpush2.msra.mxu0 0.0
      %2757 = vmatprep.subr.mxu0 0.0
      %2758 = vmatpush2.msra.mxu0 0.0
      %2759 = vmatprep.subr.mxu0 0.0
      %2760 = vmatpush2.msra.mxu0 0.0
      %2761 = vmatprep.subr.mxu0 0.0
      %2762 = vmatpush2.msra.mxu0 0.0
      %2763 = vmatprep.subr.mxu0 0.0
      %2764 = vmatpush2.msra.mxu0 0.0
      %2765 = vmatprep.subr.mxu0 0.0
      %2766 = vmatpush2.msra.mxu0 0.0
      %2767 = vmatprep.subr.mxu0 0.0
      %2768 = vmatpush2.msra.mxu0 0.0
      %2769 = vmatprep.subr.mxu0 0.0
      %2770 = vmatpush2.msra.mxu0 0.0
      %2771 = vmatprep.subr.mxu0 0.0
      %2772 = vmatpush2.msra.mxu0 0.0
      %2773 = vmatprep.subr.mxu0 0.0
      %2774 = vmatpush2.msra.mxu0 0.0
      %2775 = vmatprep.subr.mxu0 0.0
      %2776 = vmatpush2.msra.mxu0 0.0
      %2777 = vmatprep.mubr.f32.mxu0 0.0
      %2778 = vmatmul.mubr.f32.gmra.mxu0 %v2711
      %v2779 = vpop.f32.mrf.mxu0
      %v2780 = vadd.f32 0.0, %v2779
      %v2781 = vpop.f32.mrf.mxu0
      %2782 = vdwg.mxu0
      %v2783 = vmul.f32 %v2467, %v2780
      %v2785 = vsel %vm1131, %v2783, 0
      %2787 = vmatprep.subr.mxu0 0.0
      %2788 = vmatpush1.msra.mxu0 0.0
      %2789 = vmatprep.subr.mxu0 0.0
      %2790 = vmatpush1.msra.mxu0 0.0
      %2791 = vmatprep.subr.mxu0 0.0
      %2792 = vmatpush1.msra.mxu0 0.0
      %2793 = vmatprep.subr.mxu0 0.0
      %2794 = vmatpush1.msra.mxu0 0.0
      %2795 = vmatprep.subr.mxu0 0.0
      %2796 = vmatpush1.msra.mxu0 0.0
      %2797 = vmatprep.subr.mxu0 0.0
      %2798 = vmatpush1.msra.mxu0 0.0
      %2799 = vmatprep.subr.mxu0 0.0
      %2800 = vmatpush1.msra.mxu0 0.0
      %2801 = vmatprep.subr.mxu0 0.0
      %2802 = vmatpush1.msra.mxu0 0.0
      %2803 = vmatprep.subr.mxu0 0.0
      %2804 = vmatpush1.msra.mxu0 0.0
      %2805 = vmatprep.subr.mxu0 0.0
      %2806 = vmatpush1.msra.mxu0 0.0
      %2807 = vmatprep.subr.mxu0 0.0
      %2808 = vmatpush1.msra.mxu0 0.0
      %2809 = vmatprep.subr.mxu0 0.0
      %2810 = vmatpush1.msra.mxu0 0.0
      %2811 = vmatprep.subr.mxu0 0.0
      %2812 = vmatpush1.msra.mxu0 0.0
      %2813 = vmatprep.subr.mxu0 0.0
      %2814 = vmatpush1.msra.mxu0 0.0
      %2815 = vmatprep.subr.mxu0 0.0
      %2816 = vmatpush1.msra.mxu0 %v1375
      %2817 = vmatprep.subr.mxu0 0.0
      %2818 = vmatpush1.msra.mxu0 %v1374
      %2819 = vmatprep.subr.mxu0 0.0
      %2820 = vmatpush2.msra.mxu0 0.0
      %2821 = vmatprep.subr.mxu0 0.0
      %2822 = vmatpush2.msra.mxu0 0.0
      %2823 = vmatprep.subr.mxu0 0.0
      %2824 = vmatpush2.msra.mxu0 0.0
      %2825 = vmatprep.subr.mxu0 0.0
      %2826 = vmatpush2.msra.mxu0 0.0
      %2827 = vmatprep.subr.mxu0 0.0
      %2828 = vmatpush2.msra.mxu0 0.0
      %2829 = vmatprep.subr.mxu0 0.0
      %2830 = vmatpush2.msra.mxu0 0.0
      %2831 = vmatprep.subr.mxu0 0.0
      %2832 = vmatpush2.msra.mxu0 0.0
      %2833 = vmatprep.subr.mxu0 0.0
      %2834 = vmatpush2.msra.mxu0 0.0
      %2835 = vmatprep.subr.mxu0 0.0
      %2836 = vmatpush2.msra.mxu0 0.0
      %2837 = vmatprep.subr.mxu0 0.0
      %2838 = vmatpush2.msra.mxu0 0.0
      %2839 = vmatprep.subr.mxu0 0.0
      %2840 = vmatpush2.msra.mxu0 0.0
      %2841 = vmatprep.subr.mxu0 0.0
      %2842 = vmatpush2.msra.mxu0 0.0
      %2843 = vmatprep.subr.mxu0 0.0
      %2844 = vmatpush2.msra.mxu0 0.0
      %2845 = vmatprep.subr.mxu0 0.0
      %2846 = vmatpush2.msra.mxu0 0.0
      %2847 = vmatprep.subr.mxu0 0.0
      %2848 = vmatpush2.msra.mxu0 0.0
      %2849 = vmatprep.subr.mxu0 0.0
      %2850 = vmatpush2.msra.mxu0 0.0
      %2851 = vmatprep.mubr.f32.mxu0 0.0
      %2852 = vmatmul.mubr.f32.gmra.mxu0 %v2785
      %v2853 = vpop.f32.mrf.mxu0
      %v2854 = vadd.f32 1e-10, %v2853
      %v2855 = vpop.f32.mrf.mxu0
      %2856 = vdwg.mxu0
      %v2857 = vxor.u32 %v1939, 2147483648
      %v2858 = vmul.f32 %v2857, 1.442695
      %v2859 = vpow.pop %v2858
      %v2860 = vadd.f32 %v2859, 1.0
      %v2861 = vrcp.pop %v2860
      %v2862 = vmul.f32 1.0, %v2861
      %v2863 = vand.u32 2147483647, %v1939
      %v2864 = vadd.f32 %v2863, 1e-10
      %2866 = vrot.lane.b32.xlu0 %v2864, 96
      %v2867 = vpop.permute.xlu0 %2866
      %v2868 = vsel %vm1216, %v2867, 0
      %2870 = vmatprep.subr.mxu0 0.0
      %2871 = vmatpush1.msra.mxu0 0.0
      %2872 = vmatprep.subr.mxu0 0.0
      %2873 = vmatpush1.msra.mxu0 0.0
      %2874 = vmatprep.subr.mxu0 0.0
      %2875 = vmatpush1.msra.mxu0 0.0
      %2876 = vmatprep.subr.mxu0 0.0
      %2877 = vmatpush1.msra.mxu0 0.0
      %2878 = vmatprep.subr.mxu0 0.0
      %2879 = vmatpush1.msra.mxu0 0.0
      %2880 = vmatprep.subr.mxu0 0.0
      %2881 = vmatpush1.msra.mxu0 0.0
      %2882 = vmatprep.subr.mxu0 0.0
      %2883 = vmatpush1.msra.mxu0 0.0
      %2884 = vmatprep.subr.mxu0 0.0
      %2885 = vmatpush1.msra.mxu0 0.0
      %2886 = vmatprep.subr.mxu0 0.0
      %2887 = vmatpush1.msra.mxu0 0.0
      %2888 = vmatprep.subr.mxu0 0.0
      %2889 = vmatpush1.msra.mxu0 0.0
      %2890 = vmatprep.subr.mxu0 0.0
      %2891 = vmatpush1.msra.mxu0 0.0
      %2892 = vmatprep.subr.mxu0 0.0
      %2893 = vmatpush1.msra.mxu0 0.0
      %2894 = vmatprep.subr.mxu0 0.0
      %2895 = vmatpush1.msra.mxu0 0.0
      %2896 = vmatprep.subr.mxu0 0.0
      %2897 = vmatpush1.msra.mxu0 0.0
      %2898 = vmatprep.subr.mxu0 0.0
      %2899 = vmatpush1.msra.mxu0 0.0
      %2900 = vmatprep.subr.mxu0 0.0
      %2901 = vmatpush1.msra.mxu0 %v1222
      %2902 = vmatprep.subr.mxu0 0.0
      %2903 = vmatpush2.msra.mxu0 0.0
      %2904 = vmatprep.subr.mxu0 0.0
      %2905 = vmatpush2.msra.mxu0 0.0
      %2906 = vmatprep.subr.mxu0 0.0
      %2907 = vmatpush2.msra.mxu0 0.0
      %2908 = vmatprep.subr.mxu0 0.0
      %2909 = vmatpush2.msra.mxu0 0.0
      %2910 = vmatprep.subr.mxu0 0.0
      %2911 = vmatpush2.msra.mxu0 0.0
      %2912 = vmatprep.subr.mxu0 0.0
      %2913 = vmatpush2.msra.mxu0 0.0
      %2914 = vmatprep.subr.mxu0 0.0
      %2915 = vmatpush2.msra.mxu0 0.0
      %2916 = vmatprep.subr.mxu0 0.0
      %2917 = vmatpush2.msra.mxu0 0.0
      %2918 = vmatprep.subr.mxu0 0.0
      %2919 = vmatpush2.msra.mxu0 0.0
      %2920 = vmatprep.subr.mxu0 0.0
      %2921 = vmatpush2.msra.mxu0 0.0
      %2922 = vmatprep.subr.mxu0 0.0
      %2923 = vmatpush2.msra.mxu0 0.0
      %2924 = vmatprep.subr.mxu0 0.0
      %2925 = vmatpush2.msra.mxu0 0.0
      %2926 = vmatprep.subr.mxu0 0.0
      %2927 = vmatpush2.msra.mxu0 0.0
      %2928 = vmatprep.subr.mxu0 0.0
      %2929 = vmatpush2.msra.mxu0 0.0
      %2930 = vmatprep.subr.mxu0 0.0
      %2931 = vmatpush2.msra.mxu0 0.0
      %2932 = vmatprep.subr.mxu0 0.0
      %2933 = vmatpush2.msra.mxu0 0.0
      %2934 = vmatprep.mubr.f32.mxu0 0.0
      %2935 = vmatmul.mubr.f32.gmra.mxu0 %v2868
      %v2936 = vpop.f32.mrf.mxu0
      %v2937 = vadd.f32 0.0, %v2936
      %v2938 = vpop.f32.mrf.mxu0
      %2939 = vdwg.mxu0
      %v2940 = vmul.f32 %v2937, %v2862
      %2942 = vrot.lane.b32.xlu0 %v2862, 112
      %v2943 = vpop.permute.xlu0 %2942
      %v2945 = vmul.f32 %v2940, %v2943
      %v2947 = vsel %vm1131, %v2945, 0
      %2949 = vmatprep.subr.mxu0 0.0
      %2950 = vmatpush1.msra.mxu0 0.0
      %2951 = vmatprep.subr.mxu0 0.0
      %2952 = vmatpush1.msra.mxu0 0.0
      %2953 = vmatprep.subr.mxu0 0.0
      %2954 = vmatpush1.msra.mxu0 0.0
      %2955 = vmatprep.subr.mxu0 0.0
      %2956 = vmatpush1.msra.mxu0 0.0
      %2957 = vmatprep.subr.mxu0 0.0
      %2958 = vmatpush1.msra.mxu0 0.0
      %2959 = vmatprep.subr.mxu0 0.0
      %2960 = vmatpush1.msra.mxu0 0.0
      %2961 = vmatprep.subr.mxu0 0.0
      %2962 = vmatpush1.msra.mxu0 0.0
      %2963 = vmatprep.subr.mxu0 0.0
      %2964 = vmatpush1.msra.mxu0 0.0
      %2965 = vmatprep.subr.mxu0 0.0
      %2966 = vmatpush1.msra.mxu0 0.0
      %2967 = vmatprep.subr.mxu0 0.0
      %2968 = vmatpush1.msra.mxu0 0.0
      %2969 = vmatprep.subr.mxu0 0.0
      %2970 = vmatpush1.msra.mxu0 0.0
      %2971 = vmatprep.subr.mxu0 0.0
      %2972 = vmatpush1.msra.mxu0 0.0
      %2973 = vmatprep.subr.mxu0 0.0
      %2974 = vmatpush1.msra.mxu0 0.0
      %2975 = vmatprep.subr.mxu0 0.0
      %2976 = vmatpush1.msra.mxu0 0.0
      %2977 = vmatprep.subr.mxu0 0.0
      %2978 = vmatpush1.msra.mxu0 %v1375
      %2979 = vmatprep.subr.mxu0 0.0
      %2980 = vmatpush1.msra.mxu0 %v1374
      %2981 = vmatprep.subr.mxu0 0.0
      %2982 = vmatpush2.msra.mxu0 0.0
      %2983 = vmatprep.subr.mxu0 0.0
      %2984 = vmatpush2.msra.mxu0 0.0
      %2985 = vmatprep.subr.mxu0 0.0
      %2986 = vmatpush2.msra.mxu0 0.0
      %2987 = vmatprep.subr.mxu0 0.0
      %2988 = vmatpush2.msra.mxu0 0.0
      %2989 = vmatprep.subr.mxu0 0.0
      %2990 = vmatpush2.msra.mxu0 0.0
      %2991 = vmatprep.subr.mxu0 0.0
      %2992 = vmatpush2.msra.mxu0 0.0
      %2993 = vmatprep.subr.mxu0 0.0
      %2994 = vmatpush2.msra.mxu0 0.0
      %2995 = vmatprep.subr.mxu0 0.0
      %2996 = vmatpush2.msra.mxu0 0.0
      %2997 = vmatprep.subr.mxu0 0.0
      %2998 = vmatpush2.msra.mxu0 0.0
      %2999 = vmatprep.subr.mxu0 0.0
      %3000 = vmatpush2.msra.mxu0 0.0
      %3001 = vmatprep.subr.mxu0 0.0
      %3002 = vmatpush2.msra.mxu0 0.0
      %3003 = vmatprep.subr.mxu0 0.0
      %3004 = vmatpush2.msra.mxu0 0.0
      %3005 = vmatprep.subr.mxu0 0.0
      %3006 = vmatpush2.msra.mxu0 0.0
      %3007 = vmatprep.subr.mxu0 0.0
      %3008 = vmatpush2.msra.mxu0 0.0
      %3009 = vmatprep.subr.mxu0 0.0
      %3010 = vmatpush2.msra.mxu0 0.0
      %3011 = vmatprep.subr.mxu0 0.0
      %3012 = vmatpush2.msra.mxu0 0.0
      %3013 = vmatprep.mubr.f32.mxu0 0.0
      %3014 = vmatmul.mubr.f32.gmra.mxu0 %v2947
      %v3015 = vpop.f32.mrf.mxu0
      %v3016 = vadd.f32 0.0, %v3015
      %v3017 = vpop.f32.mrf.mxu0
      %3018 = vdwg.mxu0
      %3019 = vrot.lane.b32.xlu0 %v509, 124
      %v3020 = vpop.permute.xlu0 %3019
      %v3022 = vsub.f32 %v509, %v3020
      %3024 = vrot.lane.b32.xlu0 %v3022, 96
      %v3025 = vpop.permute.xlu0 %3024
      %v3027 = vmul.f32 %v2854, %v3025
      %v3028 = vsub.f32 %v3016, 1.0
      %v3029 = vmul.f32 %v3027, %v3028
      %v3030 = vsel %vm1216, %v3029, 0.0
      %3031 = vadd.xlane.f32.xlu0 %v3030
      %v3032 = vpop.xlane.xlu0 %3031
      %vm3033 = vcmask 7168
      %3034 = vst.msk [vmem:[%s508] sm:$0xff] %vm3033, %v3032
      %vm3035 = vcmask 15368
      %3036 = vst.msk [vmem:[%s508] sm:$0xff] %vm3035, %v1297
      %3038 = vrot.lane.b32.xlu0 %v2539, 2
      %v3039 = vpop.permute.xlu0 %3038
      %vm3041 = vcmask 48144
      %3042 = vst.msk [vmem:[%s508] sm:$0xff] %vm3041, %v3039
      %3044 = vrot.lane.b32.xlu0 %v2619, 6
      %v3045 = vpop.permute.xlu0 %3044
      %vm3047 = vcmask 80944
      %3048 = vst.msk [vmem:[%s508] sm:$0xff] %vm3047, %v3045
      %p3049 = scmp.lt.s32.totalorder %s28, 1
      %s3050 = scalar_select %p3049, %s28, 1
      %s3051 = smul.addr %s3050, 8
      %s3052 = scalar_lea.vmem %s15, %s3051
      // Predicated region
      $region81: #{forward.1} parent=79 // pred_check
        %p3053 = pneg %p371
      $region82: #{forward.1} parent=79 // pred_check_branch
        %3055 = sbr.rel (%p3053) target = $region84
      $region83: #{forward.1} parent=79 // pred_region
        _
      $region84: #{forward.1} parent=79 // pred_fallthru
        _
    $region80: #{forward.1} parent=5 // pred_fallthru
      _
    %p3056 = scmp.le.s32.totalorder 2, %s23
    // Predicated region
    $region85: #{forward.1} parent=5 // pred_check
      %p3057 = pneg %p3056
    $region86: #{forward.1} parent=5 // pred_check_branch
      %3059 = sbr.rel (%p3057) target = $region88
    $region87: #{forward.1} parent=5 // pred_region
      %s3060 = ssub.s32 %s23, 2
      // Predicated region
      $region89: #{forward.1} parent=87 // pred_check
        %p3061 = pneg %p377
      $region90: #{forward.1} parent=87 // pred_check_branch
        %3063 = sbr.rel (%p3061) target = $region92
      $region91: #{forward.1} parent=87 // pred_region
        %p3064 = scmp.lt.s32.totalorder %s29, 1
        %s3065 = scalar_select %p3064, %s29, 1
        %s3066 = smul.addr %s3065, 8
        %s3067 = scalar_lea.vmem %s15, %s3066
      $region92: #{forward.1} parent=87 // pred_fallthru
        _
    $region88: #{forward.1} parent=5 // pred_fallthru
      _
  $region6: #{forward.1} parent=0 // loop_footer
    %s27 = sadd.s32 1, %s23
  $region7: #{forward.1} parent=0 // loop_footer_branch
    %22 = sbr.rel target = $region3
  $region8: #{forward.1} parent=0 // loop_exit
    _

</llo_original>
